<compile_context>
chip_gen: v6e
topology: v6e:2x2x1
jax: 0.10.0
libtpu: 0.0.40
codegen_flags: <defaults>
</compile_context>

<pallas_src>
import functools

import jax
import jax.numpy as jnp
from jax import lax
from jax.experimental import pallas as pl
from jax.experimental.pallas import tpu as pltpu


# ------------------------------ Pallas kernel -------------------------------

def _spab_kernel(xpad_ref, w1_ref, b1_ref, w2_ref, b2_ref, w3_ref, b3_ref,
                 out_ref, out1_ref, att_ref, pad_sc,
                 *, H, W, Cin, Cm, Co):
    """Fused SPAB block for one batch element.

    xpad_ref : (H+2, W+2, Cin) f32   zero-padded input tile
    w*_ref   : (9*Cin_k, Cout_k) bf16  fused Conv3XC 3x3 weights, (ky,kx,cin) order
    b*_ref   : (1, Cout_k) f32
    out_ref  : (H*W, Co)  f32        (out3 + x) * (sigmoid(out3) - 0.5)
    out1_ref : (H*W, Cm)  f32        pre-activation c1_r output (torch returns this)
    att_ref  : (H*W, Co)  f32        sigmoid(out3) - 0.5
    pad_sc   : (H+2, W+2, Cm) f32    VMEM halo buffer for staged activations
    """
    HW = H * W

    def conv9(tap, cin, w_ref, b_ref):
        # im2col built in-register: 9 shifted HxW views concatenated on channels,
        # so the whole 3x3 stencil is a single MXU contraction with K = 9*cin.
        cols = [tap(dy, dx).reshape(HW, cin) for dy in range(3) for dx in range(3)]
        im2col = jnp.concatenate(cols, axis=-1).astype(jnp.bfloat16)
        acc = jnp.dot(im2col, w_ref[...], preferred_element_type=jnp.float32)
        return acc + b_ref[...]

    def stage(act, zero_borders):
        # Put the activation back into a zero-padded VMEM tile so the next 3x3
        # conv can read its 1-pixel halo without any HBM traffic.
        if zero_borders:
            pad_sc[...] = jnp.zeros_like(pad_sc)
        pad_sc[1:H + 1, 1:W + 1, :] = act.reshape(H, W, Cm)

    x_tap = lambda dy, dx: xpad_ref[dy:dy + H, dx:dx + W, :]
    s_tap = lambda dy, dx: pad_sc[dy:dy + H, dx:dx + W, :]

    # c1_r (+ SiLU for the next stage; torch returns the pre-activation out1)
    o1 = conv9(x_tap, Cin, w1_ref, b1_ref)
    out1_ref[...] = o1
    stage(o1 * jax.nn.sigmoid(o1), zero_borders=True)
    # c2_r + SiLU
    o2 = conv9(s_tap, Cm, w2_ref, b2_ref)
    stage(o2 * jax.nn.sigmoid(o2), zero_borders=False)   # borders already zero
    # c3_r + parameter-free attention epilogue (fused, no extra HBM round trip)
    o3 = conv9(s_tap, Cm, w3_ref, b3_ref)
    sim = jax.nn.sigmoid(o3) - 0.5
    att_ref[...] = sim
    x_center = xpad_ref[1:H + 1, 1:W + 1, :].reshape(HW, Cin)
    out_ref[...] = (o3 + x_center) * sim


# ------------------------------- JAX glue ------------------------------------

def fuse_conv3xc(p):
    """Conv3XC.update_params(): collapse 1x1 -> 3x3 -> 1x1 plus the 1x1 skip into
    a single 3x3 / pad=1 conv (eval-mode semantics).
    Returns (w: (3,3,Cin,Cout) HWIO, b: (Cout,))."""
    w = jnp.einsum('im,hwmg,go->hwio', p["w1"], p["w2"], p["w3"])
    w = w.at[1, 1].add(p["sk_w"])                        # skip 1x1 padded to center
    b_mid = jnp.einsum('hwmg,m->g', p["w2"], p["b1"]) + p["b2"]
    b = jnp.einsum('g,go->o', b_mid, p["w3"]) + p["b3"] + p["sk_b"]
    return w, b


def spab_forward(x_nchw, params):
    """SPAB forward (eval mode). x: (B, C, H, W) NCHW -> (out, out1, sim_att) NCHW."""
    B, C, H, W = x_nchw.shape
    x = jnp.transpose(x_nchw, (0, 2, 3, 1)).astype(jnp.float32)      # NHWC
    xpad = jnp.pad(x, ((0, 0), (1, 1), (1, 1), (0, 0)))              # pad once in glue

    w1, b1 = fuse_conv3xc(params["c1"])
    w2, b2 = fuse_conv3xc(params["c2"])
    w3, b3 = fuse_conv3xc(params["c3"])
    Cm, Co = w1.shape[-1], w3.shape[-1]
    assert Co == C, "SPAB requires out_channels == in_channels for the residual"

    # (3,3,Cin,Cout) -> (9*Cin, Cout) in (ky,kx,cin) order; bf16 weights for the MXU.
    wm = lambda w: w.reshape(-1, w.shape[-1]).astype(jnp.bfloat16)
    bm = lambda b: b.reshape(1, -1).astype(jnp.float32)

    Hp, Wp, HW = H + 2, W + 2, H * W
    kernel = functools.partial(_spab_kernel, H=H, W=W, Cin=C, Cm=Cm, Co=Co)

    # TODO(synk): for real SR resolutions add a second grid axis over spatial row
    # chunks with a 3-pixel halo (and lane-dense packed outputs) so blocks stay
    # within v7x's 64 MiB VMEM; at these sizes one full-image block per batch
    # element is optimal.
    out, out1, att = pl.pallas_call(
        kernel,
        out_shape=(
            jax.ShapeDtypeStruct((B, HW, Co), jnp.float32),
            jax.ShapeDtypeStruct((B, HW, Cm), jnp.float32),
            jax.ShapeDtypeStruct((B, HW, Co), jnp.float32),
        ),
        grid=(B,),
        in_specs=[
            pl.BlockSpec((None, Hp, Wp, C), lambda b: (b, 0, 0, 0)),
            pl.BlockSpec((9 * C, Cm), lambda b: (0, 0)),
            pl.BlockSpec((1, Cm), lambda b: (0, 0)),
            pl.BlockSpec((9 * Cm, Cm), lambda b: (0, 0)),
            pl.BlockSpec((1, Cm), lambda b: (0, 0)),
            pl.BlockSpec((9 * Cm, Co), lambda b: (0, 0)),
            pl.BlockSpec((1, Co), lambda b: (0, 0)),
        ],
        out_specs=(
            pl.BlockSpec((None, HW, Co), lambda b: (b, 0, 0)),
            pl.BlockSpec((None, HW, Cm), lambda b: (b, 0, 0)),
            pl.BlockSpec((None, HW, Co), lambda b: (b, 0, 0)),
        ),
        scratch_shapes=[pltpu.VMEM((Hp, Wp, Cm), jnp.float32)],
        compiler_params=pltpu.CompilerParams(
            dimension_semantics=("parallel",),   # v7x: shard batch over the 2 TCs
            vmem_limit_bytes=64 * 1024 * 1024,
        ),
    )(xpad, wm(w1), bm(b1), wm(w2), bm(b2), wm(w3), bm(b3))

    def to_nchw(t, c):
        return jnp.transpose(t.reshape(B, H, W, c), (0, 3, 1, 2))

    return to_nchw(out, Co), to_nchw(out1, Cm), to_nchw(att, Co)


# ----------------------- pure-JAX reference (for checking) -------------------

def _conv3xc_ref(x, p):
    """Un-fused Conv3XC composition (1x1 -> 3x3(valid on padded) -> 1x1 + 1x1 skip),
    i.e. exactly the math that update_params() collapses into the eval conv."""
    xp = jnp.pad(x, ((0, 0), (1, 1), (1, 1), (0, 0)))
    h = jnp.einsum('bhwc,cm->bhwm', xp, p["w1"]) + p["b1"]
    h = lax.conv_general_dilated(h, p["w2"], (1, 1), "VALID",
                                 dimension_numbers=("NHWC", "HWIO", "NHWC")) + p["b2"]
    h = jnp.einsum('bhwg,go->bhwo', h, p["w3"]) + p["b3"]
    sk = jnp.einsum('bhwc,co->bhwo', x, p["sk_w"]) + p["sk_b"]
    return h + sk


def spab_ref(x_nhwc, params):
    o1 = _conv3xc_ref(x_nhwc, params["c1"])
    a1 = o1 * jax.nn.sigmoid(o1)
    o2 = _conv3xc_ref(a1, params["c2"])
    a2 = o2 * jax.nn.sigmoid(o2)
    o3 = _conv3xc_ref(a2, params["c3"])
    sim = jax.nn.sigmoid(o3) - 0.5
    return (o3 + x_nhwc) * sim, o1, sim


# --------------------------- deterministic params ----------------------------

def make_conv3xc_params(key, c_in, c_out, gain=2, scale=0.1):
    ks = jax.random.split(key, 8)
    cm, cg = c_in * gain, c_out * gain
    n = lambda k, s: scale * jax.random.normal(k, s, jnp.float32)
    return {
        "w1": n(ks[0], (c_in, cm)), "b1": n(ks[1], (cm,)),
        "w2": n(ks[2], (3, 3, cm, cg)), "b2": n(ks[3], (cg,)),
        "w3": n(ks[4], (cg, c_out)), "b3": n(ks[5], (c_out,)),
        "sk_w": n(ks[6], (c_in, c_out)), "sk_b": n(ks[7], (c_out,)),
    }


def make_spab_params(key, c):
    k1, k2, k3 = jax.random.split(key, 3)
    return {"c1": make_conv3xc_params(k1, c, c),
            "c2": make_conv3xc_params(k2, c, c),
            "c3": make_conv3xc_params(k3, c, c)}


# ----------------------------------- main ------------------------------------

if __name__ == "__main__":
    B, C, H, W = 2, 16, 16, 16
    key = jax.random.PRNGKey(0)
    k_x, k_p = jax.random.split(key)
    x = jax.random.uniform(k_x, (B, C, H, W), dtype=jnp.float32)
    params = make_spab_params(k_p, C)

    fwd = jax.jit(spab_forward)
    out, out1, sim_att = fwd(x, params)
    jax.block_until_ready((out, out1, sim_att))

    assert out.shape == (B, C, H, W)
    assert out1.shape == (B, C, H, W)
    assert sim_att.shape == (B, C, H, W)

    # Validate fusion + kernel against the un-fused pure-JAX reference.
    # Matmul operands are bf16 in the kernel, so use a loose-ish tolerance.
    x_nhwc = jnp.transpose(x, (0, 2, 3, 1))
    r_out, r_o1, r_sim = spab_ref(x_nhwc, params)
    nchw = lambda t: jnp.transpose(t, (0, 3, 1, 2))
    for got, ref, name in ((out, nchw(r_out), "out"),
                           (out1, nchw(r_o1), "out1"),
                           (sim_att, nchw(r_sim), "sim_att")):
        err = float(jnp.max(jnp.abs(got - ref)))
        assert err < 2e-2, f"{name}: max abs err {err}"

    print("KERNEL_OK")
</pallas_src>

<mosaic_0001>
module attributes {stable_mosaic.version = 11 : i64} {
  func.func @_spab_kernel(%arg0: i32, %arg1: memref<1x18x18x16xf32, #tpu.memory_space<vmem>>, %arg2: memref<144x16xbf16, #tpu.memory_space<vmem>>, %arg3: memref<1x16xf32, #tpu.memory_space<vmem>>, %arg4: memref<144x16xbf16, #tpu.memory_space<vmem>>, %arg5: memref<1x16xf32, #tpu.memory_space<vmem>>, %arg6: memref<144x16xbf16, #tpu.memory_space<vmem>>, %arg7: memref<1x16xf32, #tpu.memory_space<vmem>>, %arg8: memref<1x256x16xf32, #tpu.memory_space<vmem>>, %arg9: memref<1x256x16xf32, #tpu.memory_space<vmem>>, %arg10: memref<1x256x16xf32, #tpu.memory_space<vmem>>, %arg11: memref<18x18x16xf32, #tpu.memory_space<vmem>>) attributes {dimension_semantics = [#tpu.dimension_semantics<parallel>], iteration_bounds = array<i64: 2>, scalar_prefetch = 0 : i64, scratch_operands = 1 : i64, tpu.core_type = #tpu.core_type<tc>, window_params = [{transform_indices = @transform_0, window_bounds = array<i64: 1, 18, 18, 16>}, {pipeline_mode = #tpu.pipeline_mode<synchronous>, transform_indices = @transform_1, window_bounds = array<i64: 144, 16>}, {pipeline_mode = #tpu.pipeline_mode<synchronous>, transform_indices = @transform_2, window_bounds = array<i64: 1, 16>}, {pipeline_mode = #tpu.pipeline_mode<synchronous>, transform_indices = @transform_3, window_bounds = array<i64: 144, 16>}, {pipeline_mode = #tpu.pipeline_mode<synchronous>, transform_indices = @transform_4, window_bounds = array<i64: 1, 16>}, {pipeline_mode = #tpu.pipeline_mode<synchronous>, transform_indices = @transform_5, window_bounds = array<i64: 144, 16>}, {pipeline_mode = #tpu.pipeline_mode<synchronous>, transform_indices = @transform_6, window_bounds = array<i64: 1, 16>}, {transform_indices = @transform_7, window_bounds = array<i64: 1, 256, 16>}, {transform_indices = @transform_8, window_bounds = array<i64: 1, 256, 16>}, {transform_indices = @transform_9, window_bounds = array<i64: 1, 256, 16>}]} {
    %c0 = arith.constant 0 : index
    %c0_0 = arith.constant 0 : index
    %c0_1 = arith.constant 0 : index
    %c0_2 = arith.constant 0 : index
    %0 = vector.load %arg1[%c0, %c0_0, %c0_1, %c0_2] : memref<1x18x18x16xf32, #tpu.memory_space<vmem>>, vector<1x16x16x16xf32>
    %1 = vector.shape_cast %0 : vector<1x16x16x16xf32> to vector<16x16x16xf32>
    %2 = vector.shape_cast %1 : vector<16x16x16xf32> to vector<256x16xf32>
    %c0_3 = arith.constant 0 : index
    %c0_4 = arith.constant 0 : index
    %c1 = arith.constant 1 : index
    %c0_5 = arith.constant 0 : index
    %3 = vector.load %arg1[%c0_3, %c0_4, %c1, %c0_5] : memref<1x18x18x16xf32, #tpu.memory_space<vmem>>, vector<1x16x16x16xf32>
    %4 = vector.shape_cast %3 : vector<1x16x16x16xf32> to vector<16x16x16xf32>
    %5 = vector.shape_cast %4 : vector<16x16x16xf32> to vector<256x16xf32>
    %c0_6 = arith.constant 0 : index
    %c0_7 = arith.constant 0 : index
    %c2 = arith.constant 2 : index
    %c0_8 = arith.constant 0 : index
    %6 = vector.load %arg1[%c0_6, %c0_7, %c2, %c0_8] : memref<1x18x18x16xf32, #tpu.memory_space<vmem>>, vector<1x16x16x16xf32>
    %7 = vector.shape_cast %6 : vector<1x16x16x16xf32> to vector<16x16x16xf32>
    %8 = vector.shape_cast %7 : vector<16x16x16xf32> to vector<256x16xf32>
    %c0_9 = arith.constant 0 : index
    %c1_10 = arith.constant 1 : index
    %c0_11 = arith.constant 0 : index
    %c0_12 = arith.constant 0 : index
    %9 = vector.load %arg1[%c0_9, %c1_10, %c0_11, %c0_12] : memref<1x18x18x16xf32, #tpu.memory_space<vmem>>, vector<1x16x16x16xf32>
    %10 = vector.shape_cast %9 : vector<1x16x16x16xf32> to vector<16x16x16xf32>
    %11 = vector.shape_cast %10 : vector<16x16x16xf32> to vector<256x16xf32>
    %c0_13 = arith.constant 0 : index
    %c1_14 = arith.constant 1 : index
    %c1_15 = arith.constant 1 : index
    %c0_16 = arith.constant 0 : index
    %12 = vector.load %arg1[%c0_13, %c1_14, %c1_15, %c0_16] : memref<1x18x18x16xf32, #tpu.memory_space<vmem>>, vector<1x16x16x16xf32>
    %13 = vector.shape_cast %12 : vector<1x16x16x16xf32> to vector<16x16x16xf32>
    %14 = vector.shape_cast %13 : vector<16x16x16xf32> to vector<256x16xf32>
    %c0_17 = arith.constant 0 : index
    %c1_18 = arith.constant 1 : index
    %c2_19 = arith.constant 2 : index
    %c0_20 = arith.constant 0 : index
    %15 = vector.load %arg1[%c0_17, %c1_18, %c2_19, %c0_20] : memref<1x18x18x16xf32, #tpu.memory_space<vmem>>, vector<1x16x16x16xf32>
    %16 = vector.shape_cast %15 : vector<1x16x16x16xf32> to vector<16x16x16xf32>
    %17 = vector.shape_cast %16 : vector<16x16x16xf32> to vector<256x16xf32>
    %c0_21 = arith.constant 0 : index
    %c2_22 = arith.constant 2 : index
    %c0_23 = arith.constant 0 : index
    %c0_24 = arith.constant 0 : index
    %18 = vector.load %arg1[%c0_21, %c2_22, %c0_23, %c0_24] : memref<1x18x18x16xf32, #tpu.memory_space<vmem>>, vector<1x16x16x16xf32>
    %19 = vector.shape_cast %18 : vector<1x16x16x16xf32> to vector<16x16x16xf32>
    %20 = vector.shape_cast %19 : vector<16x16x16xf32> to vector<256x16xf32>
    %c0_25 = arith.constant 0 : index
    %c2_26 = arith.constant 2 : index
    %c1_27 = arith.constant 1 : index
    %c0_28 = arith.constant 0 : index
    %21 = vector.load %arg1[%c0_25, %c2_26, %c1_27, %c0_28] : memref<1x18x18x16xf32, #tpu.memory_space<vmem>>, vector<1x16x16x16xf32>
    %22 = vector.shape_cast %21 : vector<1x16x16x16xf32> to vector<16x16x16xf32>
    %23 = vector.shape_cast %22 : vector<16x16x16xf32> to vector<256x16xf32>
    %c0_29 = arith.constant 0 : index
    %c2_30 = arith.constant 2 : index
    %c2_31 = arith.constant 2 : index
    %c0_32 = arith.constant 0 : index
    %24 = vector.load %arg1[%c0_29, %c2_30, %c2_31, %c0_32] : memref<1x18x18x16xf32, #tpu.memory_space<vmem>>, vector<1x16x16x16xf32>
    %25 = vector.shape_cast %24 : vector<1x16x16x16xf32> to vector<16x16x16xf32>
    %26 = vector.shape_cast %25 : vector<16x16x16xf32> to vector<256x16xf32>
    %27 = tpu.concatenate %2, %5, %8, %11, %14, %17, %20, %23, %26 in 1 : vector<256x16xf32>, vector<256x16xf32>, vector<256x16xf32>, vector<256x16xf32>, vector<256x16xf32>, vector<256x16xf32>, vector<256x16xf32>, vector<256x16xf32>, vector<256x16xf32> -> vector<256x144xf32>
    %28 = arith.truncf %27 : vector<256x144xf32> to vector<256x144xbf16>
    %c0_33 = arith.constant 0 : index
    %c0_34 = arith.constant 0 : index
    %29 = vector.load %arg2[%c0_33, %c0_34] : memref<144x16xbf16, #tpu.memory_space<vmem>>, vector<144x16xbf16>
    %cst = arith.constant dense<0.000000e+00> : vector<256x16xf32>
    %30 = tpu.matmul %28, %29, %cst {dimension_numbers = #tpu.dot_dimension_numbers<[1], [0], [0], [1], [0, 0, 1, 1], [], []>} : vector<256x144xbf16>, vector<144x16xbf16>, vector<256x16xf32> -> vector<256x16xf32>
    %c0_35 = arith.constant 0 : index
    %c0_36 = arith.constant 0 : index
    %31 = vector.load %arg3[%c0_35, %c0_36] : memref<1x16xf32, #tpu.memory_space<vmem>>, vector<1x16xf32>
    %32 = vector.broadcast %31 : vector<1x16xf32> to vector<256x16xf32>
    %33 = arith.addf %30, %32 : vector<256x16xf32>
    %c0_37 = arith.constant 0 : index
    %c0_38 = arith.constant 0 : index
    %c0_39 = arith.constant 0 : index
    %34 = vector.load %arg9[%c0_37, %c0_38, %c0_39] : memref<1x256x16xf32, #tpu.memory_space<vmem>>, vector<1x256x16xf32>
    %35 = vector.shape_cast %34 : vector<1x256x16xf32> to vector<256x16xf32>
    %36 = vector.shape_cast %33 : vector<256x16xf32> to vector<1x256x16xf32>
    tpu.vector_store %arg9[%c0_37, %c0_38, %c0_39], %36 {strides = array<i32>} : memref<1x256x16xf32, #tpu.memory_space<vmem>>, vector<1x256x16xf32>,
    %37 = arith.negf %33 : vector<256x16xf32>
    %38 = math.exp %37 : vector<256x16xf32>
    %cst_40 = arith.constant 1.000000e+00 : f32
    %39 = vector.broadcast %cst_40 : f32 to vector<256x16xf32>
    %40 = arith.addf %39, %38 : vector<256x16xf32>
    %41 = arith.divf %39, %40 : vector<256x16xf32>
    %42 = arith.mulf %33, %41 : vector<256x16xf32>
    %cst_41 = arith.constant 0.000000e+00 : f32
    %43 = vector.broadcast %cst_41 : f32 to vector<18x18x16xf32>
    %c0_42 = arith.constant 0 : index
    %c0_43 = arith.constant 0 : index
    %c0_44 = arith.constant 0 : index
    %44 = vector.load %arg11[%c0_42, %c0_43, %c0_44] : memref<18x18x16xf32, #tpu.memory_space<vmem>>, vector<18x18x16xf32>
    tpu.vector_store %arg11[%c0_42, %c0_43, %c0_44], %43 {strides = array<i32>} : memref<18x18x16xf32, #tpu.memory_space<vmem>>, vector<18x18x16xf32>,
    %45 = vector.shape_cast %42 : vector<256x16xf32> to vector<16x16x16xf32>
    %c1_45 = arith.constant 1 : index
    %c1_46 = arith.constant 1 : index
    %c0_47 = arith.constant 0 : index
    %46 = vector.load %arg11[%c1_45, %c1_46, %c0_47] : memref<18x18x16xf32, #tpu.memory_space<vmem>>, vector<16x16x16xf32>
    tpu.vector_store %arg11[%c1_45, %c1_46, %c0_47], %45 {strides = array<i32>} : memref<18x18x16xf32, #tpu.memory_space<vmem>>, vector<16x16x16xf32>,
    %c0_48 = arith.constant 0 : index
    %c0_49 = arith.constant 0 : index
    %c0_50 = arith.constant 0 : index
    %47 = vector.load %arg11[%c0_48, %c0_49, %c0_50] : memref<18x18x16xf32, #tpu.memory_space<vmem>>, vector<16x16x16xf32>
    %48 = vector.shape_cast %47 : vector<16x16x16xf32> to vector<256x16xf32>
    %c0_51 = arith.constant 0 : index
    %c1_52 = arith.constant 1 : index
    %c0_53 = arith.constant 0 : index
    %49 = vector.load %arg11[%c0_51, %c1_52, %c0_53] : memref<18x18x16xf32, #tpu.memory_space<vmem>>, vector<16x16x16xf32>
    %50 = vector.shape_cast %49 : vector<16x16x16xf32> to vector<256x16xf32>
    %c0_54 = arith.constant 0 : index
    %c2_55 = arith.constant 2 : index
    %c0_56 = arith.constant 0 : index
    %51 = vector.load %arg11[%c0_54, %c2_55, %c0_56] : memref<18x18x16xf32, #tpu.memory_space<vmem>>, vector<16x16x16xf32>
    %52 = vector.shape_cast %51 : vector<16x16x16xf32> to vector<256x16xf32>
    %c1_57 = arith.constant 1 : index
    %c0_58 = arith.constant 0 : index
    %c0_59 = arith.constant 0 : index
    %53 = vector.load %arg11[%c1_57, %c0_58, %c0_59] : memref<18x18x16xf32, #tpu.memory_space<vmem>>, vector<16x16x16xf32>
    %54 = vector.shape_cast %53 : vector<16x16x16xf32> to vector<256x16xf32>
    %c1_60 = arith.constant 1 : index
    %c1_61 = arith.constant 1 : index
    %c0_62 = arith.constant 0 : index
    %55 = vector.load %arg11[%c1_60, %c1_61, %c0_62] : memref<18x18x16xf32, #tpu.memory_space<vmem>>, vector<16x16x16xf32>
    %56 = vector.shape_cast %55 : vector<16x16x16xf32> to vector<256x16xf32>
    %c1_63 = arith.constant 1 : index
    %c2_64 = arith.constant 2 : index
    %c0_65 = arith.constant 0 : index
    %57 = vector.load %arg11[%c1_63, %c2_64, %c0_65] : memref<18x18x16xf32, #tpu.memory_space<vmem>>, vector<16x16x16xf32>
    %58 = vector.shape_cast %57 : vector<16x16x16xf32> to vector<256x16xf32>
    %c2_66 = arith.constant 2 : index
    %c0_67 = arith.constant 0 : index
    %c0_68 = arith.constant 0 : index
    %59 = vector.load %arg11[%c2_66, %c0_67, %c0_68] : memref<18x18x16xf32, #tpu.memory_space<vmem>>, vector<16x16x16xf32>
    %60 = vector.shape_cast %59 : vector<16x16x16xf32> to vector<256x16xf32>
    %c2_69 = arith.constant 2 : index
    %c1_70 = arith.constant 1 : index
    %c0_71 = arith.constant 0 : index
    %61 = vector.load %arg11[%c2_69, %c1_70, %c0_71] : memref<18x18x16xf32, #tpu.memory_space<vmem>>, vector<16x16x16xf32>
    %62 = vector.shape_cast %61 : vector<16x16x16xf32> to vector<256x16xf32>
    %c2_72 = arith.constant 2 : index
    %c2_73 = arith.constant 2 : index
    %c0_74 = arith.constant 0 : index
    %63 = vector.load %arg11[%c2_72, %c2_73, %c0_74] : memref<18x18x16xf32, #tpu.memory_space<vmem>>, vector<16x16x16xf32>
    %64 = vector.shape_cast %63 : vector<16x16x16xf32> to vector<256x16xf32>
    %65 = tpu.concatenate %48, %50, %52, %54, %56, %58, %60, %62, %64 in 1 : vector<256x16xf32>, vector<256x16xf32>, vector<256x16xf32>, vector<256x16xf32>, vector<256x16xf32>, vector<256x16xf32>, vector<256x16xf32>, vector<256x16xf32>, vector<256x16xf32> -> vector<256x144xf32>
    %66 = arith.truncf %65 : vector<256x144xf32> to vector<256x144xbf16>
    %c0_75 = arith.constant 0 : index
    %c0_76 = arith.constant 0 : index
    %67 = vector.load %arg4[%c0_75, %c0_76] : memref<144x16xbf16, #tpu.memory_space<vmem>>, vector<144x16xbf16>
    %cst_77 = arith.constant dense<0.000000e+00> : vector<256x16xf32>
    %68 = tpu.matmul %66, %67, %cst_77 {dimension_numbers = #tpu.dot_dimension_numbers<[1], [0], [0], [1], [0, 0, 1, 1], [], []>} : vector<256x144xbf16>, vector<144x16xbf16>, vector<256x16xf32> -> vector<256x16xf32>
    %c0_78 = arith.constant 0 : index
    %c0_79 = arith.constant 0 : index
    %69 = vector.load %arg5[%c0_78, %c0_79] : memref<1x16xf32, #tpu.memory_space<vmem>>, vector<1x16xf32>
    %70 = vector.broadcast %69 : vector<1x16xf32> to vector<256x16xf32>
    %71 = arith.addf %68, %70 : vector<256x16xf32>
    %72 = arith.negf %71 : vector<256x16xf32>
    %73 = math.exp %72 : vector<256x16xf32>
    %cst_80 = arith.constant 1.000000e+00 : f32
    %74 = vector.broadcast %cst_80 : f32 to vector<256x16xf32>
    %75 = arith.addf %74, %73 : vector<256x16xf32>
    %76 = arith.divf %74, %75 : vector<256x16xf32>
    %77 = arith.mulf %71, %76 : vector<256x16xf32>
    %78 = vector.shape_cast %77 : vector<256x16xf32> to vector<16x16x16xf32>
    %c1_81 = arith.constant 1 : index
    %c1_82 = arith.constant 1 : index
    %c0_83 = arith.constant 0 : index
    %79 = vector.load %arg11[%c1_81, %c1_82, %c0_83] : memref<18x18x16xf32, #tpu.memory_space<vmem>>, vector<16x16x16xf32>
    tpu.vector_store %arg11[%c1_81, %c1_82, %c0_83], %78 {strides = array<i32>} : memref<18x18x16xf32, #tpu.memory_space<vmem>>, vector<16x16x16xf32>,
    %c0_84 = arith.constant 0 : index
    %c0_85 = arith.constant 0 : index
    %c0_86 = arith.constant 0 : index
    %80 = vector.load %arg11[%c0_84, %c0_85, %c0_86] : memref<18x18x16xf32, #tpu.memory_space<vmem>>, vector<16x16x16xf32>
    %81 = vector.shape_cast %80 : vector<16x16x16xf32> to vector<256x16xf32>
    %c0_87 = arith.constant 0 : index
    %c1_88 = arith.constant 1 : index
    %c0_89 = arith.constant 0 : index
    %82 = vector.load %arg11[%c0_87, %c1_88, %c0_89] : memref<18x18x16xf32, #tpu.memory_space<vmem>>, vector<16x16x16xf32>
    %83 = vector.shape_cast %82 : vector<16x16x16xf32> to vector<256x16xf32>
    %c0_90 = arith.constant 0 : index
    %c2_91 = arith.constant 2 : index
    %c0_92 = arith.constant 0 : index
    %84 = vector.load %arg11[%c0_90, %c2_91, %c0_92] : memref<18x18x16xf32, #tpu.memory_space<vmem>>, vector<16x16x16xf32>
    %85 = vector.shape_cast %84 : vector<16x16x16xf32> to vector<256x16xf32>
    %c1_93 = arith.constant 1 : index
    %c0_94 = arith.constant 0 : index
    %c0_95 = arith.constant 0 : index
    %86 = vector.load %arg11[%c1_93, %c0_94, %c0_95] : memref<18x18x16xf32, #tpu.memory_space<vmem>>, vector<16x16x16xf32>
    %87 = vector.shape_cast %86 : vector<16x16x16xf32> to vector<256x16xf32>
    %c1_96 = arith.constant 1 : index
    %c1_97 = arith.constant 1 : index
    %c0_98 = arith.constant 0 : index
    %88 = vector.load %arg11[%c1_96, %c1_97, %c0_98] : memref<18x18x16xf32, #tpu.memory_space<vmem>>, vector<16x16x16xf32>
    %89 = vector.shape_cast %88 : vector<16x16x16xf32> to vector<256x16xf32>
    %c1_99 = arith.constant 1 : index
    %c2_100 = arith.constant 2 : index
    %c0_101 = arith.constant 0 : index
    %90 = vector.load %arg11[%c1_99, %c2_100, %c0_101] : memref<18x18x16xf32, #tpu.memory_space<vmem>>, vector<16x16x16xf32>
    %91 = vector.shape_cast %90 : vector<16x16x16xf32> to vector<256x16xf32>
    %c2_102 = arith.constant 2 : index
    %c0_103 = arith.constant 0 : index
    %c0_104 = arith.constant 0 : index
    %92 = vector.load %arg11[%c2_102, %c0_103, %c0_104] : memref<18x18x16xf32, #tpu.memory_space<vmem>>, vector<16x16x16xf32>
    %93 = vector.shape_cast %92 : vector<16x16x16xf32> to vector<256x16xf32>
    %c2_105 = arith.constant 2 : index
    %c1_106 = arith.constant 1 : index
    %c0_107 = arith.constant 0 : index
    %94 = vector.load %arg11[%c2_105, %c1_106, %c0_107] : memref<18x18x16xf32, #tpu.memory_space<vmem>>, vector<16x16x16xf32>
    %95 = vector.shape_cast %94 : vector<16x16x16xf32> to vector<256x16xf32>
    %c2_108 = arith.constant 2 : index
    %c2_109 = arith.constant 2 : index
    %c0_110 = arith.constant 0 : index
    %96 = vector.load %arg11[%c2_108, %c2_109, %c0_110] : memref<18x18x16xf32, #tpu.memory_space<vmem>>, vector<16x16x16xf32>
    %97 = vector.shape_cast %96 : vector<16x16x16xf32> to vector<256x16xf32>
    %98 = tpu.concatenate %81, %83, %85, %87, %89, %91, %93, %95, %97 in 1 : vector<256x16xf32>, vector<256x16xf32>, vector<256x16xf32>, vector<256x16xf32>, vector<256x16xf32>, vector<256x16xf32>, vector<256x16xf32>, vector<256x16xf32>, vector<256x16xf32> -> vector<256x144xf32>
    %99 = arith.truncf %98 : vector<256x144xf32> to vector<256x144xbf16>
    %c0_111 = arith.constant 0 : index
    %c0_112 = arith.constant 0 : index
    %100 = vector.load %arg6[%c0_111, %c0_112] : memref<144x16xbf16, #tpu.memory_space<vmem>>, vector<144x16xbf16>
    %cst_113 = arith.constant dense<0.000000e+00> : vector<256x16xf32>
    %101 = tpu.matmul %99, %100, %cst_113 {dimension_numbers = #tpu.dot_dimension_numbers<[1], [0], [0], [1], [0, 0, 1, 1], [], []>} : vector<256x144xbf16>, vector<144x16xbf16>, vector<256x16xf32> -> vector<256x16xf32>
    %c0_114 = arith.constant 0 : index
    %c0_115 = arith.constant 0 : index
    %102 = vector.load %arg7[%c0_114, %c0_115] : memref<1x16xf32, #tpu.memory_space<vmem>>, vector<1x16xf32>
    %103 = vector.broadcast %102 : vector<1x16xf32> to vector<256x16xf32>
    %104 = arith.addf %101, %103 : vector<256x16xf32>
    %105 = arith.negf %104 : vector<256x16xf32>
    %106 = math.exp %105 : vector<256x16xf32>
    %cst_116 = arith.constant 1.000000e+00 : f32
    %107 = vector.broadcast %cst_116 : f32 to vector<256x16xf32>
    %108 = arith.addf %107, %106 : vector<256x16xf32>
    %109 = arith.divf %107, %108 : vector<256x16xf32>
    %cst_117 = arith.constant 5.000000e-01 : f32
    %110 = vector.broadcast %cst_117 : f32 to vector<256x16xf32>
    %111 = arith.subf %109, %110 : vector<256x16xf32>
    %c0_118 = arith.constant 0 : index
    %c0_119 = arith.constant 0 : index
    %c0_120 = arith.constant 0 : index
    %112 = vector.load %arg10[%c0_118, %c0_119, %c0_120] : memref<1x256x16xf32, #tpu.memory_space<vmem>>, vector<1x256x16xf32>
    %113 = vector.shape_cast %112 : vector<1x256x16xf32> to vector<256x16xf32>
    %114 = vector.shape_cast %111 : vector<256x16xf32> to vector<1x256x16xf32>
    tpu.vector_store %arg10[%c0_118, %c0_119, %c0_120], %114 {strides = array<i32>} : memref<1x256x16xf32, #tpu.memory_space<vmem>>, vector<1x256x16xf32>,
    %c0_121 = arith.constant 0 : index
    %c1_122 = arith.constant 1 : index
    %c1_123 = arith.constant 1 : index
    %c0_124 = arith.constant 0 : index
    %115 = vector.load %arg1[%c0_121, %c1_122, %c1_123, %c0_124] : memref<1x18x18x16xf32, #tpu.memory_space<vmem>>, vector<1x16x16x16xf32>
    %116 = vector.shape_cast %115 : vector<1x16x16x16xf32> to vector<16x16x16xf32>
    %117 = vector.shape_cast %116 : vector<16x16x16xf32> to vector<256x16xf32>
    %118 = arith.addf %104, %117 : vector<256x16xf32>
    %119 = arith.mulf %118, %111 : vector<256x16xf32>
    %c0_125 = arith.constant 0 : index
    %c0_126 = arith.constant 0 : index
    %c0_127 = arith.constant 0 : index
    %120 = vector.load %arg8[%c0_125, %c0_126, %c0_127] : memref<1x256x16xf32, #tpu.memory_space<vmem>>, vector<1x256x16xf32>
    %121 = vector.shape_cast %120 : vector<1x256x16xf32> to vector<256x16xf32>
    %122 = vector.shape_cast %119 : vector<256x16xf32> to vector<1x256x16xf32>
    tpu.vector_store %arg8[%c0_125, %c0_126, %c0_127], %122 {strides = array<i32>} : memref<1x256x16xf32, #tpu.memory_space<vmem>>, vector<1x256x16xf32>,
    return
  }
  func.func @transform_0(%arg0: i32) -> (i32, i32, i32, i32) {
    %c0_i32 = arith.constant 0 : i32
    %c0_i32_0 = arith.constant 0 : i32
    %c0_i32_1 = arith.constant 0 : i32
    %c0_i32_2 = arith.constant 0 : i32
    return %arg0, %c0_i32, %c0_i32_0, %c0_i32_1 : i32, i32, i32, i32
  }
  func.func @transform_1(%arg0: i32) -> (i32, i32) {
    %c0_i32 = arith.constant 0 : i32
    %c0_i32_0 = arith.constant 0 : i32
    %c0_i32_1 = arith.constant 0 : i32
    return %c0_i32, %c0_i32_0 : i32, i32
  }
  func.func @transform_2(%arg0: i32) -> (i32, i32) {
    %c0_i32 = arith.constant 0 : i32
    %c0_i32_0 = arith.constant 0 : i32
    %c0_i32_1 = arith.constant 0 : i32
    return %c0_i32, %c0_i32_0 : i32, i32
  }
  func.func @transform_3(%arg0: i32) -> (i32, i32) {
    %c0_i32 = arith.constant 0 : i32
    %c0_i32_0 = arith.constant 0 : i32
    %c0_i32_1 = arith.constant 0 : i32
    return %c0_i32, %c0_i32_0 : i32, i32
  }
  func.func @transform_4(%arg0: i32) -> (i32, i32) {
    %c0_i32 = arith.constant 0 : i32
    %c0_i32_0 = arith.constant 0 : i32
    %c0_i32_1 = arith.constant 0 : i32
    return %c0_i32, %c0_i32_0 : i32, i32
  }
  func.func @transform_5(%arg0: i32) -> (i32, i32) {
    %c0_i32 = arith.constant 0 : i32
    %c0_i32_0 = arith.constant 0 : i32
    %c0_i32_1 = arith.constant 0 : i32
    return %c0_i32, %c0_i32_0 : i32, i32
  }
  func.func @transform_6(%arg0: i32) -> (i32, i32) {
    %c0_i32 = arith.constant 0 : i32
    %c0_i32_0 = arith.constant 0 : i32
    %c0_i32_1 = arith.constant 0 : i32
    return %c0_i32, %c0_i32_0 : i32, i32
  }
  func.func @transform_7(%arg0: i32) -> (i32, i32, i32) {
    %c0_i32 = arith.constant 0 : i32
    %c0_i32_0 = arith.constant 0 : i32
    %c0_i32_1 = arith.constant 0 : i32
    return %arg0, %c0_i32, %c0_i32_0 : i32, i32, i32
  }
  func.func @transform_8(%arg0: i32) -> (i32, i32, i32) {
    %c0_i32 = arith.constant 0 : i32
    %c0_i32_0 = arith.constant 0 : i32
    %c0_i32_1 = arith.constant 0 : i32
    return %arg0, %c0_i32, %c0_i32_0 : i32, i32, i32
  }
  func.func @transform_9(%arg0: i32) -> (i32, i32, i32) {
    %c0_i32 = arith.constant 0 : i32
    %c0_i32_0 = arith.constant 0 : i32
    %c0_i32_1 = arith.constant 0 : i32
    return %arg0, %c0_i32, %c0_i32_0 : i32, i32, i32
  }
}

</mosaic_0001>

<llo_original>
// kernel: spab_forward.1
$region0: #{spab_forward.1}
  #allocation0 [shape = 'u32[]', space=smem, size = 0x4, offset = 0x4, fixed_abs, tag = 'smem constant byte address 0x4 - core index']
  #allocation1 [shape = 'u32[144,128]{1,0:T(1,128)}', space=vmem, size = 0x12000, scoped, tag = 'internal scratch']
  #allocation2 [shape = 'f32[18,18,16]{2,1,0:T(8,128)}', space=vmem, size = 0x36000, scoped, tag = 'scratch operand']
  %s0 = inlined_call_operand.vmem [shape: f32[2,18,18,16], index: 0, kind: input, shape index: {}]
  %s1 = inlined_call_operand.vmem [shape: bf16[144,16], index: 1, kind: input, shape index: {}]
  %s2 = inlined_call_operand.vmem [shape: f32[1,16], index: 2, kind: input, shape index: {}]
  %s3 = inlined_call_operand.vmem [shape: bf16[144,16], index: 3, kind: input, shape index: {}]
  %s4 = inlined_call_operand.vmem [shape: f32[1,16], index: 4, kind: input, shape index: {}]
  %s5 = inlined_call_operand.vmem [shape: bf16[144,16], index: 5, kind: input, shape index: {}]
  %s6 = inlined_call_operand.vmem [shape: f32[1,16], index: 6, kind: input, shape index: {}]
  %s7 = inlined_call_operand.vmem [shape: f32[2,256,16], index: 7, kind: output, shape index: {0}]
  %s8 = inlined_call_operand.vmem [shape: f32[2,256,16], index: 8, kind: output, shape index: {1}]
  %s9 = inlined_call_operand.vmem [shape: f32[2,256,16], index: 9, kind: output, shape index: {2}]
  %10 = xla_tuple %s7, %s8, %s9
  %s11 = sld [smem:[#allocation0]]
  $region77: #{spab_forward.1} parent=0
    _
  %s13 = ssub.s32 1, %s11
  %s14 = scalar_select 0, %s13, %s11
  loop: start=0, step=1, limit=4
  $region2: #{spab_forward.1} parent=0 // loop_pre_header
    _
  $region3: #{spab_forward.1} parent=0 // loop_header
    %s16 = sphi 0, %s20
    %p17 = scmp.ge.s32.totalorder %s16, 4
    %s26 = sphi 0, %s28
    %s29 = sphi 0, %s26
    %s30 = sphi 0, %s29
    %s46 = sphi 0, %s30
    %s50 = sphi 0, %s50
    %s52 = sphi 0, %s50
    %s53 = sphi 0, %s52
    %s67 = sphi 0, %s53
    %s71 = sphi 0, %s71
    %s73 = sphi 0, %s71
    %s74 = sphi 0, %s73
    %s88 = sphi 0, %s74
    %s92 = sphi 0, %s92
    %s94 = sphi 0, %s92
    %s95 = sphi 0, %s94
    %s109 = sphi 0, %s95
    %s113 = sphi 0, %s113
    %s115 = sphi 0, %s113
    %s116 = sphi 0, %s115
    %s130 = sphi 0, %s116
    %s134 = sphi 0, %s134
    %s136 = sphi 0, %s134
    %s137 = sphi 0, %s136
    %s151 = sphi 0, %s137
    %s155 = sphi 0, %s155
    %s157 = sphi 0, %s155
    %s158 = sphi 0, %s157
    %s172 = sphi 0, %s158
    %s178 = sphi 0, %s180
    %s181 = sphi 0, %s178
    %s182 = sphi 0, %s181
    %s198 = sphi 0, %s182
    %s204 = sphi 0, %s206
    %s207 = sphi 0, %s204
    %s208 = sphi 0, %s207
    %s224 = sphi 0, %s208
    %s230 = sphi 0, %s232
    %s233 = sphi 0, %s230
    %s234 = sphi 0, %s233
    %s250 = sphi 0, %s234
  $region4: #{spab_forward.1} parent=0 // loop_header_branch
    %19 = sbr.rel (%p17) target = $region8
  $region5: #{spab_forward.1} parent=0 // loop_body
    %s21 = ssub.s32 %s16, 1
    %s22 = ssub.s32 %s16, 2
    %s23 = sadd.s32 %s16, 1
    %s24 = ssub.s32 %s16, %s23
    %p25 = scmp.eq.s32.totalorder %s24, 0
    %s27 = sadd.s32 %s26, 1
    %s28 = scalar_select %p25, %s26, %s27
    %p31 = pneg %p25
    %p32 = scmp.eq.s32.totalorder %s16, 1
    %p33 = por %p31, %p32
    %p34 = scmp.ne.s32.totalorder %s26, %s29
    %p35 = scmp.eq.s32.totalorder %s16, 0
    %p36 = por %p34, %p35
    %p37 = scmp.ne.s32.totalorder %s26, %s29
    %p38 = scmp.eq.s32.totalorder %s21, 1
    %p39 = por %p37, %p38
    %p40 = scmp.ne.s32.totalorder %s29, %s30
    %p41 = scmp.eq.s32.totalorder %s21, 0
    %p42 = por %p40, %p41
    %p43 = scmp.ne.s32.totalorder %s29, %s30
    %p44 = scmp.eq.s32.totalorder %s22, 1
    %p45 = por %p43, %p44
    %p47 = scmp.ne.s32.totalorder %s30, %s46
    %p48 = scmp.eq.s32.totalorder %s22, 0
    %p49 = por %p47, %p48
    %s51 = sadd.s32 %s50, 1
    %p54 = scmp.eq.s32.totalorder %s16, 1
    %p55 = scmp.ne.s32.totalorder %s50, %s52
    %p56 = scmp.eq.s32.totalorder %s16, 0
    %p57 = por %p55, %p56
    %p58 = scmp.ne.s32.totalorder %s50, %s52
    %p59 = scmp.eq.s32.totalorder %s21, 1
    %p60 = por %p58, %p59
    %p61 = scmp.ne.s32.totalorder %s52, %s53
    %p62 = scmp.eq.s32.totalorder %s21, 0
    %p63 = por %p61, %p62
    %p64 = scmp.ne.s32.totalorder %s52, %s53
    %p65 = scmp.eq.s32.totalorder %s22, 1
    %p66 = por %p64, %p65
    %p68 = scmp.ne.s32.totalorder %s53, %s67
    %p69 = scmp.eq.s32.totalorder %s22, 0
    %p70 = por %p68, %p69
    %s72 = sadd.s32 %s71, 1
    %p75 = scmp.eq.s32.totalorder %s16, 1
    %p76 = scmp.ne.s32.totalorder %s71, %s73
    %p77 = scmp.eq.s32.totalorder %s16, 0
    %p78 = por %p76, %p77
    %p79 = scmp.ne.s32.totalorder %s71, %s73
    %p80 = scmp.eq.s32.totalorder %s21, 1
    %p81 = por %p79, %p80
    %p82 = scmp.ne.s32.totalorder %s73, %s74
    %p83 = scmp.eq.s32.totalorder %s21, 0
    %p84 = por %p82, %p83
    %p85 = scmp.ne.s32.totalorder %s73, %s74
    %p86 = scmp.eq.s32.totalorder %s22, 1
    %p87 = por %p85, %p86
    %p89 = scmp.ne.s32.totalorder %s74, %s88
    %p90 = scmp.eq.s32.totalorder %s22, 0
    %p91 = por %p89, %p90
    %s93 = sadd.s32 %s92, 1
    %p96 = scmp.eq.s32.totalorder %s16, 1
    %p97 = scmp.ne.s32.totalorder %s92, %s94
    %p98 = scmp.eq.s32.totalorder %s16, 0
    %p99 = por %p97, %p98
    %p100 = scmp.ne.s32.totalorder %s92, %s94
    %p101 = scmp.eq.s32.totalorder %s21, 1
    %p102 = por %p100, %p101
    %p103 = scmp.ne.s32.totalorder %s94, %s95
    %p104 = scmp.eq.s32.totalorder %s21, 0
    %p105 = por %p103, %p104
    %p106 = scmp.ne.s32.totalorder %s94, %s95
    %p107 = scmp.eq.s32.totalorder %s22, 1
    %p108 = por %p106, %p107
    %p110 = scmp.ne.s32.totalorder %s95, %s109
    %p111 = scmp.eq.s32.totalorder %s22, 0
    %p112 = por %p110, %p111
    %s114 = sadd.s32 %s113, 1
    %p117 = scmp.eq.s32.totalorder %s16, 1
    %p118 = scmp.ne.s32.totalorder %s113, %s115
    %p119 = scmp.eq.s32.totalorder %s16, 0
    %p120 = por %p118, %p119
    %p121 = scmp.ne.s32.totalorder %s113, %s115
    %p122 = scmp.eq.s32.totalorder %s21, 1
    %p123 = por %p121, %p122
    %p124 = scmp.ne.s32.totalorder %s115, %s116
    %p125 = scmp.eq.s32.totalorder %s21, 0
    %p126 = por %p124, %p125
    %p127 = scmp.ne.s32.totalorder %s115, %s116
    %p128 = scmp.eq.s32.totalorder %s22, 1
    %p129 = por %p127, %p128
    %p131 = scmp.ne.s32.totalorder %s116, %s130
    %p132 = scmp.eq.s32.totalorder %s22, 0
    %p133 = por %p131, %p132
    %s135 = sadd.s32 %s134, 1
    %p138 = scmp.eq.s32.totalorder %s16, 1
    %p139 = scmp.ne.s32.totalorder %s134, %s136
    %p140 = scmp.eq.s32.totalorder %s16, 0
    %p141 = por %p139, %p140
    %p142 = scmp.ne.s32.totalorder %s134, %s136
    %p143 = scmp.eq.s32.totalorder %s21, 1
    %p144 = por %p142, %p143
    %p145 = scmp.ne.s32.totalorder %s136, %s137
    %p146 = scmp.eq.s32.totalorder %s21, 0
    %p147 = por %p145, %p146
    %p148 = scmp.ne.s32.totalorder %s136, %s137
    %p149 = scmp.eq.s32.totalorder %s22, 1
    %p150 = por %p148, %p149
    %p152 = scmp.ne.s32.totalorder %s137, %s151
    %p153 = scmp.eq.s32.totalorder %s22, 0
    %p154 = por %p152, %p153
    %s156 = sadd.s32 %s155, 1
    %p159 = scmp.eq.s32.totalorder %s16, 1
    %p160 = scmp.ne.s32.totalorder %s155, %s157
    %p161 = scmp.eq.s32.totalorder %s16, 0
    %p162 = por %p160, %p161
    %p163 = scmp.ne.s32.totalorder %s155, %s157
    %p164 = scmp.eq.s32.totalorder %s21, 1
    %p165 = por %p163, %p164
    %p166 = scmp.ne.s32.totalorder %s157, %s158
    %p167 = scmp.eq.s32.totalorder %s21, 0
    %p168 = por %p166, %p167
    %p169 = scmp.ne.s32.totalorder %s157, %s158
    %p170 = scmp.eq.s32.totalorder %s22, 1
    %p171 = por %p169, %p170
    %p173 = scmp.ne.s32.totalorder %s158, %s172
    %p174 = scmp.eq.s32.totalorder %s22, 0
    %p175 = por %p173, %p174
    %s176 = ssub.s32 %s16, %s23
    %p177 = scmp.eq.s32.totalorder %s176, 0
    %s179 = sadd.s32 %s178, 1
    %s180 = scalar_select %p177, %s178, %s179
    %p183 = pneg %p177
    %p184 = scmp.eq.s32.totalorder %s16, 1
    %p185 = por %p183, %p184
    %p186 = scmp.ne.s32.totalorder %s178, %s181
    %p187 = scmp.eq.s32.totalorder %s16, 0
    %p188 = por %p186, %p187
    %p189 = scmp.ne.s32.totalorder %s178, %s181
    %p190 = scmp.eq.s32.totalorder %s21, 1
    %p191 = por %p189, %p190
    %p192 = scmp.ne.s32.totalorder %s181, %s182
    %p193 = scmp.eq.s32.totalorder %s21, 0
    %p194 = por %p192, %p193
    %p195 = scmp.ne.s32.totalorder %s181, %s182
    %p196 = scmp.eq.s32.totalorder %s22, 1
    %p197 = por %p195, %p196
    %p199 = scmp.ne.s32.totalorder %s182, %s198
    %p200 = scmp.eq.s32.totalorder %s22, 0
    %p201 = por %p199, %p200
    %s202 = ssub.s32 %s16, %s23
    %p203 = scmp.eq.s32.totalorder %s202, 0
    %s205 = sadd.s32 %s204, 1
    %s206 = scalar_select %p203, %s204, %s205
    %p209 = pneg %p203
    %p210 = scmp.eq.s32.totalorder %s16, 1
    %p211 = por %p209, %p210
    %p212 = scmp.ne.s32.totalorder %s204, %s207
    %p213 = scmp.eq.s32.totalorder %s16, 0
    %p214 = por %p212, %p213
    %p215 = scmp.ne.s32.totalorder %s204, %s207
    %p216 = scmp.eq.s32.totalorder %s21, 1
    %p217 = por %p215, %p216
    %p218 = scmp.ne.s32.totalorder %s207, %s208
    %p219 = scmp.eq.s32.totalorder %s21, 0
    %p220 = por %p218, %p219
    %p221 = scmp.ne.s32.totalorder %s207, %s208
    %p222 = scmp.eq.s32.totalorder %s22, 1
    %p223 = por %p221, %p222
    %p225 = scmp.ne.s32.totalorder %s208, %s224
    %p226 = scmp.eq.s32.totalorder %s22, 0
    %p227 = por %p225, %p226
    %s228 = ssub.s32 %s16, %s23
    %p229 = scmp.eq.s32.totalorder %s228, 0
    %s231 = sadd.s32 %s230, 1
    %s232 = scalar_select %p229, %s230, %s231
    %p235 = pneg %p229
    %p236 = scmp.eq.s32.totalorder %s16, 1
    %p237 = por %p235, %p236
    %p238 = scmp.ne.s32.totalorder %s230, %s233
    %p239 = scmp.eq.s32.totalorder %s16, 0
    %p240 = por %p238, %p239
    %p241 = scmp.ne.s32.totalorder %s230, %s233
    %p242 = scmp.eq.s32.totalorder %s21, 1
    %p243 = por %p241, %p242
    %p244 = scmp.ne.s32.totalorder %s233, %s234
    %p245 = scmp.eq.s32.totalorder %s21, 0
    %p246 = por %p244, %p245
    %p247 = scmp.ne.s32.totalorder %s233, %s234
    %p248 = scmp.eq.s32.totalorder %s22, 1
    %p249 = por %p247, %p248
    %p251 = scmp.ne.s32.totalorder %s234, %s250
    %p252 = scmp.eq.s32.totalorder %s22, 0
    %p253 = por %p251, %p252
    %p254 = scmp.le.s32.totalorder 1, %s16
    %p255 = scmp.lt.s32.totalorder %s16, 3
    %p256 = pnand %p254, %p255
    %p257 = pneg %p256
    // Predicated region
    $region9: #{spab_forward.1} parent=5 // pred_check
      _
    $region10: #{spab_forward.1} parent=5 // pred_check_branch
      %259 = sbr.rel (%p256) target = $region12
    $region11: #{spab_forward.1} parent=5 // pred_region
      %s260 = ssub.s32 %s16, 1
      // Predicated region
      $region13: #{spab_forward.1} parent=11 // pred_check
        %p261 = pneg %p63
      $region14: #{spab_forward.1} parent=11 // pred_check_branch
        %263 = sbr.rel (%p261) target = $region16
      $region15: #{spab_forward.1} parent=11 // pred_region
        _
      $region16: #{spab_forward.1} parent=11 // pred_fallthru
        _
      // Predicated region
      $region17: #{spab_forward.1} parent=11 // pred_check
        %p264 = pneg %p84
      $region18: #{spab_forward.1} parent=11 // pred_check_branch
        %266 = sbr.rel (%p264) target = $region20
      $region19: #{spab_forward.1} parent=11 // pred_region
        _
      $region20: #{spab_forward.1} parent=11 // pred_fallthru
        _
      // Predicated region
      $region21: #{spab_forward.1} parent=11 // pred_check
        %p267 = pneg %p105
      $region22: #{spab_forward.1} parent=11 // pred_check_branch
        %269 = sbr.rel (%p267) target = $region24
      $region23: #{spab_forward.1} parent=11 // pred_region
        _
      $region24: #{spab_forward.1} parent=11 // pred_fallthru
        _
      // Predicated region
      $region25: #{spab_forward.1} parent=11 // pred_check
        %p270 = pneg %p126
      $region26: #{spab_forward.1} parent=11 // pred_check_branch
        %272 = sbr.rel (%p270) target = $region28
      $region27: #{spab_forward.1} parent=11 // pred_region
        _
      $region28: #{spab_forward.1} parent=11 // pred_fallthru
        _
      // Predicated region
      $region29: #{spab_forward.1} parent=11 // pred_check
        %p273 = pneg %p147
      $region30: #{spab_forward.1} parent=11 // pred_check_branch
        %275 = sbr.rel (%p273) target = $region32
      $region31: #{spab_forward.1} parent=11 // pred_region
        _
      $region32: #{spab_forward.1} parent=11 // pred_fallthru
        _
      // Predicated region
      $region33: #{spab_forward.1} parent=11 // pred_check
        %p276 = pneg %p168
      $region34: #{spab_forward.1} parent=11 // pred_check_branch
        %278 = sbr.rel (%p276) target = $region36
      $region35: #{spab_forward.1} parent=11 // pred_region
        _
      $region36: #{spab_forward.1} parent=11 // pred_fallthru
        _
    $region12: #{spab_forward.1} parent=5 // pred_fallthru
      _
    %p279 = scmp.lt.s32.totalorder %s16, 2
    // Predicated region
    $region37: #{spab_forward.1} parent=5 // pred_check
      %p280 = pneg %p279
    $region38: #{spab_forward.1} parent=5 // pred_check_branch
      %282 = sbr.rel (%p280) target = $region40
    $region39: #{spab_forward.1} parent=5 // pred_region
      // Predicated region
      $region41: #{spab_forward.1} parent=39 // pred_check
        %p283 = pneg %p36
      $region42: #{spab_forward.1} parent=39 // pred_check_branch
        %285 = sbr.rel (%p283) target = $region44
      $region43: #{spab_forward.1} parent=39 // pred_region
        %p286 = scmp.lt.s32.totalorder %s16, 1
        %s287 = scalar_select %p286, %s16, 1
        %s288 = smul.addr %s287, 54
        %s289 = smul.addr %s288, 8
        %s290 = scalar_lea.vmem %s0, %s289
      $region44: #{spab_forward.1} parent=39 // pred_fallthru
        _
    $region40: #{spab_forward.1} parent=5 // pred_fallthru
      _
    %p291 = scmp.le.s32.totalorder 1, %s16
    %p292 = scmp.lt.s32.totalorder %s16, 3
    %p293 = pnand %p291, %p292
    %p294 = pneg %p293
    // Predicated region
    $region45: #{spab_forward.1} parent=5 // pred_check
      _
    $region46: #{spab_forward.1} parent=5 // pred_check_branch
      %296 = sbr.rel (%p293) target = $region48
    $region47: #{spab_forward.1} parent=5 // pred_region
      %s297 = ssub.s32 %s16, 1
      %p298 = scmp.lt.s32.totalorder %s21, 1
      %s299 = scalar_select %p298, %s21, 1
      %s300 = smul.addr %s299, 54
      %s301 = smul.addr %s300, 8
      %s302 = scalar_lea.vmem %s0, %s301
      %p303 = pneg %p42
      %p304 = pneg %p39
      %p305 = pneg %p63
      %p306 = pneg %p60
      %p307 = pneg %p84
      %p308 = pneg %p81
      %p309 = pneg %p105
      %p310 = pneg %p102
      %p311 = pneg %p126
      %p312 = pneg %p123
      %p313 = pneg %p147
      %p314 = pneg %p144
      %p315 = pneg %p168
      %p316 = pneg %p165
      %p317 = pneg %p194
      %p318 = pneg %p191
      %p319 = scmp.lt.s32.totalorder %s21, 1
      %s320 = scalar_select %p319, %s21, 1
      %s321 = smul.addr %s320, 32
      %s322 = smul.addr %s321, 8
      %s323 = scalar_lea.vmem %s7, %s322
      %p324 = pneg %p220
      %p325 = pneg %p217
      %p326 = scmp.lt.s32.totalorder %s21, 1
      %s327 = scalar_select %p326, %s21, 1
      %s328 = smul.addr %s327, 32
      %s329 = smul.addr %s328, 8
      %s330 = scalar_lea.vmem %s8, %s329
      %p331 = pneg %p246
      %p332 = pneg %p243
      %p333 = scmp.lt.s32.totalorder %s21, 1
      %s334 = scalar_select %p333, %s21, 1
      %s335 = smul.addr %s334, 32
      %s336 = smul.addr %s335, 8
      %s337 = scalar_lea.vmem %s9, %s336
      %p338 = scmp.lt.s32.totalorder %s21, 1
      %s339 = scalar_select %p338, %s21, 1
      %s340 = smul.addr %s339, 54
      %s341 = smul.addr %s340, 8
      %s342 = scalar_lea.vmem %s0, %s341
      %p343 = scmp.lt.s32.totalorder %s21, 1
      %s344 = scalar_select %p343, %s21, 1
      %s345 = smul.addr %s344, 32
      %s346 = smul.addr %s345, 8
      %s347 = scalar_lea.vmem %s7, %s346
      %p348 = scmp.lt.s32.totalorder %s21, 1
      %s349 = scalar_select %p348, %s21, 1
      %s350 = smul.addr %s349, 32
      %s351 = smul.addr %s350, 8
      %s352 = scalar_lea.vmem %s8, %s351
      %p353 = scmp.lt.s32.totalorder %s21, 1
      %s354 = scalar_select %p353, %s21, 1
      %s355 = smul.addr %s354, 32
      %s356 = smul.addr %s355, 8
      %s357 = scalar_lea.vmem %s9, %s356
      %v359 = vld [vmem:[%s342] sm:$0xff]
      %v360 = vld [vmem:[%s342 + $0x8] sm:$0xff]
      %v361 = vld [vmem:[%s342 + $0x18] sm:$0xff]
      %v362 = vld [vmem:[%s342 + $0x20] sm:$0xff]
      %v363 = vld [vmem:[%s342 + $0x30] sm:$0xff]
      %v364 = vld [vmem:[%s342 + $0x38] sm:$0xff]
      %v365 = vld [vmem:[%s342 + $0x48] sm:$0xff]
      %v366 = vld [vmem:[%s342 + $0x50] sm:$0xff]
      %v367 = vld [vmem:[%s342 + $0x60] sm:$0xff]
      %v368 = vld [vmem:[%s342 + $0x68] sm:$0xff]
      %v369 = vld [vmem:[%s342 + $0x78] sm:$0xff]
      %v370 = vld [vmem:[%s342 + $0x80] sm:$0xff]
      %v371 = vld [vmem:[%s342 + $0x90] sm:$0xff]
      %v372 = vld [vmem:[%s342 + $0x98] sm:$0xff]
      %v373 = vld [vmem:[%s342 + $0xa8] sm:$0xff]
      %v374 = vld [vmem:[%s342 + $0xb0] sm:$0xff]
      %v375 = vld [vmem:[%s342 + $0xc0] sm:$0xff]
      %v376 = vld [vmem:[%s342 + $0xc8] sm:$0xff]
      %v377 = vld [vmem:[%s342 + $0xd8] sm:$0xff]
      %v378 = vld [vmem:[%s342 + $0xe0] sm:$0xff]
      %v379 = vld [vmem:[%s342 + $0xf0] sm:$0xff]
      %v380 = vld [vmem:[%s342 + $0xf8] sm:$0xff]
      %v381 = vld [vmem:[%s342 + $0x108] sm:$0xff]
      %v382 = vld [vmem:[%s342 + $0x110] sm:$0xff]
      %v383 = vld [vmem:[%s342 + $0x120] sm:$0xff]
      %v384 = vld [vmem:[%s342 + $0x128] sm:$0xff]
      %v385 = vld [vmem:[%s342 + $0x138] sm:$0xff]
      %v386 = vld [vmem:[%s342 + $0x140] sm:$0xff]
      %v387 = vld [vmem:[%s342 + $0x150] sm:$0xff]
      %v388 = vld [vmem:[%s342 + $0x158] sm:$0xff]
      %v389 = vld [vmem:[%s342 + $0x168] sm:$0xff]
      %v390 = vld [vmem:[%s342 + $0x170] sm:$0xff]
      %v391 = vld [vmem:[%s342 + $0x1] sm:$0xff]
      %v392 = vld [vmem:[%s342 + $0x9] sm:$0xff]
      %v393 = vld [vmem:[%s342 + $0x19] sm:$0xff]
      %v394 = vld [vmem:[%s342 + $0x21] sm:$0xff]
      %v395 = vld [vmem:[%s342 + $0x31] sm:$0xff]
      %v396 = vld [vmem:[%s342 + $0x39] sm:$0xff]
      %v397 = vld [vmem:[%s342 + $0x49] sm:$0xff]
      %v398 = vld [vmem:[%s342 + $0x51] sm:$0xff]
      %v399 = vld [vmem:[%s342 + $0x61] sm:$0xff]
      %v400 = vld [vmem:[%s342 + $0x69] sm:$0xff]
      %v401 = vld [vmem:[%s342 + $0x79] sm:$0xff]
      %v402 = vld [vmem:[%s342 + $0x81] sm:$0xff]
      %v403 = vld [vmem:[%s342 + $0x91] sm:$0xff]
      %v404 = vld [vmem:[%s342 + $0x99] sm:$0xff]
      %v405 = vld [vmem:[%s342 + $0xa9] sm:$0xff]
      %v406 = vld [vmem:[%s342 + $0xb1] sm:$0xff]
      %v407 = vld [vmem:[%s342 + $0xc1] sm:$0xff]
      %v408 = vld [vmem:[%s342 + $0xc9] sm:$0xff]
      %v409 = vld [vmem:[%s342 + $0xd9] sm:$0xff]
      %v410 = vld [vmem:[%s342 + $0xe1] sm:$0xff]
      %v411 = vld [vmem:[%s342 + $0xf1] sm:$0xff]
      %v412 = vld [vmem:[%s342 + $0xf9] sm:$0xff]
      %v413 = vld [vmem:[%s342 + $0x109] sm:$0xff]
      %v414 = vld [vmem:[%s342 + $0x111] sm:$0xff]
      %v415 = vld [vmem:[%s342 + $0x121] sm:$0xff]
      %v416 = vld [vmem:[%s342 + $0x129] sm:$0xff]
      %v417 = vld [vmem:[%s342 + $0x139] sm:$0xff]
      %v418 = vld [vmem:[%s342 + $0x141] sm:$0xff]
      %v419 = vld [vmem:[%s342 + $0x151] sm:$0xff]
      %v420 = vld [vmem:[%s342 + $0x159] sm:$0xff]
      %v421 = vld [vmem:[%s342 + $0x169] sm:$0xff]
      %v422 = vld [vmem:[%s342 + $0x171] sm:$0xff]
      %v423 = vld [vmem:[%s342 + $0x2] sm:$0xff]
      %v424 = vld [vmem:[%s342 + $0xa] sm:$0xff]
      %v425 = vld [vmem:[%s342 + $0x1a] sm:$0xff]
      %v426 = vld [vmem:[%s342 + $0x22] sm:$0xff]
      %v427 = vld [vmem:[%s342 + $0x32] sm:$0xff]
      %v428 = vld [vmem:[%s342 + $0x3a] sm:$0xff]
      %v429 = vld [vmem:[%s342 + $0x4a] sm:$0xff]
      %v430 = vld [vmem:[%s342 + $0x52] sm:$0xff]
      %v431 = vld [vmem:[%s342 + $0x62] sm:$0xff]
      %v432 = vld [vmem:[%s342 + $0x6a] sm:$0xff]
      %v433 = vld [vmem:[%s342 + $0x7a] sm:$0xff]
      %v434 = vld [vmem:[%s342 + $0x82] sm:$0xff]
      %v435 = vld [vmem:[%s342 + $0x92] sm:$0xff]
      %v436 = vld [vmem:[%s342 + $0x9a] sm:$0xff]
      %v437 = vld [vmem:[%s342 + $0xaa] sm:$0xff]
      %v438 = vld [vmem:[%s342 + $0xb2] sm:$0xff]
      %v439 = vld [vmem:[%s342 + $0xc2] sm:$0xff]
      %v440 = vld [vmem:[%s342 + $0xca] sm:$0xff]
      %v441 = vld [vmem:[%s342 + $0xda] sm:$0xff]
      %v442 = vld [vmem:[%s342 + $0xe2] sm:$0xff]
      %v443 = vld [vmem:[%s342 + $0xf2] sm:$0xff]
      %v444 = vld [vmem:[%s342 + $0xfa] sm:$0xff]
      %v445 = vld [vmem:[%s342 + $0x10a] sm:$0xff]
      %v446 = vld [vmem:[%s342 + $0x112] sm:$0xff]
      %v447 = vld [vmem:[%s342 + $0x122] sm:$0xff]
      %v448 = vld [vmem:[%s342 + $0x12a] sm:$0xff]
      %v449 = vld [vmem:[%s342 + $0x13a] sm:$0xff]
      %v450 = vld [vmem:[%s342 + $0x142] sm:$0xff]
      %v451 = vld [vmem:[%s342 + $0x152] sm:$0xff]
      %v452 = vld [vmem:[%s342 + $0x15a] sm:$0xff]
      %v453 = vld [vmem:[%s342 + $0x16a] sm:$0xff]
      %v454 = vld [vmem:[%s342 + $0x172] sm:$0xff]
      %s455 = scalar_lea.vmem %s342, 24
      %v456 = vld [vmem:[%s455] sm:$0xff]
      %v457 = vld [vmem:[%s455 + $0x8] sm:$0xff]
      %v458 = vld [vmem:[%s455 + $0x18] sm:$0xff]
      %v459 = vld [vmem:[%s455 + $0x20] sm:$0xff]
      %v460 = vld [vmem:[%s455 + $0x30] sm:$0xff]
      %v461 = vld [vmem:[%s455 + $0x38] sm:$0xff]
      %v462 = vld [vmem:[%s455 + $0x48] sm:$0xff]
      %v463 = vld [vmem:[%s455 + $0x50] sm:$0xff]
      %v464 = vld [vmem:[%s455 + $0x60] sm:$0xff]
      %v465 = vld [vmem:[%s455 + $0x68] sm:$0xff]
      %v466 = vld [vmem:[%s455 + $0x78] sm:$0xff]
      %v467 = vld [vmem:[%s455 + $0x80] sm:$0xff]
      %v468 = vld [vmem:[%s455 + $0x90] sm:$0xff]
      %v469 = vld [vmem:[%s455 + $0x98] sm:$0xff]
      %v470 = vld [vmem:[%s455 + $0xa8] sm:$0xff]
      %v471 = vld [vmem:[%s455 + $0xb0] sm:$0xff]
      %v472 = vld [vmem:[%s455 + $0xc0] sm:$0xff]
      %v473 = vld [vmem:[%s455 + $0xc8] sm:$0xff]
      %v474 = vld [vmem:[%s455 + $0xd8] sm:$0xff]
      %v475 = vld [vmem:[%s455 + $0xe0] sm:$0xff]
      %v476 = vld [vmem:[%s455 + $0xf0] sm:$0xff]
      %v477 = vld [vmem:[%s455 + $0xf8] sm:$0xff]
      %v478 = vld [vmem:[%s455 + $0x108] sm:$0xff]
      %v479 = vld [vmem:[%s455 + $0x110] sm:$0xff]
      %v480 = vld [vmem:[%s455 + $0x120] sm:$0xff]
      %v481 = vld [vmem:[%s455 + $0x128] sm:$0xff]
      %v482 = vld [vmem:[%s455 + $0x138] sm:$0xff]
      %v483 = vld [vmem:[%s455 + $0x140] sm:$0xff]
      %v484 = vld [vmem:[%s455 + $0x150] sm:$0xff]
      %v485 = vld [vmem:[%s455 + $0x158] sm:$0xff]
      %v486 = vld [vmem:[%s455 + $0x168] sm:$0xff]
      %v487 = vld [vmem:[%s455 + $0x170] sm:$0xff]
      %v488 = vld [vmem:[%s455 + $0x1] sm:$0xff]
      %v489 = vld [vmem:[%s455 + $0x9] sm:$0xff]
      %v490 = vld [vmem:[%s455 + $0x19] sm:$0xff]
      %v491 = vld [vmem:[%s455 + $0x21] sm:$0xff]
      %v492 = vld [vmem:[%s455 + $0x31] sm:$0xff]
      %v493 = vld [vmem:[%s455 + $0x39] sm:$0xff]
      %v494 = vld [vmem:[%s455 + $0x49] sm:$0xff]
      %v495 = vld [vmem:[%s455 + $0x51] sm:$0xff]
      %v496 = vld [vmem:[%s455 + $0x61] sm:$0xff]
      %v497 = vld [vmem:[%s455 + $0x69] sm:$0xff]
      %v498 = vld [vmem:[%s455 + $0x79] sm:$0xff]
      %v499 = vld [vmem:[%s455 + $0x81] sm:$0xff]
      %v500 = vld [vmem:[%s455 + $0x91] sm:$0xff]
      %v501 = vld [vmem:[%s455 + $0x99] sm:$0xff]
      %v502 = vld [vmem:[%s455 + $0xa9] sm:$0xff]
      %v503 = vld [vmem:[%s455 + $0xb1] sm:$0xff]
      %v504 = vld [vmem:[%s455 + $0xc1] sm:$0xff]
      %v505 = vld [vmem:[%s455 + $0xc9] sm:$0xff]
      %v506 = vld [vmem:[%s455 + $0xd9] sm:$0xff]
      %v507 = vld [vmem:[%s455 + $0xe1] sm:$0xff]
      %v508 = vld [vmem:[%s455 + $0xf1] sm:$0xff]
      %v509 = vld [vmem:[%s455 + $0xf9] sm:$0xff]
      %v510 = vld [vmem:[%s455 + $0x109] sm:$0xff]
      %v511 = vld [vmem:[%s455 + $0x111] sm:$0xff]
      %v512 = vld [vmem:[%s455 + $0x121] sm:$0xff]
      %v513 = vld [vmem:[%s455 + $0x129] sm:$0xff]
      %v514 = vld [vmem:[%s455 + $0x139] sm:$0xff]
      %v515 = vld [vmem:[%s455 + $0x141] sm:$0xff]
      %v516 = vld [vmem:[%s455 + $0x151] sm:$0xff]
      %v517 = vld [vmem:[%s455 + $0x159] sm:$0xff]
      %v518 = vld [vmem:[%s455 + $0x169] sm:$0xff]
      %v519 = vld [vmem:[%s455 + $0x171] sm:$0xff]
      %v520 = vld [vmem:[%s455 + $0x2] sm:$0xff]
      %v521 = vld [vmem:[%s455 + $0xa] sm:$0xff]
      %v522 = vld [vmem:[%s455 + $0x1a] sm:$0xff]
      %v523 = vld [vmem:[%s455 + $0x22] sm:$0xff]
      %v524 = vld [vmem:[%s455 + $0x32] sm:$0xff]
      %v525 = vld [vmem:[%s455 + $0x3a] sm:$0xff]
      %v526 = vld [vmem:[%s455 + $0x4a] sm:$0xff]
      %v527 = vld [vmem:[%s455 + $0x52] sm:$0xff]
      %v528 = vld [vmem:[%s455 + $0x62] sm:$0xff]
      %v529 = vld [vmem:[%s455 + $0x6a] sm:$0xff]
      %v530 = vld [vmem:[%s455 + $0x7a] sm:$0xff]
      %v531 = vld [vmem:[%s455 + $0x82] sm:$0xff]
      %v532 = vld [vmem:[%s455 + $0x92] sm:$0xff]
      %v533 = vld [vmem:[%s455 + $0x9a] sm:$0xff]
      %v534 = vld [vmem:[%s455 + $0xaa] sm:$0xff]
      %v535 = vld [vmem:[%s455 + $0xb2] sm:$0xff]
      %v536 = vld [vmem:[%s455 + $0xc2] sm:$0xff]
      %v537 = vld [vmem:[%s455 + $0xca] sm:$0xff]
      %v538 = vld [vmem:[%s455 + $0xda] sm:$0xff]
      %v539 = vld [vmem:[%s455 + $0xe2] sm:$0xff]
      %v540 = vld [vmem:[%s455 + $0xf2] sm:$0xff]
      %v541 = vld [vmem:[%s455 + $0xfa] sm:$0xff]
      %v542 = vld [vmem:[%s455 + $0x10a] sm:$0xff]
      %v543 = vld [vmem:[%s455 + $0x112] sm:$0xff]
      %v544 = vld [vmem:[%s455 + $0x122] sm:$0xff]
      %v545 = vld [vmem:[%s455 + $0x12a] sm:$0xff]
      %v546 = vld [vmem:[%s455 + $0x13a] sm:$0xff]
      %v547 = vld [vmem:[%s455 + $0x142] sm:$0xff]
      %v548 = vld [vmem:[%s455 + $0x152] sm:$0xff]
      %v549 = vld [vmem:[%s455 + $0x15a] sm:$0xff]
      %v550 = vld [vmem:[%s455 + $0x16a] sm:$0xff]
      %v551 = vld [vmem:[%s455 + $0x172] sm:$0xff]
      %s552 = scalar_lea.vmem %s342, 48
      %v553 = vld [vmem:[%s552] sm:$0xff]
      %v554 = vld [vmem:[%s552 + $0x8] sm:$0xff]
      %v555 = vld [vmem:[%s552 + $0x18] sm:$0xff]
      %v556 = vld [vmem:[%s552 + $0x20] sm:$0xff]
      %v557 = vld [vmem:[%s552 + $0x30] sm:$0xff]
      %v558 = vld [vmem:[%s552 + $0x38] sm:$0xff]
      %v559 = vld [vmem:[%s552 + $0x48] sm:$0xff]
      %v560 = vld [vmem:[%s552 + $0x50] sm:$0xff]
      %v561 = vld [vmem:[%s552 + $0x60] sm:$0xff]
      %v562 = vld [vmem:[%s552 + $0x68] sm:$0xff]
      %v563 = vld [vmem:[%s552 + $0x78] sm:$0xff]
      %v564 = vld [vmem:[%s552 + $0x80] sm:$0xff]
      %v565 = vld [vmem:[%s552 + $0x90] sm:$0xff]
      %v566 = vld [vmem:[%s552 + $0x98] sm:$0xff]
      %v567 = vld [vmem:[%s552 + $0xa8] sm:$0xff]
      %v568 = vld [vmem:[%s552 + $0xb0] sm:$0xff]
      %v569 = vld [vmem:[%s552 + $0xc0] sm:$0xff]
      %v570 = vld [vmem:[%s552 + $0xc8] sm:$0xff]
      %v571 = vld [vmem:[%s552 + $0xd8] sm:$0xff]
      %v572 = vld [vmem:[%s552 + $0xe0] sm:$0xff]
      %v573 = vld [vmem:[%s552 + $0xf0] sm:$0xff]
      %v574 = vld [vmem:[%s552 + $0xf8] sm:$0xff]
      %v575 = vld [vmem:[%s552 + $0x108] sm:$0xff]
      %v576 = vld [vmem:[%s552 + $0x110] sm:$0xff]
      %v577 = vld [vmem:[%s552 + $0x120] sm:$0xff]
      %v578 = vld [vmem:[%s552 + $0x128] sm:$0xff]
      %v579 = vld [vmem:[%s552 + $0x138] sm:$0xff]
      %v580 = vld [vmem:[%s552 + $0x140] sm:$0xff]
      %v581 = vld [vmem:[%s552 + $0x150] sm:$0xff]
      %v582 = vld [vmem:[%s552 + $0x158] sm:$0xff]
      %v583 = vld [vmem:[%s552 + $0x168] sm:$0xff]
      %v584 = vld [vmem:[%s552 + $0x170] sm:$0xff]
      %v585 = vld [vmem:[%s552 + $0x1] sm:$0xff]
      %v586 = vld [vmem:[%s552 + $0x9] sm:$0xff]
      %v587 = vld [vmem:[%s552 + $0x19] sm:$0xff]
      %v588 = vld [vmem:[%s552 + $0x21] sm:$0xff]
      %v589 = vld [vmem:[%s552 + $0x31] sm:$0xff]
      %v590 = vld [vmem:[%s552 + $0x39] sm:$0xff]
      %v591 = vld [vmem:[%s552 + $0x49] sm:$0xff]
      %v592 = vld [vmem:[%s552 + $0x51] sm:$0xff]
      %v593 = vld [vmem:[%s552 + $0x61] sm:$0xff]
      %v594 = vld [vmem:[%s552 + $0x69] sm:$0xff]
      %v595 = vld [vmem:[%s552 + $0x79] sm:$0xff]
      %v596 = vld [vmem:[%s552 + $0x81] sm:$0xff]
      %v597 = vld [vmem:[%s552 + $0x91] sm:$0xff]
      %v598 = vld [vmem:[%s552 + $0x99] sm:$0xff]
      %v599 = vld [vmem:[%s552 + $0xa9] sm:$0xff]
      %v600 = vld [vmem:[%s552 + $0xb1] sm:$0xff]
      %v601 = vld [vmem:[%s552 + $0xc1] sm:$0xff]
      %v602 = vld [vmem:[%s552 + $0xc9] sm:$0xff]
      %v603 = vld [vmem:[%s552 + $0xd9] sm:$0xff]
      %v604 = vld [vmem:[%s552 + $0xe1] sm:$0xff]
      %v605 = vld [vmem:[%s552 + $0xf1] sm:$0xff]
      %v606 = vld [vmem:[%s552 + $0xf9] sm:$0xff]
      %v607 = vld [vmem:[%s552 + $0x109] sm:$0xff]
      %v608 = vld [vmem:[%s552 + $0x111] sm:$0xff]
      %v609 = vld [vmem:[%s552 + $0x121] sm:$0xff]
      %v610 = vld [vmem:[%s552 + $0x129] sm:$0xff]
      %v611 = vld [vmem:[%s552 + $0x139] sm:$0xff]
      %v612 = vld [vmem:[%s552 + $0x141] sm:$0xff]
      %v613 = vld [vmem:[%s552 + $0x151] sm:$0xff]
      %v614 = vld [vmem:[%s552 + $0x159] sm:$0xff]
      %v615 = vld [vmem:[%s552 + $0x169] sm:$0xff]
      %v616 = vld [vmem:[%s552 + $0x171] sm:$0xff]
      %v617 = vld [vmem:[%s552 + $0x2] sm:$0xff]
      %v618 = vld [vmem:[%s552 + $0xa] sm:$0xff]
      %v619 = vld [vmem:[%s552 + $0x1a] sm:$0xff]
      %v620 = vld [vmem:[%s552 + $0x22] sm:$0xff]
      %v621 = vld [vmem:[%s552 + $0x32] sm:$0xff]
      %v622 = vld [vmem:[%s552 + $0x3a] sm:$0xff]
      %v623 = vld [vmem:[%s552 + $0x4a] sm:$0xff]
      %v624 = vld [vmem:[%s552 + $0x52] sm:$0xff]
      %v625 = vld [vmem:[%s552 + $0x62] sm:$0xff]
      %v626 = vld [vmem:[%s552 + $0x6a] sm:$0xff]
      %v627 = vld [vmem:[%s552 + $0x7a] sm:$0xff]
      %v628 = vld [vmem:[%s552 + $0x82] sm:$0xff]
      %v629 = vld [vmem:[%s552 + $0x92] sm:$0xff]
      %v630 = vld [vmem:[%s552 + $0x9a] sm:$0xff]
      %v631 = vld [vmem:[%s552 + $0xaa] sm:$0xff]
      %v632 = vld [vmem:[%s552 + $0xb2] sm:$0xff]
      %v633 = vld [vmem:[%s552 + $0xc2] sm:$0xff]
      %v634 = vld [vmem:[%s552 + $0xca] sm:$0xff]
      %v635 = vld [vmem:[%s552 + $0xda] sm:$0xff]
      %v636 = vld [vmem:[%s552 + $0xe2] sm:$0xff]
      %v637 = vld [vmem:[%s552 + $0xf2] sm:$0xff]
      %v638 = vld [vmem:[%s552 + $0xfa] sm:$0xff]
      %v639 = vld [vmem:[%s552 + $0x10a] sm:$0xff]
      %v640 = vld [vmem:[%s552 + $0x112] sm:$0xff]
      %v641 = vld [vmem:[%s552 + $0x122] sm:$0xff]
      %v642 = vld [vmem:[%s552 + $0x12a] sm:$0xff]
      %v643 = vld [vmem:[%s552 + $0x13a] sm:$0xff]
      %v644 = vld [vmem:[%s552 + $0x142] sm:$0xff]
      %v645 = vld [vmem:[%s552 + $0x152] sm:$0xff]
      %v646 = vld [vmem:[%s552 + $0x15a] sm:$0xff]
      %v647 = vld [vmem:[%s552 + $0x16a] sm:$0xff]
      %v648 = vld [vmem:[%s552 + $0x172] sm:$0xff]
      %681 = vrot.lane.b32.xlu0 %v391, 16
      %v682 = vpop.permute.xlu0 %681
      %683 = vrot.lane.b32.xlu0 %v392, 16
      %v684 = vpop.permute.xlu0 %683
      %685 = vrot.lane.b32.xlu0 %v393, 16
      %v686 = vpop.permute.xlu0 %685
      %687 = vrot.lane.b32.xlu0 %v394, 16
      %v688 = vpop.permute.xlu0 %687
      %689 = vrot.lane.b32.xlu0 %v395, 16
      %v690 = vpop.permute.xlu0 %689
      %691 = vrot.lane.b32.xlu0 %v396, 16
      %v692 = vpop.permute.xlu0 %691
      %693 = vrot.lane.b32.xlu0 %v397, 16
      %v694 = vpop.permute.xlu0 %693
      %695 = vrot.lane.b32.xlu0 %v398, 16
      %v696 = vpop.permute.xlu0 %695
      %697 = vrot.lane.b32.xlu0 %v399, 16
      %v698 = vpop.permute.xlu0 %697
      %699 = vrot.lane.b32.xlu0 %v400, 16
      %v700 = vpop.permute.xlu0 %699
      %701 = vrot.lane.b32.xlu0 %v401, 16
      %v702 = vpop.permute.xlu0 %701
      %703 = vrot.lane.b32.xlu0 %v402, 16
      %v704 = vpop.permute.xlu0 %703
      %705 = vrot.lane.b32.xlu0 %v403, 16
      %v706 = vpop.permute.xlu0 %705
      %707 = vrot.lane.b32.xlu0 %v404, 16
      %v708 = vpop.permute.xlu0 %707
      %709 = vrot.lane.b32.xlu0 %v405, 16
      %v710 = vpop.permute.xlu0 %709
      %711 = vrot.lane.b32.xlu0 %v406, 16
      %v712 = vpop.permute.xlu0 %711
      %713 = vrot.lane.b32.xlu0 %v407, 16
      %v714 = vpop.permute.xlu0 %713
      %715 = vrot.lane.b32.xlu0 %v408, 16
      %v716 = vpop.permute.xlu0 %715
      %717 = vrot.lane.b32.xlu0 %v409, 16
      %v718 = vpop.permute.xlu0 %717
      %719 = vrot.lane.b32.xlu0 %v410, 16
      %v720 = vpop.permute.xlu0 %719
      %721 = vrot.lane.b32.xlu0 %v411, 16
      %v722 = vpop.permute.xlu0 %721
      %723 = vrot.lane.b32.xlu0 %v412, 16
      %v724 = vpop.permute.xlu0 %723
      %725 = vrot.lane.b32.xlu0 %v413, 16
      %v726 = vpop.permute.xlu0 %725
      %727 = vrot.lane.b32.xlu0 %v414, 16
      %v728 = vpop.permute.xlu0 %727
      %729 = vrot.lane.b32.xlu0 %v415, 16
      %v730 = vpop.permute.xlu0 %729
      %731 = vrot.lane.b32.xlu0 %v416, 16
      %v732 = vpop.permute.xlu0 %731
      %733 = vrot.lane.b32.xlu0 %v417, 16
      %v734 = vpop.permute.xlu0 %733
      %735 = vrot.lane.b32.xlu0 %v418, 16
      %v736 = vpop.permute.xlu0 %735
      %737 = vrot.lane.b32.xlu0 %v419, 16
      %v738 = vpop.permute.xlu0 %737
      %739 = vrot.lane.b32.xlu0 %v420, 16
      %v740 = vpop.permute.xlu0 %739
      %741 = vrot.lane.b32.xlu0 %v421, 16
      %v742 = vpop.permute.xlu0 %741
      %743 = vrot.lane.b32.xlu0 %v422, 16
      %v744 = vpop.permute.xlu0 %743
      %809 = vrot.lane.b32.xlu0 %v423, 32
      %v810 = vpop.permute.xlu0 %809
      %811 = vrot.lane.b32.xlu0 %v424, 32
      %v812 = vpop.permute.xlu0 %811
      %813 = vrot.lane.b32.xlu0 %v425, 32
      %v814 = vpop.permute.xlu0 %813
      %815 = vrot.lane.b32.xlu0 %v426, 32
      %v816 = vpop.permute.xlu0 %815
      %817 = vrot.lane.b32.xlu0 %v427, 32
      %v818 = vpop.permute.xlu0 %817
      %819 = vrot.lane.b32.xlu0 %v428, 32
      %v820 = vpop.permute.xlu0 %819
      %821 = vrot.lane.b32.xlu0 %v429, 32
      %v822 = vpop.permute.xlu0 %821
      %823 = vrot.lane.b32.xlu0 %v430, 32
      %v824 = vpop.permute.xlu0 %823
      %825 = vrot.lane.b32.xlu0 %v431, 32
      %v826 = vpop.permute.xlu0 %825
      %827 = vrot.lane.b32.xlu0 %v432, 32
      %v828 = vpop.permute.xlu0 %827
      %829 = vrot.lane.b32.xlu0 %v433, 32
      %v830 = vpop.permute.xlu0 %829
      %831 = vrot.lane.b32.xlu0 %v434, 32
      %v832 = vpop.permute.xlu0 %831
      %833 = vrot.lane.b32.xlu0 %v435, 32
      %v834 = vpop.permute.xlu0 %833
      %835 = vrot.lane.b32.xlu0 %v436, 32
      %v836 = vpop.permute.xlu0 %835
      %837 = vrot.lane.b32.xlu0 %v437, 32
      %v838 = vpop.permute.xlu0 %837
      %839 = vrot.lane.b32.xlu0 %v438, 32
      %v840 = vpop.permute.xlu0 %839
      %841 = vrot.lane.b32.xlu0 %v439, 32
      %v842 = vpop.permute.xlu0 %841
      %843 = vrot.lane.b32.xlu0 %v440, 32
      %v844 = vpop.permute.xlu0 %843
      %845 = vrot.lane.b32.xlu0 %v441, 32
      %v846 = vpop.permute.xlu0 %845
      %847 = vrot.lane.b32.xlu0 %v442, 32
      %v848 = vpop.permute.xlu0 %847
      %849 = vrot.lane.b32.xlu0 %v443, 32
      %v850 = vpop.permute.xlu0 %849
      %851 = vrot.lane.b32.xlu0 %v444, 32
      %v852 = vpop.permute.xlu0 %851
      %853 = vrot.lane.b32.xlu0 %v445, 32
      %v854 = vpop.permute.xlu0 %853
      %855 = vrot.lane.b32.xlu0 %v446, 32
      %v856 = vpop.permute.xlu0 %855
      %857 = vrot.lane.b32.xlu0 %v447, 32
      %v858 = vpop.permute.xlu0 %857
      %859 = vrot.lane.b32.xlu0 %v448, 32
      %v860 = vpop.permute.xlu0 %859
      %861 = vrot.lane.b32.xlu0 %v449, 32
      %v862 = vpop.permute.xlu0 %861
      %863 = vrot.lane.b32.xlu0 %v450, 32
      %v864 = vpop.permute.xlu0 %863
      %865 = vrot.lane.b32.xlu0 %v451, 32
      %v866 = vpop.permute.xlu0 %865
      %867 = vrot.lane.b32.xlu0 %v452, 32
      %v868 = vpop.permute.xlu0 %867
      %869 = vrot.lane.b32.xlu0 %v453, 32
      %v870 = vpop.permute.xlu0 %869
      %871 = vrot.lane.b32.xlu0 %v454, 32
      %v872 = vpop.permute.xlu0 %871
      %937 = vrot.lane.b32.xlu0 %v456, 48
      %v938 = vpop.permute.xlu0 %937
      %939 = vrot.lane.b32.xlu0 %v457, 48
      %v940 = vpop.permute.xlu0 %939
      %941 = vrot.lane.b32.xlu0 %v458, 48
      %v942 = vpop.permute.xlu0 %941
      %943 = vrot.lane.b32.xlu0 %v459, 48
      %v944 = vpop.permute.xlu0 %943
      %945 = vrot.lane.b32.xlu0 %v460, 48
      %v946 = vpop.permute.xlu0 %945
      %947 = vrot.lane.b32.xlu0 %v461, 48
      %v948 = vpop.permute.xlu0 %947
      %949 = vrot.lane.b32.xlu0 %v462, 48
      %v950 = vpop.permute.xlu0 %949
      %951 = vrot.lane.b32.xlu0 %v463, 48
      %v952 = vpop.permute.xlu0 %951
      %953 = vrot.lane.b32.xlu0 %v464, 48
      %v954 = vpop.permute.xlu0 %953
      %955 = vrot.lane.b32.xlu0 %v465, 48
      %v956 = vpop.permute.xlu0 %955
      %957 = vrot.lane.b32.xlu0 %v466, 48
      %v958 = vpop.permute.xlu0 %957
      %959 = vrot.lane.b32.xlu0 %v467, 48
      %v960 = vpop.permute.xlu0 %959
      %961 = vrot.lane.b32.xlu0 %v468, 48
      %v962 = vpop.permute.xlu0 %961
      %963 = vrot.lane.b32.xlu0 %v469, 48
      %v964 = vpop.permute.xlu0 %963
      %965 = vrot.lane.b32.xlu0 %v470, 48
      %v966 = vpop.permute.xlu0 %965
      %967 = vrot.lane.b32.xlu0 %v471, 48
      %v968 = vpop.permute.xlu0 %967
      %969 = vrot.lane.b32.xlu0 %v472, 48
      %v970 = vpop.permute.xlu0 %969
      %971 = vrot.lane.b32.xlu0 %v473, 48
      %v972 = vpop.permute.xlu0 %971
      %973 = vrot.lane.b32.xlu0 %v474, 48
      %v974 = vpop.permute.xlu0 %973
      %975 = vrot.lane.b32.xlu0 %v475, 48
      %v976 = vpop.permute.xlu0 %975
      %977 = vrot.lane.b32.xlu0 %v476, 48
      %v978 = vpop.permute.xlu0 %977
      %979 = vrot.lane.b32.xlu0 %v477, 48
      %v980 = vpop.permute.xlu0 %979
      %981 = vrot.lane.b32.xlu0 %v478, 48
      %v982 = vpop.permute.xlu0 %981
      %983 = vrot.lane.b32.xlu0 %v479, 48
      %v984 = vpop.permute.xlu0 %983
      %985 = vrot.lane.b32.xlu0 %v480, 48
      %v986 = vpop.permute.xlu0 %985
      %987 = vrot.lane.b32.xlu0 %v481, 48
      %v988 = vpop.permute.xlu0 %987
      %989 = vrot.lane.b32.xlu0 %v482, 48
      %v990 = vpop.permute.xlu0 %989
      %991 = vrot.lane.b32.xlu0 %v483, 48
      %v992 = vpop.permute.xlu0 %991
      %993 = vrot.lane.b32.xlu0 %v484, 48
      %v994 = vpop.permute.xlu0 %993
      %995 = vrot.lane.b32.xlu0 %v485, 48
      %v996 = vpop.permute.xlu0 %995
      %997 = vrot.lane.b32.xlu0 %v486, 48
      %v998 = vpop.permute.xlu0 %997
      %999 = vrot.lane.b32.xlu0 %v487, 48
      %v1000 = vpop.permute.xlu0 %999
      %1065 = vrot.lane.b32.xlu0 %v488, 64
      %v1066 = vpop.permute.xlu0 %1065
      %1067 = vrot.lane.b32.xlu0 %v489, 64
      %v1068 = vpop.permute.xlu0 %1067
      %1069 = vrot.lane.b32.xlu0 %v490, 64
      %v1070 = vpop.permute.xlu0 %1069
      %1071 = vrot.lane.b32.xlu0 %v491, 64
      %v1072 = vpop.permute.xlu0 %1071
      %1073 = vrot.lane.b32.xlu0 %v492, 64
      %v1074 = vpop.permute.xlu0 %1073
      %1075 = vrot.lane.b32.xlu0 %v493, 64
      %v1076 = vpop.permute.xlu0 %1075
      %1077 = vrot.lane.b32.xlu0 %v494, 64
      %v1078 = vpop.permute.xlu0 %1077
      %1079 = vrot.lane.b32.xlu0 %v495, 64
      %v1080 = vpop.permute.xlu0 %1079
      %1081 = vrot.lane.b32.xlu0 %v496, 64
      %v1082 = vpop.permute.xlu0 %1081
      %1083 = vrot.lane.b32.xlu0 %v497, 64
      %v1084 = vpop.permute.xlu0 %1083
      %1085 = vrot.lane.b32.xlu0 %v498, 64
      %v1086 = vpop.permute.xlu0 %1085
      %1087 = vrot.lane.b32.xlu0 %v499, 64
      %v1088 = vpop.permute.xlu0 %1087
      %1089 = vrot.lane.b32.xlu0 %v500, 64
      %v1090 = vpop.permute.xlu0 %1089
      %1091 = vrot.lane.b32.xlu0 %v501, 64
      %v1092 = vpop.permute.xlu0 %1091
      %1093 = vrot.lane.b32.xlu0 %v502, 64
      %v1094 = vpop.permute.xlu0 %1093
      %1095 = vrot.lane.b32.xlu0 %v503, 64
      %v1096 = vpop.permute.xlu0 %1095
      %1097 = vrot.lane.b32.xlu0 %v504, 64
      %v1098 = vpop.permute.xlu0 %1097
      %1099 = vrot.lane.b32.xlu0 %v505, 64
      %v1100 = vpop.permute.xlu0 %1099
      %1101 = vrot.lane.b32.xlu0 %v506, 64
      %v1102 = vpop.permute.xlu0 %1101
      %1103 = vrot.lane.b32.xlu0 %v507, 64
      %v1104 = vpop.permute.xlu0 %1103
      %1105 = vrot.lane.b32.xlu0 %v508, 64
      %v1106 = vpop.permute.xlu0 %1105
      %1107 = vrot.lane.b32.xlu0 %v509, 64
      %v1108 = vpop.permute.xlu0 %1107
      %1109 = vrot.lane.b32.xlu0 %v510, 64
      %v1110 = vpop.permute.xlu0 %1109
      %1111 = vrot.lane.b32.xlu0 %v511, 64
      %v1112 = vpop.permute.xlu0 %1111
      %1113 = vrot.lane.b32.xlu0 %v512, 64
      %v1114 = vpop.permute.xlu0 %1113
      %1115 = vrot.lane.b32.xlu0 %v513, 64
      %v1116 = vpop.permute.xlu0 %1115
      %1117 = vrot.lane.b32.xlu0 %v514, 64
      %v1118 = vpop.permute.xlu0 %1117
      %1119 = vrot.lane.b32.xlu0 %v515, 64
      %v1120 = vpop.permute.xlu0 %1119
      %1121 = vrot.lane.b32.xlu0 %v516, 64
      %v1122 = vpop.permute.xlu0 %1121
      %1123 = vrot.lane.b32.xlu0 %v517, 64
      %v1124 = vpop.permute.xlu0 %1123
      %1125 = vrot.lane.b32.xlu0 %v518, 64
      %v1126 = vpop.permute.xlu0 %1125
      %1127 = vrot.lane.b32.xlu0 %v519, 64
      %v1128 = vpop.permute.xlu0 %1127
      %1193 = vrot.lane.b32.xlu0 %v520, 80
      %v1194 = vpop.permute.xlu0 %1193
      %1195 = vrot.lane.b32.xlu0 %v521, 80
      %v1196 = vpop.permute.xlu0 %1195
      %1197 = vrot.lane.b32.xlu0 %v522, 80
      %v1198 = vpop.permute.xlu0 %1197
      %1199 = vrot.lane.b32.xlu0 %v523, 80
      %v1200 = vpop.permute.xlu0 %1199
      %1201 = vrot.lane.b32.xlu0 %v524, 80
      %v1202 = vpop.permute.xlu0 %1201
      %1203 = vrot.lane.b32.xlu0 %v525, 80
      %v1204 = vpop.permute.xlu0 %1203
      %1205 = vrot.lane.b32.xlu0 %v526, 80
      %v1206 = vpop.permute.xlu0 %1205
      %1207 = vrot.lane.b32.xlu0 %v527, 80
      %v1208 = vpop.permute.xlu0 %1207
      %1209 = vrot.lane.b32.xlu0 %v528, 80
      %v1210 = vpop.permute.xlu0 %1209
      %1211 = vrot.lane.b32.xlu0 %v529, 80
      %v1212 = vpop.permute.xlu0 %1211
      %1213 = vrot.lane.b32.xlu0 %v530, 80
      %v1214 = vpop.permute.xlu0 %1213
      %1215 = vrot.lane.b32.xlu0 %v531, 80
      %v1216 = vpop.permute.xlu0 %1215
      %1217 = vrot.lane.b32.xlu0 %v532, 80
      %v1218 = vpop.permute.xlu0 %1217
      %1219 = vrot.lane.b32.xlu0 %v533, 80
      %v1220 = vpop.permute.xlu0 %1219
      %1221 = vrot.lane.b32.xlu0 %v534, 80
      %v1222 = vpop.permute.xlu0 %1221
      %1223 = vrot.lane.b32.xlu0 %v535, 80
      %v1224 = vpop.permute.xlu0 %1223
      %1225 = vrot.lane.b32.xlu0 %v536, 80
      %v1226 = vpop.permute.xlu0 %1225
      %1227 = vrot.lane.b32.xlu0 %v537, 80
      %v1228 = vpop.permute.xlu0 %1227
      %1229 = vrot.lane.b32.xlu0 %v538, 80
      %v1230 = vpop.permute.xlu0 %1229
      %1231 = vrot.lane.b32.xlu0 %v539, 80
      %v1232 = vpop.permute.xlu0 %1231
      %1233 = vrot.lane.b32.xlu0 %v540, 80
      %v1234 = vpop.permute.xlu0 %1233
      %1235 = vrot.lane.b32.xlu0 %v541, 80
      %v1236 = vpop.permute.xlu0 %1235
      %1237 = vrot.lane.b32.xlu0 %v542, 80
      %v1238 = vpop.permute.xlu0 %1237
      %1239 = vrot.lane.b32.xlu0 %v543, 80
      %v1240 = vpop.permute.xlu0 %1239
      %1241 = vrot.lane.b32.xlu0 %v544, 80
      %v1242 = vpop.permute.xlu0 %1241
      %1243 = vrot.lane.b32.xlu0 %v545, 80
      %v1244 = vpop.permute.xlu0 %1243
      %1245 = vrot.lane.b32.xlu0 %v546, 80
      %v1246 = vpop.permute.xlu0 %1245
      %1247 = vrot.lane.b32.xlu0 %v547, 80
      %v1248 = vpop.permute.xlu0 %1247
      %1249 = vrot.lane.b32.xlu0 %v548, 80
      %v1250 = vpop.permute.xlu0 %1249
      %1251 = vrot.lane.b32.xlu0 %v549, 80
      %v1252 = vpop.permute.xlu0 %1251
      %1253 = vrot.lane.b32.xlu0 %v550, 80
      %v1254 = vpop.permute.xlu0 %1253
      %1255 = vrot.lane.b32.xlu0 %v551, 80
      %v1256 = vpop.permute.xlu0 %1255
      %1321 = vrot.lane.b32.xlu0 %v553, 96
      %v1322 = vpop.permute.xlu0 %1321
      %1323 = vrot.lane.b32.xlu0 %v554, 96
      %v1324 = vpop.permute.xlu0 %1323
      %1325 = vrot.lane.b32.xlu0 %v555, 96
      %v1326 = vpop.permute.xlu0 %1325
      %1327 = vrot.lane.b32.xlu0 %v556, 96
      %v1328 = vpop.permute.xlu0 %1327
      %1329 = vrot.lane.b32.xlu0 %v557, 96
      %v1330 = vpop.permute.xlu0 %1329
      %1331 = vrot.lane.b32.xlu0 %v558, 96
      %v1332 = vpop.permute.xlu0 %1331
      %1333 = vrot.lane.b32.xlu0 %v559, 96
      %v1334 = vpop.permute.xlu0 %1333
      %1335 = vrot.lane.b32.xlu0 %v560, 96
      %v1336 = vpop.permute.xlu0 %1335
      %1337 = vrot.lane.b32.xlu0 %v561, 96
      %v1338 = vpop.permute.xlu0 %1337
      %1339 = vrot.lane.b32.xlu0 %v562, 96
      %v1340 = vpop.permute.xlu0 %1339
      %1341 = vrot.lane.b32.xlu0 %v563, 96
      %v1342 = vpop.permute.xlu0 %1341
      %1343 = vrot.lane.b32.xlu0 %v564, 96
      %v1344 = vpop.permute.xlu0 %1343
      %1345 = vrot.lane.b32.xlu0 %v565, 96
      %v1346 = vpop.permute.xlu0 %1345
      %1347 = vrot.lane.b32.xlu0 %v566, 96
      %v1348 = vpop.permute.xlu0 %1347
      %1349 = vrot.lane.b32.xlu0 %v567, 96
      %v1350 = vpop.permute.xlu0 %1349
      %1351 = vrot.lane.b32.xlu0 %v568, 96
      %v1352 = vpop.permute.xlu0 %1351
      %1353 = vrot.lane.b32.xlu0 %v569, 96
      %v1354 = vpop.permute.xlu0 %1353
      %1355 = vrot.lane.b32.xlu0 %v570, 96
      %v1356 = vpop.permute.xlu0 %1355
      %1357 = vrot.lane.b32.xlu0 %v571, 96
      %v1358 = vpop.permute.xlu0 %1357
      %1359 = vrot.lane.b32.xlu0 %v572, 96
      %v1360 = vpop.permute.xlu0 %1359
      %1361 = vrot.lane.b32.xlu0 %v573, 96
      %v1362 = vpop.permute.xlu0 %1361
      %1363 = vrot.lane.b32.xlu0 %v574, 96
      %v1364 = vpop.permute.xlu0 %1363
      %1365 = vrot.lane.b32.xlu0 %v575, 96
      %v1366 = vpop.permute.xlu0 %1365
      %1367 = vrot.lane.b32.xlu0 %v576, 96
      %v1368 = vpop.permute.xlu0 %1367
      %1369 = vrot.lane.b32.xlu0 %v577, 96
      %v1370 = vpop.permute.xlu0 %1369
      %1371 = vrot.lane.b32.xlu0 %v578, 96
      %v1372 = vpop.permute.xlu0 %1371
      %1373 = vrot.lane.b32.xlu0 %v579, 96
      %v1374 = vpop.permute.xlu0 %1373
      %1375 = vrot.lane.b32.xlu0 %v580, 96
      %v1376 = vpop.permute.xlu0 %1375
      %1377 = vrot.lane.b32.xlu0 %v581, 96
      %v1378 = vpop.permute.xlu0 %1377
      %1379 = vrot.lane.b32.xlu0 %v582, 96
      %v1380 = vpop.permute.xlu0 %1379
      %1381 = vrot.lane.b32.xlu0 %v583, 96
      %v1382 = vpop.permute.xlu0 %1381
      %1383 = vrot.lane.b32.xlu0 %v584, 96
      %v1384 = vpop.permute.xlu0 %1383
      %1449 = vrot.lane.b32.xlu0 %v585, 112
      %v1450 = vpop.permute.xlu0 %1449
      %1451 = vrot.lane.b32.xlu0 %v586, 112
      %v1452 = vpop.permute.xlu0 %1451
      %1453 = vrot.lane.b32.xlu0 %v587, 112
      %v1454 = vpop.permute.xlu0 %1453
      %1455 = vrot.lane.b32.xlu0 %v588, 112
      %v1456 = vpop.permute.xlu0 %1455
      %1457 = vrot.lane.b32.xlu0 %v589, 112
      %v1458 = vpop.permute.xlu0 %1457
      %1459 = vrot.lane.b32.xlu0 %v590, 112
      %v1460 = vpop.permute.xlu0 %1459
      %1461 = vrot.lane.b32.xlu0 %v591, 112
      %v1462 = vpop.permute.xlu0 %1461
      %1463 = vrot.lane.b32.xlu0 %v592, 112
      %v1464 = vpop.permute.xlu0 %1463
      %1465 = vrot.lane.b32.xlu0 %v593, 112
      %v1466 = vpop.permute.xlu0 %1465
      %1467 = vrot.lane.b32.xlu0 %v594, 112
      %v1468 = vpop.permute.xlu0 %1467
      %1469 = vrot.lane.b32.xlu0 %v595, 112
      %v1470 = vpop.permute.xlu0 %1469
      %1471 = vrot.lane.b32.xlu0 %v596, 112
      %v1472 = vpop.permute.xlu0 %1471
      %1473 = vrot.lane.b32.xlu0 %v597, 112
      %v1474 = vpop.permute.xlu0 %1473
      %1475 = vrot.lane.b32.xlu0 %v598, 112
      %v1476 = vpop.permute.xlu0 %1475
      %1477 = vrot.lane.b32.xlu0 %v599, 112
      %v1478 = vpop.permute.xlu0 %1477
      %1479 = vrot.lane.b32.xlu0 %v600, 112
      %v1480 = vpop.permute.xlu0 %1479
      %1481 = vrot.lane.b32.xlu0 %v601, 112
      %v1482 = vpop.permute.xlu0 %1481
      %1483 = vrot.lane.b32.xlu0 %v602, 112
      %v1484 = vpop.permute.xlu0 %1483
      %1485 = vrot.lane.b32.xlu0 %v603, 112
      %v1486 = vpop.permute.xlu0 %1485
      %1487 = vrot.lane.b32.xlu0 %v604, 112
      %v1488 = vpop.permute.xlu0 %1487
      %1489 = vrot.lane.b32.xlu0 %v605, 112
      %v1490 = vpop.permute.xlu0 %1489
      %1491 = vrot.lane.b32.xlu0 %v606, 112
      %v1492 = vpop.permute.xlu0 %1491
      %1493 = vrot.lane.b32.xlu0 %v607, 112
      %v1494 = vpop.permute.xlu0 %1493
      %1495 = vrot.lane.b32.xlu0 %v608, 112
      %v1496 = vpop.permute.xlu0 %1495
      %1497 = vrot.lane.b32.xlu0 %v609, 112
      %v1498 = vpop.permute.xlu0 %1497
      %1499 = vrot.lane.b32.xlu0 %v610, 112
      %v1500 = vpop.permute.xlu0 %1499
      %1501 = vrot.lane.b32.xlu0 %v611, 112
      %v1502 = vpop.permute.xlu0 %1501
      %1503 = vrot.lane.b32.xlu0 %v612, 112
      %v1504 = vpop.permute.xlu0 %1503
      %1505 = vrot.lane.b32.xlu0 %v613, 112
      %v1506 = vpop.permute.xlu0 %1505
      %1507 = vrot.lane.b32.xlu0 %v614, 112
      %v1508 = vpop.permute.xlu0 %1507
      %1509 = vrot.lane.b32.xlu0 %v615, 112
      %v1510 = vpop.permute.xlu0 %1509
      %1511 = vrot.lane.b32.xlu0 %v616, 112
      %v1512 = vpop.permute.xlu0 %1511
      %vm1545 = vcmask 130048
      %v1546 = vsel %vm1545, %v359, %v682
      %v1547 = vsel %vm1545, %v360, %v684
      %v1548 = vsel %vm1545, %v361, %v686
      %v1549 = vsel %vm1545, %v362, %v688
      %v1550 = vsel %vm1545, %v363, %v690
      %v1551 = vsel %vm1545, %v364, %v692
      %v1552 = vsel %vm1545, %v365, %v694
      %v1553 = vsel %vm1545, %v366, %v696
      %v1554 = vsel %vm1545, %v367, %v698
      %v1555 = vsel %vm1545, %v368, %v700
      %v1556 = vsel %vm1545, %v369, %v702
      %v1557 = vsel %vm1545, %v370, %v704
      %v1558 = vsel %vm1545, %v371, %v706
      %v1559 = vsel %vm1545, %v372, %v708
      %v1560 = vsel %vm1545, %v373, %v710
      %v1561 = vsel %vm1545, %v374, %v712
      %v1562 = vsel %vm1545, %v375, %v714
      %v1563 = vsel %vm1545, %v376, %v716
      %v1564 = vsel %vm1545, %v377, %v718
      %v1565 = vsel %vm1545, %v378, %v720
      %v1566 = vsel %vm1545, %v379, %v722
      %v1567 = vsel %vm1545, %v380, %v724
      %v1568 = vsel %vm1545, %v381, %v726
      %v1569 = vsel %vm1545, %v382, %v728
      %v1570 = vsel %vm1545, %v383, %v730
      %v1571 = vsel %vm1545, %v384, %v732
      %v1572 = vsel %vm1545, %v385, %v734
      %v1573 = vsel %vm1545, %v386, %v736
      %v1574 = vsel %vm1545, %v387, %v738
      %v1575 = vsel %vm1545, %v388, %v740
      %v1576 = vsel %vm1545, %v389, %v742
      %v1577 = vsel %vm1545, %v390, %v744
      %vm1578 = vcmask 261120
      %v1579 = vsel %vm1578, %v1546, %v810
      %v1580 = vsel %vm1578, %v1547, %v812
      %v1581 = vsel %vm1578, %v1548, %v814
      %v1582 = vsel %vm1578, %v1549, %v816
      %v1583 = vsel %vm1578, %v1550, %v818
      %v1584 = vsel %vm1578, %v1551, %v820
      %v1585 = vsel %vm1578, %v1552, %v822
      %v1586 = vsel %vm1578, %v1553, %v824
      %v1587 = vsel %vm1578, %v1554, %v826
      %v1588 = vsel %vm1578, %v1555, %v828
      %v1589 = vsel %vm1578, %v1556, %v830
      %v1590 = vsel %vm1578, %v1557, %v832
      %v1591 = vsel %vm1578, %v1558, %v834
      %v1592 = vsel %vm1578, %v1559, %v836
      %v1593 = vsel %vm1578, %v1560, %v838
      %v1594 = vsel %vm1578, %v1561, %v840
      %v1595 = vsel %vm1578, %v1562, %v842
      %v1596 = vsel %vm1578, %v1563, %v844
      %v1597 = vsel %vm1578, %v1564, %v846
      %v1598 = vsel %vm1578, %v1565, %v848
      %v1599 = vsel %vm1578, %v1566, %v850
      %v1600 = vsel %vm1578, %v1567, %v852
      %v1601 = vsel %vm1578, %v1568, %v854
      %v1602 = vsel %vm1578, %v1569, %v856
      %v1603 = vsel %vm1578, %v1570, %v858
      %v1604 = vsel %vm1578, %v1571, %v860
      %v1605 = vsel %vm1578, %v1572, %v862
      %v1606 = vsel %vm1578, %v1573, %v864
      %v1607 = vsel %vm1578, %v1574, %v866
      %v1608 = vsel %vm1578, %v1575, %v868
      %v1609 = vsel %vm1578, %v1576, %v870
      %v1610 = vsel %vm1578, %v1577, %v872
      %vm1611 = vcmask 392192
      %v1612 = vsel %vm1611, %v1579, %v938
      %v1613 = vsel %vm1611, %v1580, %v940
      %v1614 = vsel %vm1611, %v1581, %v942
      %v1615 = vsel %vm1611, %v1582, %v944
      %v1616 = vsel %vm1611, %v1583, %v946
      %v1617 = vsel %vm1611, %v1584, %v948
      %v1618 = vsel %vm1611, %v1585, %v950
      %v1619 = vsel %vm1611, %v1586, %v952
      %v1620 = vsel %vm1611, %v1587, %v954
      %v1621 = vsel %vm1611, %v1588, %v956
      %v1622 = vsel %vm1611, %v1589, %v958
      %v1623 = vsel %vm1611, %v1590, %v960
      %v1624 = vsel %vm1611, %v1591, %v962
      %v1625 = vsel %vm1611, %v1592, %v964
      %v1626 = vsel %vm1611, %v1593, %v966
      %v1627 = vsel %vm1611, %v1594, %v968
      %v1628 = vsel %vm1611, %v1595, %v970
      %v1629 = vsel %vm1611, %v1596, %v972
      %v1630 = vsel %vm1611, %v1597, %v974
      %v1631 = vsel %vm1611, %v1598, %v976
      %v1632 = vsel %vm1611, %v1599, %v978
      %v1633 = vsel %vm1611, %v1600, %v980
      %v1634 = vsel %vm1611, %v1601, %v982
      %v1635 = vsel %vm1611, %v1602, %v984
      %v1636 = vsel %vm1611, %v1603, %v986
      %v1637 = vsel %vm1611, %v1604, %v988
      %v1638 = vsel %vm1611, %v1605, %v990
      %v1639 = vsel %vm1611, %v1606, %v992
      %v1640 = vsel %vm1611, %v1607, %v994
      %v1641 = vsel %vm1611, %v1608, %v996
      %v1642 = vsel %vm1611, %v1609, %v998
      %v1643 = vsel %vm1611, %v1610, %v1000
      %vm1644 = vcmask 523264
      %v1645 = vsel %vm1644, %v1612, %v1066
      %v1646 = vsel %vm1644, %v1613, %v1068
      %v1647 = vsel %vm1644, %v1614, %v1070
      %v1648 = vsel %vm1644, %v1615, %v1072
      %v1649 = vsel %vm1644, %v1616, %v1074
      %v1650 = vsel %vm1644, %v1617, %v1076
      %v1651 = vsel %vm1644, %v1618, %v1078
      %v1652 = vsel %vm1644, %v1619, %v1080
      %v1653 = vsel %vm1644, %v1620, %v1082
      %v1654 = vsel %vm1644, %v1621, %v1084
      %v1655 = vsel %vm1644, %v1622, %v1086
      %v1656 = vsel %vm1644, %v1623, %v1088
      %v1657 = vsel %vm1644, %v1624, %v1090
      %v1658 = vsel %vm1644, %v1625, %v1092
      %v1659 = vsel %vm1644, %v1626, %v1094
      %v1660 = vsel %vm1644, %v1627, %v1096
      %v1661 = vsel %vm1644, %v1628, %v1098
      %v1662 = vsel %vm1644, %v1629, %v1100
      %v1663 = vsel %vm1644, %v1630, %v1102
      %v1664 = vsel %vm1644, %v1631, %v1104
      %v1665 = vsel %vm1644, %v1632, %v1106
      %v1666 = vsel %vm1644, %v1633, %v1108
      %v1667 = vsel %vm1644, %v1634, %v1110
      %v1668 = vsel %vm1644, %v1635, %v1112
      %v1669 = vsel %vm1644, %v1636, %v1114
      %v1670 = vsel %vm1644, %v1637, %v1116
      %v1671 = vsel %vm1644, %v1638, %v1118
      %v1672 = vsel %vm1644, %v1639, %v1120
      %v1673 = vsel %vm1644, %v1640, %v1122
      %v1674 = vsel %vm1644, %v1641, %v1124
      %v1675 = vsel %vm1644, %v1642, %v1126
      %v1676 = vsel %vm1644, %v1643, %v1128
      %vm1677 = vcmask 654336
      %v1678 = vsel %vm1677, %v1645, %v1194
      %v1679 = vsel %vm1677, %v1646, %v1196
      %v1680 = vsel %vm1677, %v1647, %v1198
      %v1681 = vsel %vm1677, %v1648, %v1200
      %v1682 = vsel %vm1677, %v1649, %v1202
      %v1683 = vsel %vm1677, %v1650, %v1204
      %v1684 = vsel %vm1677, %v1651, %v1206
      %v1685 = vsel %vm1677, %v1652, %v1208
      %v1686 = vsel %vm1677, %v1653, %v1210
      %v1687 = vsel %vm1677, %v1654, %v1212
      %v1688 = vsel %vm1677, %v1655, %v1214
      %v1689 = vsel %vm1677, %v1656, %v1216
      %v1690 = vsel %vm1677, %v1657, %v1218
      %v1691 = vsel %vm1677, %v1658, %v1220
      %v1692 = vsel %vm1677, %v1659, %v1222
      %v1693 = vsel %vm1677, %v1660, %v1224
      %v1694 = vsel %vm1677, %v1661, %v1226
      %v1695 = vsel %vm1677, %v1662, %v1228
      %v1696 = vsel %vm1677, %v1663, %v1230
      %v1697 = vsel %vm1677, %v1664, %v1232
      %v1698 = vsel %vm1677, %v1665, %v1234
      %v1699 = vsel %vm1677, %v1666, %v1236
      %v1700 = vsel %vm1677, %v1667, %v1238
      %v1701 = vsel %vm1677, %v1668, %v1240
      %v1702 = vsel %vm1677, %v1669, %v1242
      %v1703 = vsel %vm1677, %v1670, %v1244
      %v1704 = vsel %vm1677, %v1671, %v1246
      %v1705 = vsel %vm1677, %v1672, %v1248
      %v1706 = vsel %vm1677, %v1673, %v1250
      %v1707 = vsel %vm1677, %v1674, %v1252
      %v1708 = vsel %vm1677, %v1675, %v1254
      %v1709 = vsel %vm1677, %v1676, %v1256
      %vm1710 = vcmask 785408
      %v1711 = vsel %vm1710, %v1678, %v1322
      %v1712 = vsel %vm1710, %v1679, %v1324
      %v1713 = vsel %vm1710, %v1680, %v1326
      %v1714 = vsel %vm1710, %v1681, %v1328
      %v1715 = vsel %vm1710, %v1682, %v1330
      %v1716 = vsel %vm1710, %v1683, %v1332
      %v1717 = vsel %vm1710, %v1684, %v1334
      %v1718 = vsel %vm1710, %v1685, %v1336
      %v1719 = vsel %vm1710, %v1686, %v1338
      %v1720 = vsel %vm1710, %v1687, %v1340
      %v1721 = vsel %vm1710, %v1688, %v1342
      %v1722 = vsel %vm1710, %v1689, %v1344
      %v1723 = vsel %vm1710, %v1690, %v1346
      %v1724 = vsel %vm1710, %v1691, %v1348
      %v1725 = vsel %vm1710, %v1692, %v1350
      %v1726 = vsel %vm1710, %v1693, %v1352
      %v1727 = vsel %vm1710, %v1694, %v1354
      %v1728 = vsel %vm1710, %v1695, %v1356
      %v1729 = vsel %vm1710, %v1696, %v1358
      %v1730 = vsel %vm1710, %v1697, %v1360
      %v1731 = vsel %vm1710, %v1698, %v1362
      %v1732 = vsel %vm1710, %v1699, %v1364
      %v1733 = vsel %vm1710, %v1700, %v1366
      %v1734 = vsel %vm1710, %v1701, %v1368
      %v1735 = vsel %vm1710, %v1702, %v1370
      %v1736 = vsel %vm1710, %v1703, %v1372
      %v1737 = vsel %vm1710, %v1704, %v1374
      %v1738 = vsel %vm1710, %v1705, %v1376
      %v1739 = vsel %vm1710, %v1706, %v1378
      %v1740 = vsel %vm1710, %v1707, %v1380
      %v1741 = vsel %vm1710, %v1708, %v1382
      %v1742 = vsel %vm1710, %v1709, %v1384
      %vm1743 = vcmask 916480
      %v1744 = vsel %vm1743, %v1711, %v1450
      %v1745 = vsel %vm1743, %v1712, %v1452
      %v1746 = vsel %vm1743, %v1713, %v1454
      %v1747 = vsel %vm1743, %v1714, %v1456
      %v1748 = vsel %vm1743, %v1715, %v1458
      %v1749 = vsel %vm1743, %v1716, %v1460
      %v1750 = vsel %vm1743, %v1717, %v1462
      %v1751 = vsel %vm1743, %v1718, %v1464
      %v1752 = vsel %vm1743, %v1719, %v1466
      %v1753 = vsel %vm1743, %v1720, %v1468
      %v1754 = vsel %vm1743, %v1721, %v1470
      %v1755 = vsel %vm1743, %v1722, %v1472
      %v1756 = vsel %vm1743, %v1723, %v1474
      %v1757 = vsel %vm1743, %v1724, %v1476
      %v1758 = vsel %vm1743, %v1725, %v1478
      %v1759 = vsel %vm1743, %v1726, %v1480
      %v1760 = vsel %vm1743, %v1727, %v1482
      %v1761 = vsel %vm1743, %v1728, %v1484
      %v1762 = vsel %vm1743, %v1729, %v1486
      %v1763 = vsel %vm1743, %v1730, %v1488
      %v1764 = vsel %vm1743, %v1731, %v1490
      %v1765 = vsel %vm1743, %v1732, %v1492
      %v1766 = vsel %vm1743, %v1733, %v1494
      %v1767 = vsel %vm1743, %v1734, %v1496
      %v1768 = vsel %vm1743, %v1735, %v1498
      %v1769 = vsel %vm1743, %v1736, %v1500
      %v1770 = vsel %vm1743, %v1737, %v1502
      %v1771 = vsel %vm1743, %v1738, %v1504
      %v1772 = vsel %vm1743, %v1739, %v1506
      %v1773 = vsel %vm1743, %v1740, %v1508
      %v1774 = vsel %vm1743, %v1741, %v1510
      %v1775 = vsel %vm1743, %v1742, %v1512
      %v1776 = vpack.c.bf16 %v1745, %v1744
      %v1777 = vpack.c.bf16 %v618, %v617
      %v1778 = vpack.c.bf16 %v1747, %v1746
      %v1779 = vpack.c.bf16 %v620, %v619
      %v1780 = vpack.c.bf16 %v1749, %v1748
      %v1781 = vpack.c.bf16 %v622, %v621
      %v1782 = vpack.c.bf16 %v1751, %v1750
      %v1783 = vpack.c.bf16 %v624, %v623
      %v1784 = vpack.c.bf16 %v1753, %v1752
      %v1785 = vpack.c.bf16 %v626, %v625
      %v1786 = vpack.c.bf16 %v1755, %v1754
      %v1787 = vpack.c.bf16 %v628, %v627
      %v1788 = vpack.c.bf16 %v1757, %v1756
      %v1789 = vpack.c.bf16 %v630, %v629
      %v1790 = vpack.c.bf16 %v1759, %v1758
      %v1791 = vpack.c.bf16 %v632, %v631
      %v1792 = vpack.c.bf16 %v1761, %v1760
      %v1793 = vpack.c.bf16 %v634, %v633
      %v1794 = vpack.c.bf16 %v1763, %v1762
      %v1795 = vpack.c.bf16 %v636, %v635
      %v1796 = vpack.c.bf16 %v1765, %v1764
      %v1797 = vpack.c.bf16 %v638, %v637
      %v1798 = vpack.c.bf16 %v1767, %v1766
      %v1799 = vpack.c.bf16 %v640, %v639
      %v1800 = vpack.c.bf16 %v1769, %v1768
      %v1801 = vpack.c.bf16 %v642, %v641
      %v1802 = vpack.c.bf16 %v1771, %v1770
      %v1803 = vpack.c.bf16 %v644, %v643
      %v1804 = vpack.c.bf16 %v1773, %v1772
      %v1805 = vpack.c.bf16 %v646, %v645
      %v1806 = vpack.c.bf16 %v1775, %v1774
      %v1807 = vpack.c.bf16 %v648, %v647
      %v1808 = vld [vmem:[%s1] sm:$0xf]
      %v1809 = vld [vmem:[%s1 + $0x4] sm:$0xf]
      %v1810 = vld [vmem:[%s1 + $0x8] sm:$0xf]
      %v1811 = vld [vmem:[%s1 + $0xc] sm:$0xf]
      %v1812 = vld [vmem:[%s1 + $0x10] sm:$0xf]
      %v1813 = vld [vmem:[%s1 + $0x14] sm:$0xf]
      %v1814 = vld [vmem:[%s1 + $0x18] sm:$0xf]
      %v1815 = vld [vmem:[%s1 + $0x1c] sm:$0xf]
      %v1816 = vld [vmem:[%s1 + $0x20] sm:$0xf]
      %v1817 = vld [vmem:[%s1 + $0x24] sm:$0xf]
      %v1818 = vld [vmem:[%s1 + $0x28] sm:$0xf]
      %v1819 = vld [vmem:[%s1 + $0x2c] sm:$0xf]
      %v1820 = vld [vmem:[%s1 + $0x30] sm:$0xf]
      %v1821 = vld [vmem:[%s1 + $0x34] sm:$0xf]
      %v1822 = vld [vmem:[%s1 + $0x38] sm:$0xf]
      %v1823 = vld [vmem:[%s1 + $0x3c] sm:$0xf]
      %v1824 = vld [vmem:[%s1 + $0x40] sm:$0xf]
      %v1825 = vld [vmem:[%s1 + $0x44] sm:$0xf]
      %v1826 = vld [vmem:[%s2] sm:$0x1]
      %v1828 = vlaneseq
      %v1829 = vshrl.u32 %v1828, 7
      %v1830 = vsub.s32 0, %v1829
      %v1831 = vrot.slane %v1826, %v1830
      %v1851 = vunpack.c.l.b16 %v1808
      %v1852 = vunpack.c.l.b16 %v1809
      %v1853 = vunpack.c.l.b16 %v1810
      %v1854 = vunpack.c.l.b16 %v1811
      %v1855 = vunpack.c.l.b16 %v1812
      %v1856 = vunpack.c.l.b16 %v1813
      %v1857 = vunpack.c.l.b16 %v1814
      %v1858 = vunpack.c.l.b16 %v1815
      %v1859 = vunpack.c.l.b16 %v1816
      %v1860 = vunpack.c.l.b16 %v1817
      %v1861 = vunpack.c.l.b16 %v1818
      %v1862 = vunpack.c.l.b16 %v1819
      %v1863 = vunpack.c.l.b16 %v1820
      %v1864 = vunpack.c.l.b16 %v1821
      %v1865 = vunpack.c.l.b16 %v1822
      %v1866 = vunpack.c.l.b16 %v1823
      %v1867 = vunpack.c.l.b16 %v1824
      %v1868 = vunpack.c.l.b16 %v1825
      %v1869 = vpack.c.b16 %v1852, %v1851
      %v1870 = vpack.c.b16 %v1854, %v1853
      %v1871 = vpack.c.b16 %v1856, %v1855
      %v1872 = vpack.c.b16 %v1858, %v1857
      %v1873 = vpack.c.b16 %v1860, %v1859
      %v1874 = vpack.c.b16 %v1862, %v1861
      %v1875 = vpack.c.b16 %v1864, %v1863
      %v1876 = vpack.c.b16 %v1866, %v1865
      %v1877 = vpack.c.b16 %v1868, %v1867
      %v1888 = vsel %vm1545, %v1777, 0
      %v1891 = vsel %vm1545, %v1779, 0
      %v1894 = vsel %vm1545, %v1781, 0
      %v1897 = vsel %vm1545, %v1783, 0
      %v1900 = vsel %vm1545, %v1785, 0
      %v1903 = vsel %vm1545, %v1787, 0
      %v1906 = vsel %vm1545, %v1789, 0
      %v1909 = vsel %vm1545, %v1791, 0
      %v1912 = vsel %vm1545, %v1793, 0
      %v1915 = vsel %vm1545, %v1795, 0
      %v1918 = vsel %vm1545, %v1797, 0
      %v1921 = vsel %vm1545, %v1799, 0
      %v1924 = vsel %vm1545, %v1801, 0
      %v1927 = vsel %vm1545, %v1803, 0
      %v1930 = vsel %vm1545, %v1805, 0
      %v1933 = vsel %vm1545, %v1807, 0
      %1935 = vmatprep.subr.bf16.mxu0 0
      %1936 = vmatpush1.bf16.msra.mxu0 %v1876
      %1937 = vmatprep.subr.bf16.mxu0 0
      %1938 = vmatpush1.bf16.msra.mxu0 %v1875
      %1939 = vmatprep.subr.bf16.mxu0 0
      %1940 = vmatpush1.bf16.msra.mxu0 %v1874
      %1941 = vmatprep.subr.bf16.mxu0 0
      %1942 = vmatpush1.bf16.msra.mxu0 %v1873
      %1943 = vmatprep.subr.bf16.mxu0 0
      %1944 = vmatpush1.bf16.msra.mxu0 %v1872
      %1945 = vmatprep.subr.bf16.mxu0 0
      %1946 = vmatpush1.bf16.msra.mxu0 %v1871
      %1947 = vmatprep.subr.bf16.mxu0 0
      %1948 = vmatpush1.bf16.msra.mxu0 %v1870
      %1949 = vmatprep.subr.bf16.mxu0 0
      %1950 = vmatpush1.bf16.msra.mxu0 %v1869
      %1951 = vmatprep.subr.bf16.mxu0 0
      %1952 = vmatpush2.bf16.msra.mxu0 0
      %1953 = vmatprep.subr.bf16.mxu0 0
      %1954 = vmatpush2.bf16.msra.mxu0 0
      %1955 = vmatprep.subr.bf16.mxu0 0
      %1956 = vmatpush2.bf16.msra.mxu0 0
      %1957 = vmatprep.subr.bf16.mxu0 0
      %1958 = vmatpush2.bf16.msra.mxu0 0
      %1959 = vmatprep.subr.bf16.mxu0 0
      %1960 = vmatpush2.bf16.msra.mxu0 0
      %1961 = vmatprep.subr.bf16.mxu0 0
      %1962 = vmatpush2.bf16.msra.mxu0 0
      %1963 = vmatprep.subr.bf16.mxu0 0
      %1964 = vmatpush2.bf16.msra.mxu0 0
      %1965 = vmatprep.subr.bf16.mxu0 0
      %1966 = vmatpush2.bf16.msra.mxu0 %v1877
      %1967 = vmatprep.mubr.bf16.mxu0 %v1888
      %1968 = vmatmul.mubr.bf16.gmra.mxu0 %v1776
      %v1969 = vpop.f32.mrf.mxu0
      %v1970 = vadd.f32 %v1831, %v1969
      %v1971 = vpop.f32.mrf.mxu0
      %v1972 = vpop.f32.mrf.mxu0
      %v1973 = vadd.f32 %v1831, %v1972
      %v1974 = vpop.f32.mrf.mxu0
      %1975 = vmatprep.mubr.bf16.mxu0 %v1891
      %1976 = vmatmul.mubr.bf16.gmra.mxu0 %v1778
      %v1977 = vpop.f32.mrf.mxu0
      %v1978 = vadd.f32 %v1831, %v1977
      %v1979 = vpop.f32.mrf.mxu0
      %v1980 = vpop.f32.mrf.mxu0
      %v1981 = vadd.f32 %v1831, %v1980
      %v1982 = vpop.f32.mrf.mxu0
      %1983 = vmatprep.mubr.bf16.mxu0 %v1894
      %1984 = vmatmul.mubr.bf16.gmra.mxu0 %v1780
      %v1985 = vpop.f32.mrf.mxu0
      %v1986 = vadd.f32 %v1831, %v1985
      %v1987 = vpop.f32.mrf.mxu0
      %v1988 = vpop.f32.mrf.mxu0
      %v1989 = vadd.f32 %v1831, %v1988
      %v1990 = vpop.f32.mrf.mxu0
      %1991 = vmatprep.mubr.bf16.mxu0 %v1897
      %1992 = vmatmul.mubr.bf16.gmra.mxu0 %v1782
      %v1993 = vpop.f32.mrf.mxu0
      %v1994 = vadd.f32 %v1831, %v1993
      %v1995 = vpop.f32.mrf.mxu0
      %v1996 = vpop.f32.mrf.mxu0
      %v1997 = vadd.f32 %v1831, %v1996
      %v1998 = vpop.f32.mrf.mxu0
      %1999 = vmatprep.mubr.bf16.mxu0 %v1900
      %2000 = vmatmul.mubr.bf16.gmra.mxu0 %v1784
      %v2001 = vpop.f32.mrf.mxu0
      %v2002 = vadd.f32 %v1831, %v2001
      %v2003 = vpop.f32.mrf.mxu0
      %v2004 = vpop.f32.mrf.mxu0
      %v2005 = vadd.f32 %v1831, %v2004
      %v2006 = vpop.f32.mrf.mxu0
      %2007 = vmatprep.mubr.bf16.mxu0 %v1903
      %2008 = vmatmul.mubr.bf16.gmra.mxu0 %v1786
      %v2009 = vpop.f32.mrf.mxu0
      %v2010 = vadd.f32 %v1831, %v2009
      %v2011 = vpop.f32.mrf.mxu0
      %v2012 = vpop.f32.mrf.mxu0
      %v2013 = vadd.f32 %v1831, %v2012
      %v2014 = vpop.f32.mrf.mxu0
      %2015 = vmatprep.mubr.bf16.mxu0 %v1906
      %2016 = vmatmul.mubr.bf16.gmra.mxu0 %v1788
      %v2017 = vpop.f32.mrf.mxu0
      %v2018 = vadd.f32 %v1831, %v2017
      %v2019 = vpop.f32.mrf.mxu0
      %v2020 = vpop.f32.mrf.mxu0
      %v2021 = vadd.f32 %v1831, %v2020
      %v2022 = vpop.f32.mrf.mxu0
      %2023 = vmatprep.mubr.bf16.mxu0 %v1909
      %2024 = vmatmul.mubr.bf16.gmra.mxu0 %v1790
      %v2025 = vpop.f32.mrf.mxu0
      %v2026 = vadd.f32 %v1831, %v2025
      %v2027 = vpop.f32.mrf.mxu0
      %v2028 = vpop.f32.mrf.mxu0
      %v2029 = vadd.f32 %v1831, %v2028
      %v2030 = vpop.f32.mrf.mxu0
      %2031 = vmatprep.mubr.bf16.mxu0 %v1912
      %2032 = vmatmul.mubr.bf16.gmra.mxu0 %v1792
      %v2033 = vpop.f32.mrf.mxu0
      %v2034 = vadd.f32 %v1831, %v2033
      %v2035 = vpop.f32.mrf.mxu0
      %v2036 = vpop.f32.mrf.mxu0
      %v2037 = vadd.f32 %v1831, %v2036
      %v2038 = vpop.f32.mrf.mxu0
      %2039 = vmatprep.mubr.bf16.mxu0 %v1915
      %2040 = vmatmul.mubr.bf16.gmra.mxu0 %v1794
      %v2041 = vpop.f32.mrf.mxu0
      %v2042 = vadd.f32 %v1831, %v2041
      %v2043 = vpop.f32.mrf.mxu0
      %v2044 = vpop.f32.mrf.mxu0
      %v2045 = vadd.f32 %v1831, %v2044
      %v2046 = vpop.f32.mrf.mxu0
      %2047 = vmatprep.mubr.bf16.mxu0 %v1918
      %2048 = vmatmul.mubr.bf16.gmra.mxu0 %v1796
      %v2049 = vpop.f32.mrf.mxu0
      %v2050 = vadd.f32 %v1831, %v2049
      %v2051 = vpop.f32.mrf.mxu0
      %v2052 = vpop.f32.mrf.mxu0
      %v2053 = vadd.f32 %v1831, %v2052
      %v2054 = vpop.f32.mrf.mxu0
      %2055 = vmatprep.mubr.bf16.mxu0 %v1921
      %2056 = vmatmul.mubr.bf16.gmra.mxu0 %v1798
      %v2057 = vpop.f32.mrf.mxu0
      %v2058 = vadd.f32 %v1831, %v2057
      %v2059 = vpop.f32.mrf.mxu0
      %v2060 = vpop.f32.mrf.mxu0
      %v2061 = vadd.f32 %v1831, %v2060
      %v2062 = vpop.f32.mrf.mxu0
      %2063 = vmatprep.mubr.bf16.mxu0 %v1924
      %2064 = vmatmul.mubr.bf16.gmra.mxu0 %v1800
      %v2065 = vpop.f32.mrf.mxu0
      %v2066 = vadd.f32 %v1831, %v2065
      %v2067 = vpop.f32.mrf.mxu0
      %v2068 = vpop.f32.mrf.mxu0
      %v2069 = vadd.f32 %v1831, %v2068
      %v2070 = vpop.f32.mrf.mxu0
      %2071 = vmatprep.mubr.bf16.mxu0 %v1927
      %2072 = vmatmul.mubr.bf16.gmra.mxu0 %v1802
      %v2073 = vpop.f32.mrf.mxu0
      %v2074 = vadd.f32 %v1831, %v2073
      %v2075 = vpop.f32.mrf.mxu0
      %v2076 = vpop.f32.mrf.mxu0
      %v2077 = vadd.f32 %v1831, %v2076
      %v2078 = vpop.f32.mrf.mxu0
      %2079 = vmatprep.mubr.bf16.mxu0 %v1930
      %2080 = vmatmul.mubr.bf16.gmra.mxu0 %v1804
      %v2081 = vpop.f32.mrf.mxu0
      %v2082 = vadd.f32 %v1831, %v2081
      %v2083 = vpop.f32.mrf.mxu0
      %v2084 = vpop.f32.mrf.mxu0
      %v2085 = vadd.f32 %v1831, %v2084
      %v2086 = vpop.f32.mrf.mxu0
      %2087 = vmatprep.mubr.bf16.mxu0 %v1933
      %2088 = vmatmul.mubr.bf16.gmra.mxu0 %v1806
      %v2089 = vpop.f32.mrf.mxu0
      %v2090 = vadd.f32 %v1831, %v2089
      %v2091 = vpop.f32.mrf.mxu0
      %v2092 = vpop.f32.mrf.mxu0
      %v2093 = vadd.f32 %v1831, %v2092
      %v2094 = vpop.f32.mrf.mxu0
      %2095 = vdwg.mxu0
      %2096 = vst.msk [vmem:[%s352] sm:$0xff] %vm1545, %v1970
      %2097 = vst.msk [vmem:[%s352 + $0x8] sm:$0xff] %vm1545, %v1973
      %2098 = vst.msk [vmem:[%s352 + $0x10] sm:$0xff] %vm1545, %v1978
      %2099 = vst.msk [vmem:[%s352 + $0x18] sm:$0xff] %vm1545, %v1981
      %2100 = vst.msk [vmem:[%s352 + $0x20] sm:$0xff] %vm1545, %v1986
      %2101 = vst.msk [vmem:[%s352 + $0x28] sm:$0xff] %vm1545, %v1989
      %2102 = vst.msk [vmem:[%s352 + $0x30] sm:$0xff] %vm1545, %v1994
      %2103 = vst.msk [vmem:[%s352 + $0x38] sm:$0xff] %vm1545, %v1997
      %2104 = vst.msk [vmem:[%s352 + $0x40] sm:$0xff] %vm1545, %v2002
      %2105 = vst.msk [vmem:[%s352 + $0x48] sm:$0xff] %vm1545, %v2005
      %2106 = vst.msk [vmem:[%s352 + $0x50] sm:$0xff] %vm1545, %v2010
      %2107 = vst.msk [vmem:[%s352 + $0x58] sm:$0xff] %vm1545, %v2013
      %2108 = vst.msk [vmem:[%s352 + $0x60] sm:$0xff] %vm1545, %v2018
      %2109 = vst.msk [vmem:[%s352 + $0x68] sm:$0xff] %vm1545, %v2021
      %2110 = vst.msk [vmem:[%s352 + $0x70] sm:$0xff] %vm1545, %v2026
      %2111 = vst.msk [vmem:[%s352 + $0x78] sm:$0xff] %vm1545, %v2029
      %2112 = vst.msk [vmem:[%s352 + $0x80] sm:$0xff] %vm1545, %v2034
      %2113 = vst.msk [vmem:[%s352 + $0x88] sm:$0xff] %vm1545, %v2037
      %2114 = vst.msk [vmem:[%s352 + $0x90] sm:$0xff] %vm1545, %v2042
      %2115 = vst.msk [vmem:[%s352 + $0x98] sm:$0xff] %vm1545, %v2045
      %2116 = vst.msk [vmem:[%s352 + $0xa0] sm:$0xff] %vm1545, %v2050
      %2117 = vst.msk [vmem:[%s352 + $0xa8] sm:$0xff] %vm1545, %v2053
      %2118 = vst.msk [vmem:[%s352 + $0xb0] sm:$0xff] %vm1545, %v2058
      %2119 = vst.msk [vmem:[%s352 + $0xb8] sm:$0xff] %vm1545, %v2061
      %2120 = vst.msk [vmem:[%s352 + $0xc0] sm:$0xff] %vm1545, %v2066
      %2121 = vst.msk [vmem:[%s352 + $0xc8] sm:$0xff] %vm1545, %v2069
      %2122 = vst.msk [vmem:[%s352 + $0xd0] sm:$0xff] %vm1545, %v2074
      %2123 = vst.msk [vmem:[%s352 + $0xd8] sm:$0xff] %vm1545, %v2077
      %2124 = vst.msk [vmem:[%s352 + $0xe0] sm:$0xff] %vm1545, %v2082
      %2125 = vst.msk [vmem:[%s352 + $0xe8] sm:$0xff] %vm1545, %v2085
      %2126 = vst.msk [vmem:[%s352 + $0xf0] sm:$0xff] %vm1545, %v2090
      %2127 = vst.msk [vmem:[%s352 + $0xf8] sm:$0xff] %vm1545, %v2093
      %v2128 = vxor.u32 %v1970, 2147483648
      %v2129 = vxor.u32 %v1973, 2147483648
      %v2130 = vxor.u32 %v1978, 2147483648
      %v2131 = vxor.u32 %v1981, 2147483648
      %v2132 = vxor.u32 %v1986, 2147483648
      %v2133 = vxor.u32 %v1989, 2147483648
      %v2134 = vxor.u32 %v1994, 2147483648
      %v2135 = vxor.u32 %v1997, 2147483648
      %v2136 = vxor.u32 %v2002, 2147483648
      %v2137 = vxor.u32 %v2005, 2147483648
      %v2138 = vxor.u32 %v2010, 2147483648
      %v2139 = vxor.u32 %v2013, 2147483648
      %v2140 = vxor.u32 %v2018, 2147483648
      %v2141 = vxor.u32 %v2021, 2147483648
      %v2142 = vxor.u32 %v2026, 2147483648
      %v2143 = vxor.u32 %v2029, 2147483648
      %v2144 = vxor.u32 %v2034, 2147483648
      %v2145 = vxor.u32 %v2037, 2147483648
      %v2146 = vxor.u32 %v2042, 2147483648
      %v2147 = vxor.u32 %v2045, 2147483648
      %v2148 = vxor.u32 %v2050, 2147483648
      %v2149 = vxor.u32 %v2053, 2147483648
      %v2150 = vxor.u32 %v2058, 2147483648
      %v2151 = vxor.u32 %v2061, 2147483648
      %v2152 = vxor.u32 %v2066, 2147483648
      %v2153 = vxor.u32 %v2069, 2147483648
      %v2154 = vxor.u32 %v2074, 2147483648
      %v2155 = vxor.u32 %v2077, 2147483648
      %v2156 = vxor.u32 %v2082, 2147483648
      %v2157 = vxor.u32 %v2085, 2147483648
      %v2158 = vxor.u32 %v2090, 2147483648
      %v2159 = vxor.u32 %v2093, 2147483648
      %v2160 = vmul.f32 %v2128, 1.442695
      %v2161 = vpow.pop %v2160
      %v2162 = vmul.f32 %v2129, 1.442695
      %v2163 = vpow.pop %v2162
      %v2164 = vmul.f32 %v2130, 1.442695
      %v2165 = vpow.pop %v2164
      %v2166 = vmul.f32 %v2131, 1.442695
      %v2167 = vpow.pop %v2166
      %v2168 = vmul.f32 %v2132, 1.442695
      %v2169 = vpow.pop %v2168
      %v2170 = vmul.f32 %v2133, 1.442695
      %v2171 = vpow.pop %v2170
      %v2172 = vmul.f32 %v2134, 1.442695
      %v2173 = vpow.pop %v2172
      %v2174 = vmul.f32 %v2135, 1.442695
      %v2175 = vpow.pop %v2174
      %v2176 = vmul.f32 %v2136, 1.442695
      %v2177 = vpow.pop %v2176
      %v2178 = vmul.f32 %v2137, 1.442695
      %v2179 = vpow.pop %v2178
      %v2180 = vmul.f32 %v2138, 1.442695
      %v2181 = vpow.pop %v2180
      %v2182 = vmul.f32 %v2139, 1.442695
      %v2183 = vpow.pop %v2182
      %v2184 = vmul.f32 %v2140, 1.442695
      %v2185 = vpow.pop %v2184
      %v2186 = vmul.f32 %v2141, 1.442695
      %v2187 = vpow.pop %v2186
      %v2188 = vmul.f32 %v2142, 1.442695
      %v2189 = vpow.pop %v2188
      %v2190 = vmul.f32 %v2143, 1.442695
      %v2191 = vpow.pop %v2190
      %v2192 = vmul.f32 %v2144, 1.442695
      %v2193 = vpow.pop %v2192
      %v2194 = vmul.f32 %v2145, 1.442695
      %v2195 = vpow.pop %v2194
      %v2196 = vmul.f32 %v2146, 1.442695
      %v2197 = vpow.pop %v2196
      %v2198 = vmul.f32 %v2147, 1.442695
      %v2199 = vpow.pop %v2198
      %v2200 = vmul.f32 %v2148, 1.442695
      %v2201 = vpow.pop %v2200
      %v2202 = vmul.f32 %v2149, 1.442695
      %v2203 = vpow.pop %v2202
      %v2204 = vmul.f32 %v2150, 1.442695
      %v2205 = vpow.pop %v2204
      %v2206 = vmul.f32 %v2151, 1.442695
      %v2207 = vpow.pop %v2206
      %v2208 = vmul.f32 %v2152, 1.442695
      %v2209 = vpow.pop %v2208
      %v2210 = vmul.f32 %v2153, 1.442695
      %v2211 = vpow.pop %v2210
      %v2212 = vmul.f32 %v2154, 1.442695
      %v2213 = vpow.pop %v2212
      %v2214 = vmul.f32 %v2155, 1.442695
      %v2215 = vpow.pop %v2214
      %v2216 = vmul.f32 %v2156, 1.442695
      %v2217 = vpow.pop %v2216
      %v2218 = vmul.f32 %v2157, 1.442695
      %v2219 = vpow.pop %v2218
      %v2220 = vmul.f32 %v2158, 1.442695
      %v2221 = vpow.pop %v2220
      %v2222 = vmul.f32 %v2159, 1.442695
      %v2223 = vpow.pop %v2222
      %v2224 = vadd.f32 %v2161, 1.0
      %v2225 = vadd.f32 %v2163, 1.0
      %v2226 = vadd.f32 %v2165, 1.0
      %v2227 = vadd.f32 %v2167, 1.0
      %v2228 = vadd.f32 %v2169, 1.0
      %v2229 = vadd.f32 %v2171, 1.0
      %v2230 = vadd.f32 %v2173, 1.0
      %v2231 = vadd.f32 %v2175, 1.0
      %v2232 = vadd.f32 %v2177, 1.0
      %v2233 = vadd.f32 %v2179, 1.0
      %v2234 = vadd.f32 %v2181, 1.0
      %v2235 = vadd.f32 %v2183, 1.0
      %v2236 = vadd.f32 %v2185, 1.0
      %v2237 = vadd.f32 %v2187, 1.0
      %v2238 = vadd.f32 %v2189, 1.0
      %v2239 = vadd.f32 %v2191, 1.0
      %v2240 = vadd.f32 %v2193, 1.0
      %v2241 = vadd.f32 %v2195, 1.0
      %v2242 = vadd.f32 %v2197, 1.0
      %v2243 = vadd.f32 %v2199, 1.0
      %v2244 = vadd.f32 %v2201, 1.0
      %v2245 = vadd.f32 %v2203, 1.0
      %v2246 = vadd.f32 %v2205, 1.0
      %v2247 = vadd.f32 %v2207, 1.0
      %v2248 = vadd.f32 %v2209, 1.0
      %v2249 = vadd.f32 %v2211, 1.0
      %v2250 = vadd.f32 %v2213, 1.0
      %v2251 = vadd.f32 %v2215, 1.0
      %v2252 = vadd.f32 %v2217, 1.0
      %v2253 = vadd.f32 %v2219, 1.0
      %v2254 = vadd.f32 %v2221, 1.0
      %v2255 = vadd.f32 %v2223, 1.0
      %v2256 = vrcp.pop %v2224
      %v2257 = vmul.f32 1.0, %v2256
      %v2258 = vrcp.pop %v2225
      %v2259 = vmul.f32 1.0, %v2258
      %v2260 = vrcp.pop %v2226
      %v2261 = vmul.f32 1.0, %v2260
      %v2262 = vrcp.pop %v2227
      %v2263 = vmul.f32 1.0, %v2262
      %v2264 = vrcp.pop %v2228
      %v2265 = vmul.f32 1.0, %v2264
      %v2266 = vrcp.pop %v2229
      %v2267 = vmul.f32 1.0, %v2266
      %v2268 = vrcp.pop %v2230
      %v2269 = vmul.f32 1.0, %v2268
      %v2270 = vrcp.pop %v2231
      %v2271 = vmul.f32 1.0, %v2270
      %v2272 = vrcp.pop %v2232
      %v2273 = vmul.f32 1.0, %v2272
      %v2274 = vrcp.pop %v2233
      %v2275 = vmul.f32 1.0, %v2274
      %v2276 = vrcp.pop %v2234
      %v2277 = vmul.f32 1.0, %v2276
      %v2278 = vrcp.pop %v2235
      %v2279 = vmul.f32 1.0, %v2278
      %v2280 = vrcp.pop %v2236
      %v2281 = vmul.f32 1.0, %v2280
      %v2282 = vrcp.pop %v2237
      %v2283 = vmul.f32 1.0, %v2282
      %v2284 = vrcp.pop %v2238
      %v2285 = vmul.f32 1.0, %v2284
      %v2286 = vrcp.pop %v2239
      %v2287 = vmul.f32 1.0, %v2286
      %v2288 = vrcp.pop %v2240
      %v2289 = vmul.f32 1.0, %v2288
      %v2290 = vrcp.pop %v2241
      %v2291 = vmul.f32 1.0, %v2290
      %v2292 = vrcp.pop %v2242
      %v2293 = vmul.f32 1.0, %v2292
      %v2294 = vrcp.pop %v2243
      %v2295 = vmul.f32 1.0, %v2294
      %v2296 = vrcp.pop %v2244
      %v2297 = vmul.f32 1.0, %v2296
      %v2298 = vrcp.pop %v2245
      %v2299 = vmul.f32 1.0, %v2298
      %v2300 = vrcp.pop %v2246
      %v2301 = vmul.f32 1.0, %v2300
      %v2302 = vrcp.pop %v2247
      %v2303 = vmul.f32 1.0, %v2302
      %v2304 = vrcp.pop %v2248
      %v2305 = vmul.f32 1.0, %v2304
      %v2306 = vrcp.pop %v2249
      %v2307 = vmul.f32 1.0, %v2306
      %v2308 = vrcp.pop %v2250
      %v2309 = vmul.f32 1.0, %v2308
      %v2310 = vrcp.pop %v2251
      %v2311 = vmul.f32 1.0, %v2310
      %v2312 = vrcp.pop %v2252
      %v2313 = vmul.f32 1.0, %v2312
      %v2314 = vrcp.pop %v2253
      %v2315 = vmul.f32 1.0, %v2314
      %v2316 = vrcp.pop %v2254
      %v2317 = vmul.f32 1.0, %v2316
      %v2318 = vrcp.pop %v2255
      %v2319 = vmul.f32 1.0, %v2318
      %v2320 = vmul.f32 %v1970, %v2257
      %v2321 = vmul.f32 %v1973, %v2259
      %v2322 = vmul.f32 %v1978, %v2261
      %v2323 = vmul.f32 %v1981, %v2263
      %v2324 = vmul.f32 %v1986, %v2265
      %v2325 = vmul.f32 %v1989, %v2267
      %v2326 = vmul.f32 %v1994, %v2269
      %v2327 = vmul.f32 %v1997, %v2271
      %v2328 = vmul.f32 %v2002, %v2273
      %v2329 = vmul.f32 %v2005, %v2275
      %v2330 = vmul.f32 %v2010, %v2277
      %v2331 = vmul.f32 %v2013, %v2279
      %v2332 = vmul.f32 %v2018, %v2281
      %v2333 = vmul.f32 %v2021, %v2283
      %v2334 = vmul.f32 %v2026, %v2285
      %v2335 = vmul.f32 %v2029, %v2287
      %v2336 = vmul.f32 %v2034, %v2289
      %v2337 = vmul.f32 %v2037, %v2291
      %v2338 = vmul.f32 %v2042, %v2293
      %v2339 = vmul.f32 %v2045, %v2295
      %v2340 = vmul.f32 %v2050, %v2297
      %v2341 = vmul.f32 %v2053, %v2299
      %v2342 = vmul.f32 %v2058, %v2301
      %v2343 = vmul.f32 %v2061, %v2303
      %v2344 = vmul.f32 %v2066, %v2305
      %v2345 = vmul.f32 %v2069, %v2307
      %v2346 = vmul.f32 %v2074, %v2309
      %v2347 = vmul.f32 %v2077, %v2311
      %v2348 = vmul.f32 %v2082, %v2313
      %v2349 = vmul.f32 %v2085, %v2315
      %v2350 = vmul.f32 %v2090, %v2317
      %v2351 = vmul.f32 %v2093, %v2319
      %2352 = vst.msk [vmem:[#allocation2] sm:$0xff] %vm1545, 0.0
      %2353 = vst.msk [vmem:[#allocation2 + $0x8] sm:$0xff] %vm1545, 0.0
      %vm2354 = vcmask 123904
      %2355 = vst.msk [vmem:[#allocation2 + $0x10] sm:$0x3] %vm2354, 0.0
      %2356 = vst.msk [vmem:[#allocation2 + $0x18] sm:$0xff] %vm1545, 0.0
      %2357 = vst.msk [vmem:[#allocation2 + $0x20] sm:$0xff] %vm1545, 0.0
      %2358 = vst.msk [vmem:[#allocation2 + $0x28] sm:$0x3] %vm2354, 0.0
      %2359 = vst.msk [vmem:[#allocation2 + $0x30] sm:$0xff] %vm1545, 0.0
      %2360 = vst.msk [vmem:[#allocation2 + $0x38] sm:$0xff] %vm1545, 0.0
      %2361 = vst.msk [vmem:[#allocation2 + $0x40] sm:$0x3] %vm2354, 0.0
      %2362 = vst.msk [vmem:[#allocation2 + $0x48] sm:$0xff] %vm1545, 0.0
      %2363 = vst.msk [vmem:[#allocation2 + $0x50] sm:$0xff] %vm1545, 0.0
      %2364 = vst.msk [vmem:[#allocation2 + $0x58] sm:$0x3] %vm2354, 0.0
      %2365 = vst.msk [vmem:[#allocation2 + $0x60] sm:$0xff] %vm1545, 0.0
      %2366 = vst.msk [vmem:[#allocation2 + $0x68] sm:$0xff] %vm1545, 0.0
      %2367 = vst.msk [vmem:[#allocation2 + $0x70] sm:$0x3] %vm2354, 0.0
      %2368 = vst.msk [vmem:[#allocation2 + $0x78] sm:$0xff] %vm1545, 0.0
      %2369 = vst.msk [vmem:[#allocation2 + $0x80] sm:$0xff] %vm1545, 0.0
      %2370 = vst.msk [vmem:[#allocation2 + $0x88] sm:$0x3] %vm2354, 0.0
      %2371 = vst.msk [vmem:[#allocation2 + $0x90] sm:$0xff] %vm1545, 0.0
      %2372 = vst.msk [vmem:[#allocation2 + $0x98] sm:$0xff] %vm1545, 0.0
      %2373 = vst.msk [vmem:[#allocation2 + $0xa0] sm:$0x3] %vm2354, 0.0
      %2374 = vst.msk [vmem:[#allocation2 + $0xa8] sm:$0xff] %vm1545, 0.0
      %2375 = vst.msk [vmem:[#allocation2 + $0xb0] sm:$0xff] %vm1545, 0.0
      %2376 = vst.msk [vmem:[#allocation2 + $0xb8] sm:$0x3] %vm2354, 0.0
      %2377 = vst.msk [vmem:[#allocation2 + $0xc0] sm:$0xff] %vm1545, 0.0
      %2378 = vst.msk [vmem:[#allocation2 + $0xc8] sm:$0xff] %vm1545, 0.0
      %2379 = vst.msk [vmem:[#allocation2 + $0xd0] sm:$0x3] %vm2354, 0.0
      %2380 = vst.msk [vmem:[#allocation2 + $0xd8] sm:$0xff] %vm1545, 0.0
      %2381 = vst.msk [vmem:[#allocation2 + $0xe0] sm:$0xff] %vm1545, 0.0
      %2382 = vst.msk [vmem:[#allocation2 + $0xe8] sm:$0x3] %vm2354, 0.0
      %2383 = vst.msk [vmem:[#allocation2 + $0xf0] sm:$0xff] %vm1545, 0.0
      %2384 = vst.msk [vmem:[#allocation2 + $0xf8] sm:$0xff] %vm1545, 0.0
      %2385 = vst.msk [vmem:[#allocation2 + $0x100] sm:$0x3] %vm2354, 0.0
      %2386 = vst.msk [vmem:[#allocation2 + $0x108] sm:$0xff] %vm1545, 0.0
      %2387 = vst.msk [vmem:[#allocation2 + $0x110] sm:$0xff] %vm1545, 0.0
      %2388 = vst.msk [vmem:[#allocation2 + $0x118] sm:$0x3] %vm2354, 0.0
      %2389 = vst.msk [vmem:[#allocation2 + $0x120] sm:$0xff] %vm1545, 0.0
      %2390 = vst.msk [vmem:[#allocation2 + $0x128] sm:$0xff] %vm1545, 0.0
      %2391 = vst.msk [vmem:[#allocation2 + $0x130] sm:$0x3] %vm2354, 0.0
      %2392 = vst.msk [vmem:[#allocation2 + $0x138] sm:$0xff] %vm1545, 0.0
      %2393 = vst.msk [vmem:[#allocation2 + $0x140] sm:$0xff] %vm1545, 0.0
      %2394 = vst.msk [vmem:[#allocation2 + $0x148] sm:$0x3] %vm2354, 0.0
      %2395 = vst.msk [vmem:[#allocation2 + $0x150] sm:$0xff] %vm1545, 0.0
      %2396 = vst.msk [vmem:[#allocation2 + $0x158] sm:$0xff] %vm1545, 0.0
      %2397 = vst.msk [vmem:[#allocation2 + $0x160] sm:$0x3] %vm2354, 0.0
      %2398 = vst.msk [vmem:[#allocation2 + $0x168] sm:$0xff] %vm1545, 0.0
      %2399 = vst.msk [vmem:[#allocation2 + $0x170] sm:$0xff] %vm1545, 0.0
      %2400 = vst.msk [vmem:[#allocation2 + $0x178] sm:$0x3] %vm2354, 0.0
      %2401 = vst.msk [vmem:[#allocation2 + $0x180] sm:$0xff] %vm1545, 0.0
      %2402 = vst.msk [vmem:[#allocation2 + $0x188] sm:$0xff] %vm1545, 0.0
      %2403 = vst.msk [vmem:[#allocation2 + $0x190] sm:$0x3] %vm2354, 0.0
      %2404 = vst.msk [vmem:[#allocation2 + $0x198] sm:$0xff] %vm1545, 0.0
      %2405 = vst.msk [vmem:[#allocation2 + $0x1a0] sm:$0xff] %vm1545, 0.0
      %2406 = vst.msk [vmem:[#allocation2 + $0x1a8] sm:$0x3] %vm2354, 0.0
      %s2407 = scalar_lea.vmem [#allocation2], 24
      %2408 = vst.msk [vmem:[%s2407 + $0x1] sm:$0xff] %vm1545, %v2320
      %2409 = vst.msk [vmem:[%s2407 + $0x9] sm:$0xff] %vm1545, %v2321
      %2410 = vst.msk [vmem:[%s2407 + $0x19] sm:$0xff] %vm1545, %v2322
      %2411 = vst.msk [vmem:[%s2407 + $0x21] sm:$0xff] %vm1545, %v2323
      %2412 = vst.msk [vmem:[%s2407 + $0x31] sm:$0xff] %vm1545, %v2324
      %2413 = vst.msk [vmem:[%s2407 + $0x39] sm:$0xff] %vm1545, %v2325
      %2414 = vst.msk [vmem:[%s2407 + $0x49] sm:$0xff] %vm1545, %v2326
      %2415 = vst.msk [vmem:[%s2407 + $0x51] sm:$0xff] %vm1545, %v2327
      %2416 = vst.msk [vmem:[%s2407 + $0x61] sm:$0xff] %vm1545, %v2328
      %2417 = vst.msk [vmem:[%s2407 + $0x69] sm:$0xff] %vm1545, %v2329
      %2418 = vst.msk [vmem:[%s2407 + $0x79] sm:$0xff] %vm1545, %v2330
      %2419 = vst.msk [vmem:[%s2407 + $0x81] sm:$0xff] %vm1545, %v2331
      %2420 = vst.msk [vmem:[%s2407 + $0x91] sm:$0xff] %vm1545, %v2332
      %2421 = vst.msk [vmem:[%s2407 + $0x99] sm:$0xff] %vm1545, %v2333
      %2422 = vst.msk [vmem:[%s2407 + $0xa9] sm:$0xff] %vm1545, %v2334
      %2423 = vst.msk [vmem:[%s2407 + $0xb1] sm:$0xff] %vm1545, %v2335
      %2424 = vst.msk [vmem:[%s2407 + $0xc1] sm:$0xff] %vm1545, %v2336
      %2425 = vst.msk [vmem:[%s2407 + $0xc9] sm:$0xff] %vm1545, %v2337
      %2426 = vst.msk [vmem:[%s2407 + $0xd9] sm:$0xff] %vm1545, %v2338
      %2427 = vst.msk [vmem:[%s2407 + $0xe1] sm:$0xff] %vm1545, %v2339
      %2428 = vst.msk [vmem:[%s2407 + $0xf1] sm:$0xff] %vm1545, %v2340
      %2429 = vst.msk [vmem:[%s2407 + $0xf9] sm:$0xff] %vm1545, %v2341
      %2430 = vst.msk [vmem:[%s2407 + $0x109] sm:$0xff] %vm1545, %v2342
      %2431 = vst.msk [vmem:[%s2407 + $0x111] sm:$0xff] %vm1545, %v2343
      %2432 = vst.msk [vmem:[%s2407 + $0x121] sm:$0xff] %vm1545, %v2344
      %2433 = vst.msk [vmem:[%s2407 + $0x129] sm:$0xff] %vm1545, %v2345
      %2434 = vst.msk [vmem:[%s2407 + $0x139] sm:$0xff] %vm1545, %v2346
      %2435 = vst.msk [vmem:[%s2407 + $0x141] sm:$0xff] %vm1545, %v2347
      %2436 = vst.msk [vmem:[%s2407 + $0x151] sm:$0xff] %vm1545, %v2348
      %2437 = vst.msk [vmem:[%s2407 + $0x159] sm:$0xff] %vm1545, %v2349
      %2438 = vst.msk [vmem:[%s2407 + $0x169] sm:$0xff] %vm1545, %v2350
      %2439 = vst.msk [vmem:[%s2407 + $0x171] sm:$0xff] %vm1545, %v2351
      %v2440 = vld [vmem:[#allocation2] sm:$0xff]
      %v2441 = vld [vmem:[#allocation2 + $0x8] sm:$0xff]
      %v2442 = vld [vmem:[#allocation2 + $0x18] sm:$0xff]
      %v2443 = vld [vmem:[#allocation2 + $0x20] sm:$0xff]
      %v2444 = vld [vmem:[#allocation2 + $0x30] sm:$0xff]
      %v2445 = vld [vmem:[#allocation2 + $0x38] sm:$0xff]
      %v2446 = vld [vmem:[#allocation2 + $0x48] sm:$0xff]
      %v2447 = vld [vmem:[#allocation2 + $0x50] sm:$0xff]
      %v2448 = vld [vmem:[#allocation2 + $0x60] sm:$0xff]
      %v2449 = vld [vmem:[#allocation2 + $0x68] sm:$0xff]
      %v2450 = vld [vmem:[#allocation2 + $0x78] sm:$0xff]
      %v2451 = vld [vmem:[#allocation2 + $0x80] sm:$0xff]
      %v2452 = vld [vmem:[#allocation2 + $0x90] sm:$0xff]
      %v2453 = vld [vmem:[#allocation2 + $0x98] sm:$0xff]
      %v2454 = vld [vmem:[#allocation2 + $0xa8] sm:$0xff]
      %v2455 = vld [vmem:[#allocation2 + $0xb0] sm:$0xff]
      %v2456 = vld [vmem:[#allocation2 + $0xc0] sm:$0xff]
      %v2457 = vld [vmem:[#allocation2 + $0xc8] sm:$0xff]
      %v2458 = vld [vmem:[#allocation2 + $0xd8] sm:$0xff]
      %v2459 = vld [vmem:[#allocation2 + $0xe0] sm:$0xff]
      %v2460 = vld [vmem:[#allocation2 + $0xf0] sm:$0xff]
      %v2461 = vld [vmem:[#allocation2 + $0xf8] sm:$0xff]
      %v2462 = vld [vmem:[#allocation2 + $0x108] sm:$0xff]
      %v2463 = vld [vmem:[#allocation2 + $0x110] sm:$0xff]
      %v2464 = vld [vmem:[#allocation2 + $0x120] sm:$0xff]
      %v2465 = vld [vmem:[#allocation2 + $0x128] sm:$0xff]
      %v2466 = vld [vmem:[#allocation2 + $0x138] sm:$0xff]
      %v2467 = vld [vmem:[#allocation2 + $0x140] sm:$0xff]
      %v2468 = vld [vmem:[#allocation2 + $0x150] sm:$0xff]
      %v2469 = vld [vmem:[#allocation2 + $0x158] sm:$0xff]
      %v2470 = vld [vmem:[#allocation2 + $0x168] sm:$0xff]
      %v2471 = vld [vmem:[#allocation2 + $0x170] sm:$0xff]
      %v2472 = vld [vmem:[#allocation2 + $0x1] sm:$0xff]
      %v2473 = vld [vmem:[#allocation2 + $0x9] sm:$0xff]
      %v2474 = vld [vmem:[#allocation2 + $0x19] sm:$0xff]
      %v2475 = vld [vmem:[#allocation2 + $0x21] sm:$0xff]
      %v2476 = vld [vmem:[#allocation2 + $0x31] sm:$0xff]
      %v2477 = vld [vmem:[#allocation2 + $0x39] sm:$0xff]
      %v2478 = vld [vmem:[#allocation2 + $0x49] sm:$0xff]
      %v2479 = vld [vmem:[#allocation2 + $0x51] sm:$0xff]
      %v2480 = vld [vmem:[#allocation2 + $0x61] sm:$0xff]
      %v2481 = vld [vmem:[#allocation2 + $0x69] sm:$0xff]
      %v2482 = vld [vmem:[#allocation2 + $0x79] sm:$0xff]
      %v2483 = vld [vmem:[#allocation2 + $0x81] sm:$0xff]
      %v2484 = vld [vmem:[#allocation2 + $0x91] sm:$0xff]
      %v2485 = vld [vmem:[#allocation2 + $0x99] sm:$0xff]
      %v2486 = vld [vmem:[#allocation2 + $0xa9] sm:$0xff]
      %v2487 = vld [vmem:[#allocation2 + $0xb1] sm:$0xff]
      %v2488 = vld [vmem:[#allocation2 + $0xc1] sm:$0xff]
      %v2489 = vld [vmem:[#allocation2 + $0xc9] sm:$0xff]
      %v2490 = vld [vmem:[#allocation2 + $0xd9] sm:$0xff]
      %v2491 = vld [vmem:[#allocation2 + $0xe1] sm:$0xff]
      %v2492 = vld [vmem:[#allocation2 + $0xf1] sm:$0xff]
      %v2493 = vld [vmem:[#allocation2 + $0xf9] sm:$0xff]
      %v2494 = vld [vmem:[#allocation2 + $0x109] sm:$0xff]
      %v2495 = vld [vmem:[#allocation2 + $0x111] sm:$0xff]
      %v2496 = vld [vmem:[#allocation2 + $0x121] sm:$0xff]
      %v2497 = vld [vmem:[#allocation2 + $0x129] sm:$0xff]
      %v2498 = vld [vmem:[#allocation2 + $0x139] sm:$0xff]
      %v2499 = vld [vmem:[#allocation2 + $0x141] sm:$0xff]
      %v2500 = vld [vmem:[#allocation2 + $0x151] sm:$0xff]
      %v2501 = vld [vmem:[#allocation2 + $0x159] sm:$0xff]
      %v2502 = vld [vmem:[#allocation2 + $0x169] sm:$0xff]
      %v2503 = vld [vmem:[#allocation2 + $0x171] sm:$0xff]
      %v2504 = vld [vmem:[#allocation2 + $0x2] sm:$0xff]
      %v2505 = vld [vmem:[#allocation2 + $0xa] sm:$0xff]
      %v2506 = vld [vmem:[#allocation2 + $0x1a] sm:$0xff]
      %v2507 = vld [vmem:[#allocation2 + $0x22] sm:$0xff]
      %v2508 = vld [vmem:[#allocation2 + $0x32] sm:$0xff]
      %v2509 = vld [vmem:[#allocation2 + $0x3a] sm:$0xff]
      %v2510 = vld [vmem:[#allocation2 + $0x4a] sm:$0xff]
      %v2511 = vld [vmem:[#allocation2 + $0x52] sm:$0xff]
      %v2512 = vld [vmem:[#allocation2 + $0x62] sm:$0xff]
      %v2513 = vld [vmem:[#allocation2 + $0x6a] sm:$0xff]
      %v2514 = vld [vmem:[#allocation2 + $0x7a] sm:$0xff]
      %v2515 = vld [vmem:[#allocation2 + $0x82] sm:$0xff]
      %v2516 = vld [vmem:[#allocation2 + $0x92] sm:$0xff]
      %v2517 = vld [vmem:[#allocation2 + $0x9a] sm:$0xff]
      %v2518 = vld [vmem:[#allocation2 + $0xaa] sm:$0xff]
      %v2519 = vld [vmem:[#allocation2 + $0xb2] sm:$0xff]
      %v2520 = vld [vmem:[#allocation2 + $0xc2] sm:$0xff]
      %v2521 = vld [vmem:[#allocation2 + $0xca] sm:$0xff]
      %v2522 = vld [vmem:[#allocation2 + $0xda] sm:$0xff]
      %v2523 = vld [vmem:[#allocation2 + $0xe2] sm:$0xff]
      %v2524 = vld [vmem:[#allocation2 + $0xf2] sm:$0xff]
      %v2525 = vld [vmem:[#allocation2 + $0xfa] sm:$0xff]
      %v2526 = vld [vmem:[#allocation2 + $0x10a] sm:$0xff]
      %v2527 = vld [vmem:[#allocation2 + $0x112] sm:$0xff]
      %v2528 = vld [vmem:[#allocation2 + $0x122] sm:$0xff]
      %v2529 = vld [vmem:[#allocation2 + $0x12a] sm:$0xff]
      %v2530 = vld [vmem:[#allocation2 + $0x13a] sm:$0xff]
      %v2531 = vld [vmem:[#allocation2 + $0x142] sm:$0xff]
      %v2532 = vld [vmem:[#allocation2 + $0x152] sm:$0xff]
      %v2533 = vld [vmem:[#allocation2 + $0x15a] sm:$0xff]
      %v2534 = vld [vmem:[#allocation2 + $0x16a] sm:$0xff]
      %v2535 = vld [vmem:[#allocation2 + $0x172] sm:$0xff]
      %v2536 = vld [vmem:[%s2407] sm:$0xff]
      %v2537 = vld [vmem:[%s2407 + $0x8] sm:$0xff]
      %v2538 = vld [vmem:[%s2407 + $0x18] sm:$0xff]
      %v2539 = vld [vmem:[%s2407 + $0x20] sm:$0xff]
      %v2540 = vld [vmem:[%s2407 + $0x30] sm:$0xff]
      %v2541 = vld [vmem:[%s2407 + $0x38] sm:$0xff]
      %v2542 = vld [vmem:[%s2407 + $0x48] sm:$0xff]
      %v2543 = vld [vmem:[%s2407 + $0x50] sm:$0xff]
      %v2544 = vld [vmem:[%s2407 + $0x60] sm:$0xff]
      %v2545 = vld [vmem:[%s2407 + $0x68] sm:$0xff]
      %v2546 = vld [vmem:[%s2407 + $0x78] sm:$0xff]
      %v2547 = vld [vmem:[%s2407 + $0x80] sm:$0xff]
      %v2548 = vld [vmem:[%s2407 + $0x90] sm:$0xff]
      %v2549 = vld [vmem:[%s2407 + $0x98] sm:$0xff]
      %v2550 = vld [vmem:[%s2407 + $0xa8] sm:$0xff]
      %v2551 = vld [vmem:[%s2407 + $0xb0] sm:$0xff]
      %v2552 = vld [vmem:[%s2407 + $0xc0] sm:$0xff]
      %v2553 = vld [vmem:[%s2407 + $0xc8] sm:$0xff]
      %v2554 = vld [vmem:[%s2407 + $0xd8] sm:$0xff]
      %v2555 = vld [vmem:[%s2407 + $0xe0] sm:$0xff]
      %v2556 = vld [vmem:[%s2407 + $0xf0] sm:$0xff]
      %v2557 = vld [vmem:[%s2407 + $0xf8] sm:$0xff]
      %v2558 = vld [vmem:[%s2407 + $0x108] sm:$0xff]
      %v2559 = vld [vmem:[%s2407 + $0x110] sm:$0xff]
      %v2560 = vld [vmem:[%s2407 + $0x120] sm:$0xff]
      %v2561 = vld [vmem:[%s2407 + $0x128] sm:$0xff]
      %v2562 = vld [vmem:[%s2407 + $0x138] sm:$0xff]
      %v2563 = vld [vmem:[%s2407 + $0x140] sm:$0xff]
      %v2564 = vld [vmem:[%s2407 + $0x150] sm:$0xff]
      %v2565 = vld [vmem:[%s2407 + $0x158] sm:$0xff]
      %v2566 = vld [vmem:[%s2407 + $0x168] sm:$0xff]
      %v2567 = vld [vmem:[%s2407 + $0x170] sm:$0xff]
      %v2568 = vld [vmem:[%s2407 + $0x1] sm:$0xff]
      %v2569 = vld [vmem:[%s2407 + $0x9] sm:$0xff]
      %v2570 = vld [vmem:[%s2407 + $0x19] sm:$0xff]
      %v2571 = vld [vmem:[%s2407 + $0x21] sm:$0xff]
      %v2572 = vld [vmem:[%s2407 + $0x31] sm:$0xff]
      %v2573 = vld [vmem:[%s2407 + $0x39] sm:$0xff]
      %v2574 = vld [vmem:[%s2407 + $0x49] sm:$0xff]
      %v2575 = vld [vmem:[%s2407 + $0x51] sm:$0xff]
      %v2576 = vld [vmem:[%s2407 + $0x61] sm:$0xff]
      %v2577 = vld [vmem:[%s2407 + $0x69] sm:$0xff]
      %v2578 = vld [vmem:[%s2407 + $0x79] sm:$0xff]
      %v2579 = vld [vmem:[%s2407 + $0x81] sm:$0xff]
      %v2580 = vld [vmem:[%s2407 + $0x91] sm:$0xff]
      %v2581 = vld [vmem:[%s2407 + $0x99] sm:$0xff]
      %v2582 = vld [vmem:[%s2407 + $0xa9] sm:$0xff]
      %v2583 = vld [vmem:[%s2407 + $0xb1] sm:$0xff]
      %v2584 = vld [vmem:[%s2407 + $0xc1] sm:$0xff]
      %v2585 = vld [vmem:[%s2407 + $0xc9] sm:$0xff]
      %v2586 = vld [vmem:[%s2407 + $0xd9] sm:$0xff]
      %v2587 = vld [vmem:[%s2407 + $0xe1] sm:$0xff]
      %v2588 = vld [vmem:[%s2407 + $0xf1] sm:$0xff]
      %v2589 = vld [vmem:[%s2407 + $0xf9] sm:$0xff]
      %v2590 = vld [vmem:[%s2407 + $0x109] sm:$0xff]
      %v2591 = vld [vmem:[%s2407 + $0x111] sm:$0xff]
      %v2592 = vld [vmem:[%s2407 + $0x121] sm:$0xff]
      %v2593 = vld [vmem:[%s2407 + $0x129] sm:$0xff]
      %v2594 = vld [vmem:[%s2407 + $0x139] sm:$0xff]
      %v2595 = vld [vmem:[%s2407 + $0x141] sm:$0xff]
      %v2596 = vld [vmem:[%s2407 + $0x151] sm:$0xff]
      %v2597 = vld [vmem:[%s2407 + $0x159] sm:$0xff]
      %v2598 = vld [vmem:[%s2407 + $0x169] sm:$0xff]
      %v2599 = vld [vmem:[%s2407 + $0x171] sm:$0xff]
      %v2600 = vld [vmem:[%s2407 + $0x2] sm:$0xff]
      %v2601 = vld [vmem:[%s2407 + $0xa] sm:$0xff]
      %v2602 = vld [vmem:[%s2407 + $0x1a] sm:$0xff]
      %v2603 = vld [vmem:[%s2407 + $0x22] sm:$0xff]
      %v2604 = vld [vmem:[%s2407 + $0x32] sm:$0xff]
      %v2605 = vld [vmem:[%s2407 + $0x3a] sm:$0xff]
      %v2606 = vld [vmem:[%s2407 + $0x4a] sm:$0xff]
      %v2607 = vld [vmem:[%s2407 + $0x52] sm:$0xff]
      %v2608 = vld [vmem:[%s2407 + $0x62] sm:$0xff]
      %v2609 = vld [vmem:[%s2407 + $0x6a] sm:$0xff]
      %v2610 = vld [vmem:[%s2407 + $0x7a] sm:$0xff]
      %v2611 = vld [vmem:[%s2407 + $0x82] sm:$0xff]
      %v2612 = vld [vmem:[%s2407 + $0x92] sm:$0xff]
      %v2613 = vld [vmem:[%s2407 + $0x9a] sm:$0xff]
      %v2614 = vld [vmem:[%s2407 + $0xaa] sm:$0xff]
      %v2615 = vld [vmem:[%s2407 + $0xb2] sm:$0xff]
      %v2616 = vld [vmem:[%s2407 + $0xc2] sm:$0xff]
      %v2617 = vld [vmem:[%s2407 + $0xca] sm:$0xff]
      %v2618 = vld [vmem:[%s2407 + $0xda] sm:$0xff]
      %v2619 = vld [vmem:[%s2407 + $0xe2] sm:$0xff]
      %v2620 = vld [vmem:[%s2407 + $0xf2] sm:$0xff]
      %v2621 = vld [vmem:[%s2407 + $0xfa] sm:$0xff]
      %v2622 = vld [vmem:[%s2407 + $0x10a] sm:$0xff]
      %v2623 = vld [vmem:[%s2407 + $0x112] sm:$0xff]
      %v2624 = vld [vmem:[%s2407 + $0x122] sm:$0xff]
      %v2625 = vld [vmem:[%s2407 + $0x12a] sm:$0xff]
      %v2626 = vld [vmem:[%s2407 + $0x13a] sm:$0xff]
      %v2627 = vld [vmem:[%s2407 + $0x142] sm:$0xff]
      %v2628 = vld [vmem:[%s2407 + $0x152] sm:$0xff]
      %v2629 = vld [vmem:[%s2407 + $0x15a] sm:$0xff]
      %v2630 = vld [vmem:[%s2407 + $0x16a] sm:$0xff]
      %v2631 = vld [vmem:[%s2407 + $0x172] sm:$0xff]
      %s2632 = scalar_lea.vmem [#allocation2], 48
      %v2633 = vld [vmem:[%s2632] sm:$0xff]
      %v2634 = vld [vmem:[%s2632 + $0x8] sm:$0xff]
      %v2635 = vld [vmem:[%s2632 + $0x18] sm:$0xff]
      %v2636 = vld [vmem:[%s2632 + $0x20] sm:$0xff]
      %v2637 = vld [vmem:[%s2632 + $0x30] sm:$0xff]
      %v2638 = vld [vmem:[%s2632 + $0x38] sm:$0xff]
      %v2639 = vld [vmem:[%s2632 + $0x48] sm:$0xff]
      %v2640 = vld [vmem:[%s2632 + $0x50] sm:$0xff]
      %v2641 = vld [vmem:[%s2632 + $0x60] sm:$0xff]
      %v2642 = vld [vmem:[%s2632 + $0x68] sm:$0xff]
      %v2643 = vld [vmem:[%s2632 + $0x78] sm:$0xff]
      %v2644 = vld [vmem:[%s2632 + $0x80] sm:$0xff]
      %v2645 = vld [vmem:[%s2632 + $0x90] sm:$0xff]
      %v2646 = vld [vmem:[%s2632 + $0x98] sm:$0xff]
      %v2647 = vld [vmem:[%s2632 + $0xa8] sm:$0xff]
      %v2648 = vld [vmem:[%s2632 + $0xb0] sm:$0xff]
      %v2649 = vld [vmem:[%s2632 + $0xc0] sm:$0xff]
      %v2650 = vld [vmem:[%s2632 + $0xc8] sm:$0xff]
      %v2651 = vld [vmem:[%s2632 + $0xd8] sm:$0xff]
      %v2652 = vld [vmem:[%s2632 + $0xe0] sm:$0xff]
      %v2653 = vld [vmem:[%s2632 + $0xf0] sm:$0xff]
      %v2654 = vld [vmem:[%s2632 + $0xf8] sm:$0xff]
      %v2655 = vld [vmem:[%s2632 + $0x108] sm:$0xff]
      %v2656 = vld [vmem:[%s2632 + $0x110] sm:$0xff]
      %v2657 = vld [vmem:[%s2632 + $0x120] sm:$0xff]
      %v2658 = vld [vmem:[%s2632 + $0x128] sm:$0xff]
      %v2659 = vld [vmem:[%s2632 + $0x138] sm:$0xff]
      %v2660 = vld [vmem:[%s2632 + $0x140] sm:$0xff]
      %v2661 = vld [vmem:[%s2632 + $0x150] sm:$0xff]
      %v2662 = vld [vmem:[%s2632 + $0x158] sm:$0xff]
      %v2663 = vld [vmem:[%s2632 + $0x168] sm:$0xff]
      %v2664 = vld [vmem:[%s2632 + $0x170] sm:$0xff]
      %v2665 = vld [vmem:[%s2632 + $0x1] sm:$0xff]
      %v2666 = vld [vmem:[%s2632 + $0x9] sm:$0xff]
      %v2667 = vld [vmem:[%s2632 + $0x19] sm:$0xff]
      %v2668 = vld [vmem:[%s2632 + $0x21] sm:$0xff]
      %v2669 = vld [vmem:[%s2632 + $0x31] sm:$0xff]
      %v2670 = vld [vmem:[%s2632 + $0x39] sm:$0xff]
      %v2671 = vld [vmem:[%s2632 + $0x49] sm:$0xff]
      %v2672 = vld [vmem:[%s2632 + $0x51] sm:$0xff]
      %v2673 = vld [vmem:[%s2632 + $0x61] sm:$0xff]
      %v2674 = vld [vmem:[%s2632 + $0x69] sm:$0xff]
      %v2675 = vld [vmem:[%s2632 + $0x79] sm:$0xff]
      %v2676 = vld [vmem:[%s2632 + $0x81] sm:$0xff]
      %v2677 = vld [vmem:[%s2632 + $0x91] sm:$0xff]
      %v2678 = vld [vmem:[%s2632 + $0x99] sm:$0xff]
      %v2679 = vld [vmem:[%s2632 + $0xa9] sm:$0xff]
      %v2680 = vld [vmem:[%s2632 + $0xb1] sm:$0xff]
      %v2681 = vld [vmem:[%s2632 + $0xc1] sm:$0xff]
      %v2682 = vld [vmem:[%s2632 + $0xc9] sm:$0xff]
      %v2683 = vld [vmem:[%s2632 + $0xd9] sm:$0xff]
      %v2684 = vld [vmem:[%s2632 + $0xe1] sm:$0xff]
      %v2685 = vld [vmem:[%s2632 + $0xf1] sm:$0xff]
      %v2686 = vld [vmem:[%s2632 + $0xf9] sm:$0xff]
      %v2687 = vld [vmem:[%s2632 + $0x109] sm:$0xff]
      %v2688 = vld [vmem:[%s2632 + $0x111] sm:$0xff]
      %v2689 = vld [vmem:[%s2632 + $0x121] sm:$0xff]
      %v2690 = vld [vmem:[%s2632 + $0x129] sm:$0xff]
      %v2691 = vld [vmem:[%s2632 + $0x139] sm:$0xff]
      %v2692 = vld [vmem:[%s2632 + $0x141] sm:$0xff]
      %v2693 = vld [vmem:[%s2632 + $0x151] sm:$0xff]
      %v2694 = vld [vmem:[%s2632 + $0x159] sm:$0xff]
      %v2695 = vld [vmem:[%s2632 + $0x169] sm:$0xff]
      %v2696 = vld [vmem:[%s2632 + $0x171] sm:$0xff]
      %v2697 = vld [vmem:[%s2632 + $0x2] sm:$0xff]
      %v2698 = vld [vmem:[%s2632 + $0xa] sm:$0xff]
      %v2699 = vld [vmem:[%s2632 + $0x1a] sm:$0xff]
      %v2700 = vld [vmem:[%s2632 + $0x22] sm:$0xff]
      %v2701 = vld [vmem:[%s2632 + $0x32] sm:$0xff]
      %v2702 = vld [vmem:[%s2632 + $0x3a] sm:$0xff]
      %v2703 = vld [vmem:[%s2632 + $0x4a] sm:$0xff]
      %v2704 = vld [vmem:[%s2632 + $0x52] sm:$0xff]
      %v2705 = vld [vmem:[%s2632 + $0x62] sm:$0xff]
      %v2706 = vld [vmem:[%s2632 + $0x6a] sm:$0xff]
      %v2707 = vld [vmem:[%s2632 + $0x7a] sm:$0xff]
      %v2708 = vld [vmem:[%s2632 + $0x82] sm:$0xff]
      %v2709 = vld [vmem:[%s2632 + $0x92] sm:$0xff]
      %v2710 = vld [vmem:[%s2632 + $0x9a] sm:$0xff]
      %v2711 = vld [vmem:[%s2632 + $0xaa] sm:$0xff]
      %v2712 = vld [vmem:[%s2632 + $0xb2] sm:$0xff]
      %v2713 = vld [vmem:[%s2632 + $0xc2] sm:$0xff]
      %v2714 = vld [vmem:[%s2632 + $0xca] sm:$0xff]
      %v2715 = vld [vmem:[%s2632 + $0xda] sm:$0xff]
      %v2716 = vld [vmem:[%s2632 + $0xe2] sm:$0xff]
      %v2717 = vld [vmem:[%s2632 + $0xf2] sm:$0xff]
      %v2718 = vld [vmem:[%s2632 + $0xfa] sm:$0xff]
      %v2719 = vld [vmem:[%s2632 + $0x10a] sm:$0xff]
      %v2720 = vld [vmem:[%s2632 + $0x112] sm:$0xff]
      %v2721 = vld [vmem:[%s2632 + $0x122] sm:$0xff]
      %v2722 = vld [vmem:[%s2632 + $0x12a] sm:$0xff]
      %v2723 = vld [vmem:[%s2632 + $0x13a] sm:$0xff]
      %v2724 = vld [vmem:[%s2632 + $0x142] sm:$0xff]
      %v2725 = vld [vmem:[%s2632 + $0x152] sm:$0xff]
      %v2726 = vld [vmem:[%s2632 + $0x15a] sm:$0xff]
      %v2727 = vld [vmem:[%s2632 + $0x16a] sm:$0xff]
      %v2728 = vld [vmem:[%s2632 + $0x172] sm:$0xff]
      %2761 = vrot.lane.b32.xlu0 %v2472, 16
      %v2762 = vpop.permute.xlu0 %2761
      %2763 = vrot.lane.b32.xlu0 %v2473, 16
      %v2764 = vpop.permute.xlu0 %2763
      %2765 = vrot.lane.b32.xlu0 %v2474, 16
      %v2766 = vpop.permute.xlu0 %2765
      %2767 = vrot.lane.b32.xlu0 %v2475, 16
      %v2768 = vpop.permute.xlu0 %2767
      %2769 = vrot.lane.b32.xlu0 %v2476, 16
      %v2770 = vpop.permute.xlu0 %2769
      %2771 = vrot.lane.b32.xlu0 %v2477, 16
      %v2772 = vpop.permute.xlu0 %2771
      %2773 = vrot.lane.b32.xlu0 %v2478, 16
      %v2774 = vpop.permute.xlu0 %2773
      %2775 = vrot.lane.b32.xlu0 %v2479, 16
      %v2776 = vpop.permute.xlu0 %2775
      %2777 = vrot.lane.b32.xlu0 %v2480, 16
      %v2778 = vpop.permute.xlu0 %2777
      %2779 = vrot.lane.b32.xlu0 %v2481, 16
      %v2780 = vpop.permute.xlu0 %2779
      %2781 = vrot.lane.b32.xlu0 %v2482, 16
      %v2782 = vpop.permute.xlu0 %2781
      %2783 = vrot.lane.b32.xlu0 %v2483, 16
      %v2784 = vpop.permute.xlu0 %2783
      %2785 = vrot.lane.b32.xlu0 %v2484, 16
      %v2786 = vpop.permute.xlu0 %2785
      %2787 = vrot.lane.b32.xlu0 %v2485, 16
      %v2788 = vpop.permute.xlu0 %2787
      %2789 = vrot.lane.b32.xlu0 %v2486, 16
      %v2790 = vpop.permute.xlu0 %2789
      %2791 = vrot.lane.b32.xlu0 %v2487, 16
      %v2792 = vpop.permute.xlu0 %2791
      %2793 = vrot.lane.b32.xlu0 %v2488, 16
      %v2794 = vpop.permute.xlu0 %2793
      %2795 = vrot.lane.b32.xlu0 %v2489, 16
      %v2796 = vpop.permute.xlu0 %2795
      %2797 = vrot.lane.b32.xlu0 %v2490, 16
      %v2798 = vpop.permute.xlu0 %2797
      %2799 = vrot.lane.b32.xlu0 %v2491, 16
      %v2800 = vpop.permute.xlu0 %2799
      %2801 = vrot.lane.b32.xlu0 %v2492, 16
      %v2802 = vpop.permute.xlu0 %2801
      %2803 = vrot.lane.b32.xlu0 %v2493, 16
      %v2804 = vpop.permute.xlu0 %2803
      %2805 = vrot.lane.b32.xlu0 %v2494, 16
      %v2806 = vpop.permute.xlu0 %2805
      %2807 = vrot.lane.b32.xlu0 %v2495, 16
      %v2808 = vpop.permute.xlu0 %2807
      %2809 = vrot.lane.b32.xlu0 %v2496, 16
      %v2810 = vpop.permute.xlu0 %2809
      %2811 = vrot.lane.b32.xlu0 %v2497, 16
      %v2812 = vpop.permute.xlu0 %2811
      %2813 = vrot.lane.b32.xlu0 %v2498, 16
      %v2814 = vpop.permute.xlu0 %2813
      %2815 = vrot.lane.b32.xlu0 %v2499, 16
      %v2816 = vpop.permute.xlu0 %2815
      %2817 = vrot.lane.b32.xlu0 %v2500, 16
      %v2818 = vpop.permute.xlu0 %2817
      %2819 = vrot.lane.b32.xlu0 %v2501, 16
      %v2820 = vpop.permute.xlu0 %2819
      %2821 = vrot.lane.b32.xlu0 %v2502, 16
      %v2822 = vpop.permute.xlu0 %2821
      %2823 = vrot.lane.b32.xlu0 %v2503, 16
      %v2824 = vpop.permute.xlu0 %2823
      %2889 = vrot.lane.b32.xlu0 %v2504, 32
      %v2890 = vpop.permute.xlu0 %2889
      %2891 = vrot.lane.b32.xlu0 %v2505, 32
      %v2892 = vpop.permute.xlu0 %2891
      %2893 = vrot.lane.b32.xlu0 %v2506, 32
      %v2894 = vpop.permute.xlu0 %2893
      %2895 = vrot.lane.b32.xlu0 %v2507, 32
      %v2896 = vpop.permute.xlu0 %2895
      %2897 = vrot.lane.b32.xlu0 %v2508, 32
      %v2898 = vpop.permute.xlu0 %2897
      %2899 = vrot.lane.b32.xlu0 %v2509, 32
      %v2900 = vpop.permute.xlu0 %2899
      %2901 = vrot.lane.b32.xlu0 %v2510, 32
      %v2902 = vpop.permute.xlu0 %2901
      %2903 = vrot.lane.b32.xlu0 %v2511, 32
      %v2904 = vpop.permute.xlu0 %2903
      %2905 = vrot.lane.b32.xlu0 %v2512, 32
      %v2906 = vpop.permute.xlu0 %2905
      %2907 = vrot.lane.b32.xlu0 %v2513, 32
      %v2908 = vpop.permute.xlu0 %2907
      %2909 = vrot.lane.b32.xlu0 %v2514, 32
      %v2910 = vpop.permute.xlu0 %2909
      %2911 = vrot.lane.b32.xlu0 %v2515, 32
      %v2912 = vpop.permute.xlu0 %2911
      %2913 = vrot.lane.b32.xlu0 %v2516, 32
      %v2914 = vpop.permute.xlu0 %2913
      %2915 = vrot.lane.b32.xlu0 %v2517, 32
      %v2916 = vpop.permute.xlu0 %2915
      %2917 = vrot.lane.b32.xlu0 %v2518, 32
      %v2918 = vpop.permute.xlu0 %2917
      %2919 = vrot.lane.b32.xlu0 %v2519, 32
      %v2920 = vpop.permute.xlu0 %2919
      %2921 = vrot.lane.b32.xlu0 %v2520, 32
      %v2922 = vpop.permute.xlu0 %2921
      %2923 = vrot.lane.b32.xlu0 %v2521, 32
      %v2924 = vpop.permute.xlu0 %2923
      %2925 = vrot.lane.b32.xlu0 %v2522, 32
      %v2926 = vpop.permute.xlu0 %2925
      %2927 = vrot.lane.b32.xlu0 %v2523, 32
      %v2928 = vpop.permute.xlu0 %2927
      %2929 = vrot.lane.b32.xlu0 %v2524, 32
      %v2930 = vpop.permute.xlu0 %2929
      %2931 = vrot.lane.b32.xlu0 %v2525, 32
      %v2932 = vpop.permute.xlu0 %2931
      %2933 = vrot.lane.b32.xlu0 %v2526, 32
      %v2934 = vpop.permute.xlu0 %2933
      %2935 = vrot.lane.b32.xlu0 %v2527, 32
      %v2936 = vpop.permute.xlu0 %2935
      %2937 = vrot.lane.b32.xlu0 %v2528, 32
      %v2938 = vpop.permute.xlu0 %2937
      %2939 = vrot.lane.b32.xlu0 %v2529, 32
      %v2940 = vpop.permute.xlu0 %2939
      %2941 = vrot.lane.b32.xlu0 %v2530, 32
      %v2942 = vpop.permute.xlu0 %2941
      %2943 = vrot.lane.b32.xlu0 %v2531, 32
      %v2944 = vpop.permute.xlu0 %2943
      %2945 = vrot.lane.b32.xlu0 %v2532, 32
      %v2946 = vpop.permute.xlu0 %2945
      %2947 = vrot.lane.b32.xlu0 %v2533, 32
      %v2948 = vpop.permute.xlu0 %2947
      %2949 = vrot.lane.b32.xlu0 %v2534, 32
      %v2950 = vpop.permute.xlu0 %2949
      %2951 = vrot.lane.b32.xlu0 %v2535, 32
      %v2952 = vpop.permute.xlu0 %2951
      %3017 = vrot.lane.b32.xlu0 %v2536, 48
      %v3018 = vpop.permute.xlu0 %3017
      %3019 = vrot.lane.b32.xlu0 %v2537, 48
      %v3020 = vpop.permute.xlu0 %3019
      %3021 = vrot.lane.b32.xlu0 %v2538, 48
      %v3022 = vpop.permute.xlu0 %3021
      %3023 = vrot.lane.b32.xlu0 %v2539, 48
      %v3024 = vpop.permute.xlu0 %3023
      %3025 = vrot.lane.b32.xlu0 %v2540, 48
      %v3026 = vpop.permute.xlu0 %3025
      %3027 = vrot.lane.b32.xlu0 %v2541, 48
      %v3028 = vpop.permute.xlu0 %3027
      %3029 = vrot.lane.b32.xlu0 %v2542, 48
      %v3030 = vpop.permute.xlu0 %3029
      %3031 = vrot.lane.b32.xlu0 %v2543, 48
      %v3032 = vpop.permute.xlu0 %3031
      %3033 = vrot.lane.b32.xlu0 %v2544, 48
      %v3034 = vpop.permute.xlu0 %3033
      %3035 = vrot.lane.b32.xlu0 %v2545, 48
      %v3036 = vpop.permute.xlu0 %3035
      %3037 = vrot.lane.b32.xlu0 %v2546, 48
      %v3038 = vpop.permute.xlu0 %3037
      %3039 = vrot.lane.b32.xlu0 %v2547, 48
      %v3040 = vpop.permute.xlu0 %3039
      %3041 = vrot.lane.b32.xlu0 %v2548, 48
      %v3042 = vpop.permute.xlu0 %3041
      %3043 = vrot.lane.b32.xlu0 %v2549, 48
      %v3044 = vpop.permute.xlu0 %3043
      %3045 = vrot.lane.b32.xlu0 %v2550, 48
      %v3046 = vpop.permute.xlu0 %3045
      %3047 = vrot.lane.b32.xlu0 %v2551, 48
      %v3048 = vpop.permute.xlu0 %3047
      %3049 = vrot.lane.b32.xlu0 %v2552, 48
      %v3050 = vpop.permute.xlu0 %3049
      %3051 = vrot.lane.b32.xlu0 %v2553, 48
      %v3052 = vpop.permute.xlu0 %3051
      %3053 = vrot.lane.b32.xlu0 %v2554, 48
      %v3054 = vpop.permute.xlu0 %3053
      %3055 = vrot.lane.b32.xlu0 %v2555, 48
      %v3056 = vpop.permute.xlu0 %3055
      %3057 = vrot.lane.b32.xlu0 %v2556, 48
      %v3058 = vpop.permute.xlu0 %3057
      %3059 = vrot.lane.b32.xlu0 %v2557, 48
      %v3060 = vpop.permute.xlu0 %3059
      %3061 = vrot.lane.b32.xlu0 %v2558, 48
      %v3062 = vpop.permute.xlu0 %3061
      %3063 = vrot.lane.b32.xlu0 %v2559, 48
      %v3064 = vpop.permute.xlu0 %3063
      %3065 = vrot.lane.b32.xlu0 %v2560, 48
      %v3066 = vpop.permute.xlu0 %3065
      %3067 = vrot.lane.b32.xlu0 %v2561, 48
      %v3068 = vpop.permute.xlu0 %3067
      %3069 = vrot.lane.b32.xlu0 %v2562, 48
      %v3070 = vpop.permute.xlu0 %3069
      %3071 = vrot.lane.b32.xlu0 %v2563, 48
      %v3072 = vpop.permute.xlu0 %3071
      %3073 = vrot.lane.b32.xlu0 %v2564, 48
      %v3074 = vpop.permute.xlu0 %3073
      %3075 = vrot.lane.b32.xlu0 %v2565, 48
      %v3076 = vpop.permute.xlu0 %3075
      %3077 = vrot.lane.b32.xlu0 %v2566, 48
      %v3078 = vpop.permute.xlu0 %3077
      %3079 = vrot.lane.b32.xlu0 %v2567, 48
      %v3080 = vpop.permute.xlu0 %3079
      %3145 = vrot.lane.b32.xlu0 %v2568, 64
      %v3146 = vpop.permute.xlu0 %3145
      %3147 = vrot.lane.b32.xlu0 %v2569, 64
      %v3148 = vpop.permute.xlu0 %3147
      %3149 = vrot.lane.b32.xlu0 %v2570, 64
      %v3150 = vpop.permute.xlu0 %3149
      %3151 = vrot.lane.b32.xlu0 %v2571, 64
      %v3152 = vpop.permute.xlu0 %3151
      %3153 = vrot.lane.b32.xlu0 %v2572, 64
      %v3154 = vpop.permute.xlu0 %3153
      %3155 = vrot.lane.b32.xlu0 %v2573, 64
      %v3156 = vpop.permute.xlu0 %3155
      %3157 = vrot.lane.b32.xlu0 %v2574, 64
      %v3158 = vpop.permute.xlu0 %3157
      %3159 = vrot.lane.b32.xlu0 %v2575, 64
      %v3160 = vpop.permute.xlu0 %3159
      %3161 = vrot.lane.b32.xlu0 %v2576, 64
      %v3162 = vpop.permute.xlu0 %3161
      %3163 = vrot.lane.b32.xlu0 %v2577, 64
      %v3164 = vpop.permute.xlu0 %3163
      %3165 = vrot.lane.b32.xlu0 %v2578, 64
      %v3166 = vpop.permute.xlu0 %3165
      %3167 = vrot.lane.b32.xlu0 %v2579, 64
      %v3168 = vpop.permute.xlu0 %3167
      %3169 = vrot.lane.b32.xlu0 %v2580, 64
      %v3170 = vpop.permute.xlu0 %3169
      %3171 = vrot.lane.b32.xlu0 %v2581, 64
      %v3172 = vpop.permute.xlu0 %3171
      %3173 = vrot.lane.b32.xlu0 %v2582, 64
      %v3174 = vpop.permute.xlu0 %3173
      %3175 = vrot.lane.b32.xlu0 %v2583, 64
      %v3176 = vpop.permute.xlu0 %3175
      %3177 = vrot.lane.b32.xlu0 %v2584, 64
      %v3178 = vpop.permute.xlu0 %3177
      %3179 = vrot.lane.b32.xlu0 %v2585, 64
      %v3180 = vpop.permute.xlu0 %3179
      %3181 = vrot.lane.b32.xlu0 %v2586, 64
      %v3182 = vpop.permute.xlu0 %3181
      %3183 = vrot.lane.b32.xlu0 %v2587, 64
      %v3184 = vpop.permute.xlu0 %3183
      %3185 = vrot.lane.b32.xlu0 %v2588, 64
      %v3186 = vpop.permute.xlu0 %3185
      %3187 = vrot.lane.b32.xlu0 %v2589, 64
      %v3188 = vpop.permute.xlu0 %3187
      %3189 = vrot.lane.b32.xlu0 %v2590, 64
      %v3190 = vpop.permute.xlu0 %3189
      %3191 = vrot.lane.b32.xlu0 %v2591, 64
      %v3192 = vpop.permute.xlu0 %3191
      %3193 = vrot.lane.b32.xlu0 %v2592, 64
      %v3194 = vpop.permute.xlu0 %3193
      %3195 = vrot.lane.b32.xlu0 %v2593, 64
      %v3196 = vpop.permute.xlu0 %3195
      %3197 = vrot.lane.b32.xlu0 %v2594, 64
      %v3198 = vpop.permute.xlu0 %3197
      %3199 = vrot.lane.b32.xlu0 %v2595, 64
      %v3200 = vpop.permute.xlu0 %3199
      %3201 = vrot.lane.b32.xlu0 %v2596, 64
      %v3202 = vpop.permute.xlu0 %3201
      %3203 = vrot.lane.b32.xlu0 %v2597, 64
      %v3204 = vpop.permute.xlu0 %3203
      %3205 = vrot.lane.b32.xlu0 %v2598, 64
      %v3206 = vpop.permute.xlu0 %3205
      %3207 = vrot.lane.b32.xlu0 %v2599, 64
      %v3208 = vpop.permute.xlu0 %3207
      %3273 = vrot.lane.b32.xlu0 %v2600, 80
      %v3274 = vpop.permute.xlu0 %3273
      %3275 = vrot.lane.b32.xlu0 %v2601, 80
      %v3276 = vpop.permute.xlu0 %3275
      %3277 = vrot.lane.b32.xlu0 %v2602, 80
      %v3278 = vpop.permute.xlu0 %3277
      %3279 = vrot.lane.b32.xlu0 %v2603, 80
      %v3280 = vpop.permute.xlu0 %3279
      %3281 = vrot.lane.b32.xlu0 %v2604, 80
      %v3282 = vpop.permute.xlu0 %3281
      %3283 = vrot.lane.b32.xlu0 %v2605, 80
      %v3284 = vpop.permute.xlu0 %3283
      %3285 = vrot.lane.b32.xlu0 %v2606, 80
      %v3286 = vpop.permute.xlu0 %3285
      %3287 = vrot.lane.b32.xlu0 %v2607, 80
      %v3288 = vpop.permute.xlu0 %3287
      %3289 = vrot.lane.b32.xlu0 %v2608, 80
      %v3290 = vpop.permute.xlu0 %3289
      %3291 = vrot.lane.b32.xlu0 %v2609, 80
      %v3292 = vpop.permute.xlu0 %3291
      %3293 = vrot.lane.b32.xlu0 %v2610, 80
      %v3294 = vpop.permute.xlu0 %3293
      %3295 = vrot.lane.b32.xlu0 %v2611, 80
      %v3296 = vpop.permute.xlu0 %3295
      %3297 = vrot.lane.b32.xlu0 %v2612, 80
      %v3298 = vpop.permute.xlu0 %3297
      %3299 = vrot.lane.b32.xlu0 %v2613, 80
      %v3300 = vpop.permute.xlu0 %3299
      %3301 = vrot.lane.b32.xlu0 %v2614, 80
      %v3302 = vpop.permute.xlu0 %3301
      %3303 = vrot.lane.b32.xlu0 %v2615, 80
      %v3304 = vpop.permute.xlu0 %3303
      %3305 = vrot.lane.b32.xlu0 %v2616, 80
      %v3306 = vpop.permute.xlu0 %3305
      %3307 = vrot.lane.b32.xlu0 %v2617, 80
      %v3308 = vpop.permute.xlu0 %3307
      %3309 = vrot.lane.b32.xlu0 %v2618, 80
      %v3310 = vpop.permute.xlu0 %3309
      %3311 = vrot.lane.b32.xlu0 %v2619, 80
      %v3312 = vpop.permute.xlu0 %3311
      %3313 = vrot.lane.b32.xlu0 %v2620, 80
      %v3314 = vpop.permute.xlu0 %3313
      %3315 = vrot.lane.b32.xlu0 %v2621, 80
      %v3316 = vpop.permute.xlu0 %3315
      %3317 = vrot.lane.b32.xlu0 %v2622, 80
      %v3318 = vpop.permute.xlu0 %3317
      %3319 = vrot.lane.b32.xlu0 %v2623, 80
      %v3320 = vpop.permute.xlu0 %3319
      %3321 = vrot.lane.b32.xlu0 %v2624, 80
      %v3322 = vpop.permute.xlu0 %3321
      %3323 = vrot.lane.b32.xlu0 %v2625, 80
      %v3324 = vpop.permute.xlu0 %3323
      %3325 = vrot.lane.b32.xlu0 %v2626, 80
      %v3326 = vpop.permute.xlu0 %3325
      %3327 = vrot.lane.b32.xlu0 %v2627, 80
      %v3328 = vpop.permute.xlu0 %3327
      %3329 = vrot.lane.b32.xlu0 %v2628, 80
      %v3330 = vpop.permute.xlu0 %3329
      %3331 = vrot.lane.b32.xlu0 %v2629, 80
      %v3332 = vpop.permute.xlu0 %3331
      %3333 = vrot.lane.b32.xlu0 %v2630, 80
      %v3334 = vpop.permute.xlu0 %3333
      %3335 = vrot.lane.b32.xlu0 %v2631, 80
      %v3336 = vpop.permute.xlu0 %3335
      %3401 = vrot.lane.b32.xlu0 %v2633, 96
      %v3402 = vpop.permute.xlu0 %3401
      %3403 = vrot.lane.b32.xlu0 %v2634, 96
      %v3404 = vpop.permute.xlu0 %3403
      %3405 = vrot.lane.b32.xlu0 %v2635, 96
      %v3406 = vpop.permute.xlu0 %3405
      %3407 = vrot.lane.b32.xlu0 %v2636, 96
      %v3408 = vpop.permute.xlu0 %3407
      %3409 = vrot.lane.b32.xlu0 %v2637, 96
      %v3410 = vpop.permute.xlu0 %3409
      %3411 = vrot.lane.b32.xlu0 %v2638, 96
      %v3412 = vpop.permute.xlu0 %3411
      %3413 = vrot.lane.b32.xlu0 %v2639, 96
      %v3414 = vpop.permute.xlu0 %3413
      %3415 = vrot.lane.b32.xlu0 %v2640, 96
      %v3416 = vpop.permute.xlu0 %3415
      %3417 = vrot.lane.b32.xlu0 %v2641, 96
      %v3418 = vpop.permute.xlu0 %3417
      %3419 = vrot.lane.b32.xlu0 %v2642, 96
      %v3420 = vpop.permute.xlu0 %3419
      %3421 = vrot.lane.b32.xlu0 %v2643, 96
      %v3422 = vpop.permute.xlu0 %3421
      %3423 = vrot.lane.b32.xlu0 %v2644, 96
      %v3424 = vpop.permute.xlu0 %3423
      %3425 = vrot.lane.b32.xlu0 %v2645, 96
      %v3426 = vpop.permute.xlu0 %3425
      %3427 = vrot.lane.b32.xlu0 %v2646, 96
      %v3428 = vpop.permute.xlu0 %3427
      %3429 = vrot.lane.b32.xlu0 %v2647, 96
      %v3430 = vpop.permute.xlu0 %3429
      %3431 = vrot.lane.b32.xlu0 %v2648, 96
      %v3432 = vpop.permute.xlu0 %3431
      %3433 = vrot.lane.b32.xlu0 %v2649, 96
      %v3434 = vpop.permute.xlu0 %3433
      %3435 = vrot.lane.b32.xlu0 %v2650, 96
      %v3436 = vpop.permute.xlu0 %3435
      %3437 = vrot.lane.b32.xlu0 %v2651, 96
      %v3438 = vpop.permute.xlu0 %3437
      %3439 = vrot.lane.b32.xlu0 %v2652, 96
      %v3440 = vpop.permute.xlu0 %3439
      %3441 = vrot.lane.b32.xlu0 %v2653, 96
      %v3442 = vpop.permute.xlu0 %3441
      %3443 = vrot.lane.b32.xlu0 %v2654, 96
      %v3444 = vpop.permute.xlu0 %3443
      %3445 = vrot.lane.b32.xlu0 %v2655, 96
      %v3446 = vpop.permute.xlu0 %3445
      %3447 = vrot.lane.b32.xlu0 %v2656, 96
      %v3448 = vpop.permute.xlu0 %3447
      %3449 = vrot.lane.b32.xlu0 %v2657, 96
      %v3450 = vpop.permute.xlu0 %3449
      %3451 = vrot.lane.b32.xlu0 %v2658, 96
      %v3452 = vpop.permute.xlu0 %3451
      %3453 = vrot.lane.b32.xlu0 %v2659, 96
      %v3454 = vpop.permute.xlu0 %3453
      %3455 = vrot.lane.b32.xlu0 %v2660, 96
      %v3456 = vpop.permute.xlu0 %3455
      %3457 = vrot.lane.b32.xlu0 %v2661, 96
      %v3458 = vpop.permute.xlu0 %3457
      %3459 = vrot.lane.b32.xlu0 %v2662, 96
      %v3460 = vpop.permute.xlu0 %3459
      %3461 = vrot.lane.b32.xlu0 %v2663, 96
      %v3462 = vpop.permute.xlu0 %3461
      %3463 = vrot.lane.b32.xlu0 %v2664, 96
      %v3464 = vpop.permute.xlu0 %3463
      %3529 = vrot.lane.b32.xlu0 %v2665, 112
      %v3530 = vpop.permute.xlu0 %3529
      %3531 = vrot.lane.b32.xlu0 %v2666, 112
      %v3532 = vpop.permute.xlu0 %3531
      %3533 = vrot.lane.b32.xlu0 %v2667, 112
      %v3534 = vpop.permute.xlu0 %3533
      %3535 = vrot.lane.b32.xlu0 %v2668, 112
      %v3536 = vpop.permute.xlu0 %3535
      %3537 = vrot.lane.b32.xlu0 %v2669, 112
      %v3538 = vpop.permute.xlu0 %3537
      %3539 = vrot.lane.b32.xlu0 %v2670, 112
      %v3540 = vpop.permute.xlu0 %3539
      %3541 = vrot.lane.b32.xlu0 %v2671, 112
      %v3542 = vpop.permute.xlu0 %3541
      %3543 = vrot.lane.b32.xlu0 %v2672, 112
      %v3544 = vpop.permute.xlu0 %3543
      %3545 = vrot.lane.b32.xlu0 %v2673, 112
      %v3546 = vpop.permute.xlu0 %3545
      %3547 = vrot.lane.b32.xlu0 %v2674, 112
      %v3548 = vpop.permute.xlu0 %3547
      %3549 = vrot.lane.b32.xlu0 %v2675, 112
      %v3550 = vpop.permute.xlu0 %3549
      %3551 = vrot.lane.b32.xlu0 %v2676, 112
      %v3552 = vpop.permute.xlu0 %3551
      %3553 = vrot.lane.b32.xlu0 %v2677, 112
      %v3554 = vpop.permute.xlu0 %3553
      %3555 = vrot.lane.b32.xlu0 %v2678, 112
      %v3556 = vpop.permute.xlu0 %3555
      %3557 = vrot.lane.b32.xlu0 %v2679, 112
      %v3558 = vpop.permute.xlu0 %3557
      %3559 = vrot.lane.b32.xlu0 %v2680, 112
      %v3560 = vpop.permute.xlu0 %3559
      %3561 = vrot.lane.b32.xlu0 %v2681, 112
      %v3562 = vpop.permute.xlu0 %3561
      %3563 = vrot.lane.b32.xlu0 %v2682, 112
      %v3564 = vpop.permute.xlu0 %3563
      %3565 = vrot.lane.b32.xlu0 %v2683, 112
      %v3566 = vpop.permute.xlu0 %3565
      %3567 = vrot.lane.b32.xlu0 %v2684, 112
      %v3568 = vpop.permute.xlu0 %3567
      %3569 = vrot.lane.b32.xlu0 %v2685, 112
      %v3570 = vpop.permute.xlu0 %3569
      %3571 = vrot.lane.b32.xlu0 %v2686, 112
      %v3572 = vpop.permute.xlu0 %3571
      %3573 = vrot.lane.b32.xlu0 %v2687, 112
      %v3574 = vpop.permute.xlu0 %3573
      %3575 = vrot.lane.b32.xlu0 %v2688, 112
      %v3576 = vpop.permute.xlu0 %3575
      %3577 = vrot.lane.b32.xlu0 %v2689, 112
      %v3578 = vpop.permute.xlu0 %3577
      %3579 = vrot.lane.b32.xlu0 %v2690, 112
      %v3580 = vpop.permute.xlu0 %3579
      %3581 = vrot.lane.b32.xlu0 %v2691, 112
      %v3582 = vpop.permute.xlu0 %3581
      %3583 = vrot.lane.b32.xlu0 %v2692, 112
      %v3584 = vpop.permute.xlu0 %3583
      %3585 = vrot.lane.b32.xlu0 %v2693, 112
      %v3586 = vpop.permute.xlu0 %3585
      %3587 = vrot.lane.b32.xlu0 %v2694, 112
      %v3588 = vpop.permute.xlu0 %3587
      %3589 = vrot.lane.b32.xlu0 %v2695, 112
      %v3590 = vpop.permute.xlu0 %3589
      %3591 = vrot.lane.b32.xlu0 %v2696, 112
      %v3592 = vpop.permute.xlu0 %3591
      %v3625 = vsel %vm1545, %v2440, %v2762
      %v3626 = vsel %vm1545, %v2441, %v2764
      %v3627 = vsel %vm1545, %v2442, %v2766
      %v3628 = vsel %vm1545, %v2443, %v2768
      %v3629 = vsel %vm1545, %v2444, %v2770
      %v3630 = vsel %vm1545, %v2445, %v2772
      %v3631 = vsel %vm1545, %v2446, %v2774
      %v3632 = vsel %vm1545, %v2447, %v2776
      %v3633 = vsel %vm1545, %v2448, %v2778
      %v3634 = vsel %vm1545, %v2449, %v2780
      %v3635 = vsel %vm1545, %v2450, %v2782
      %v3636 = vsel %vm1545, %v2451, %v2784
      %v3637 = vsel %vm1545, %v2452, %v2786
      %v3638 = vsel %vm1545, %v2453, %v2788
      %v3639 = vsel %vm1545, %v2454, %v2790
      %v3640 = vsel %vm1545, %v2455, %v2792
      %v3641 = vsel %vm1545, %v2456, %v2794
      %v3642 = vsel %vm1545, %v2457, %v2796
      %v3643 = vsel %vm1545, %v2458, %v2798
      %v3644 = vsel %vm1545, %v2459, %v2800
      %v3645 = vsel %vm1545, %v2460, %v2802
      %v3646 = vsel %vm1545, %v2461, %v2804
      %v3647 = vsel %vm1545, %v2462, %v2806
      %v3648 = vsel %vm1545, %v2463, %v2808
      %v3649 = vsel %vm1545, %v2464, %v2810
      %v3650 = vsel %vm1545, %v2465, %v2812
      %v3651 = vsel %vm1545, %v2466, %v2814
      %v3652 = vsel %vm1545, %v2467, %v2816
      %v3653 = vsel %vm1545, %v2468, %v2818
      %v3654 = vsel %vm1545, %v2469, %v2820
      %v3655 = vsel %vm1545, %v2470, %v2822
      %v3656 = vsel %vm1545, %v2471, %v2824
      %v3657 = vsel %vm1578, %v3625, %v2890
      %v3658 = vsel %vm1578, %v3626, %v2892
      %v3659 = vsel %vm1578, %v3627, %v2894
      %v3660 = vsel %vm1578, %v3628, %v2896
      %v3661 = vsel %vm1578, %v3629, %v2898
      %v3662 = vsel %vm1578, %v3630, %v2900
      %v3663 = vsel %vm1578, %v3631, %v2902
      %v3664 = vsel %vm1578, %v3632, %v2904
      %v3665 = vsel %vm1578, %v3633, %v2906
      %v3666 = vsel %vm1578, %v3634, %v2908
      %v3667 = vsel %vm1578, %v3635, %v2910
      %v3668 = vsel %vm1578, %v3636, %v2912
      %v3669 = vsel %vm1578, %v3637, %v2914
      %v3670 = vsel %vm1578, %v3638, %v2916
      %v3671 = vsel %vm1578, %v3639, %v2918
      %v3672 = vsel %vm1578, %v3640, %v2920
      %v3673 = vsel %vm1578, %v3641, %v2922
      %v3674 = vsel %vm1578, %v3642, %v2924
      %v3675 = vsel %vm1578, %v3643, %v2926
      %v3676 = vsel %vm1578, %v3644, %v2928
      %v3677 = vsel %vm1578, %v3645, %v2930
      %v3678 = vsel %vm1578, %v3646, %v2932
      %v3679 = vsel %vm1578, %v3647, %v2934
      %v3680 = vsel %vm1578, %v3648, %v2936
      %v3681 = vsel %vm1578, %v3649, %v2938
      %v3682 = vsel %vm1578, %v3650, %v2940
      %v3683 = vsel %vm1578, %v3651, %v2942
      %v3684 = vsel %vm1578, %v3652, %v2944
      %v3685 = vsel %vm1578, %v3653, %v2946
      %v3686 = vsel %vm1578, %v3654, %v2948
      %v3687 = vsel %vm1578, %v3655, %v2950
      %v3688 = vsel %vm1578, %v3656, %v2952
      %v3689 = vsel %vm1611, %v3657, %v3018
      %v3690 = vsel %vm1611, %v3658, %v3020
      %v3691 = vsel %vm1611, %v3659, %v3022
      %v3692 = vsel %vm1611, %v3660, %v3024
      %v3693 = vsel %vm1611, %v3661, %v3026
      %v3694 = vsel %vm1611, %v3662, %v3028
      %v3695 = vsel %vm1611, %v3663, %v3030
      %v3696 = vsel %vm1611, %v3664, %v3032
      %v3697 = vsel %vm1611, %v3665, %v3034
      %v3698 = vsel %vm1611, %v3666, %v3036
      %v3699 = vsel %vm1611, %v3667, %v3038
      %v3700 = vsel %vm1611, %v3668, %v3040
      %v3701 = vsel %vm1611, %v3669, %v3042
      %v3702 = vsel %vm1611, %v3670, %v3044
      %v3703 = vsel %vm1611, %v3671, %v3046
      %v3704 = vsel %vm1611, %v3672, %v3048
      %v3705 = vsel %vm1611, %v3673, %v3050
      %v3706 = vsel %vm1611, %v3674, %v3052
      %v3707 = vsel %vm1611, %v3675, %v3054
      %v3708 = vsel %vm1611, %v3676, %v3056
      %v3709 = vsel %vm1611, %v3677, %v3058
      %v3710 = vsel %vm1611, %v3678, %v3060
      %v3711 = vsel %vm1611, %v3679, %v3062
      %v3712 = vsel %vm1611, %v3680, %v3064
      %v3713 = vsel %vm1611, %v3681, %v3066
      %v3714 = vsel %vm1611, %v3682, %v3068
      %v3715 = vsel %vm1611, %v3683, %v3070
      %v3716 = vsel %vm1611, %v3684, %v3072
      %v3717 = vsel %vm1611, %v3685, %v3074
      %v3718 = vsel %vm1611, %v3686, %v3076
      %v3719 = vsel %vm1611, %v3687, %v3078
      %v3720 = vsel %vm1611, %v3688, %v3080
      %v3721 = vsel %vm1644, %v3689, %v3146
      %v3722 = vsel %vm1644, %v3690, %v3148
      %v3723 = vsel %vm1644, %v3691, %v3150
      %v3724 = vsel %vm1644, %v3692, %v3152
      %v3725 = vsel %vm1644, %v3693, %v3154
      %v3726 = vsel %vm1644, %v3694, %v3156
      %v3727 = vsel %vm1644, %v3695, %v3158
      %v3728 = vsel %vm1644, %v3696, %v3160
      %v3729 = vsel %vm1644, %v3697, %v3162
      %v3730 = vsel %vm1644, %v3698, %v3164
      %v3731 = vsel %vm1644, %v3699, %v3166
      %v3732 = vsel %vm1644, %v3700, %v3168
      %v3733 = vsel %vm1644, %v3701, %v3170
      %v3734 = vsel %vm1644, %v3702, %v3172
      %v3735 = vsel %vm1644, %v3703, %v3174
      %v3736 = vsel %vm1644, %v3704, %v3176
      %v3737 = vsel %vm1644, %v3705, %v3178
      %v3738 = vsel %vm1644, %v3706, %v3180
      %v3739 = vsel %vm1644, %v3707, %v3182
      %v3740 = vsel %vm1644, %v3708, %v3184
      %v3741 = vsel %vm1644, %v3709, %v3186
      %v3742 = vsel %vm1644, %v3710, %v3188
      %v3743 = vsel %vm1644, %v3711, %v3190
      %v3744 = vsel %vm1644, %v3712, %v3192
      %v3745 = vsel %vm1644, %v3713, %v3194
      %v3746 = vsel %vm1644, %v3714, %v3196
      %v3747 = vsel %vm1644, %v3715, %v3198
      %v3748 = vsel %vm1644, %v3716, %v3200
      %v3749 = vsel %vm1644, %v3717, %v3202
      %v3750 = vsel %vm1644, %v3718, %v3204
      %v3751 = vsel %vm1644, %v3719, %v3206
      %v3752 = vsel %vm1644, %v3720, %v3208
      %v3753 = vsel %vm1677, %v3721, %v3274
      %v3754 = vsel %vm1677, %v3722, %v3276
      %v3755 = vsel %vm1677, %v3723, %v3278
      %v3756 = vsel %vm1677, %v3724, %v3280
      %v3757 = vsel %vm1677, %v3725, %v3282
      %v3758 = vsel %vm1677, %v3726, %v3284
      %v3759 = vsel %vm1677, %v3727, %v3286
      %v3760 = vsel %vm1677, %v3728, %v3288
      %v3761 = vsel %vm1677, %v3729, %v3290
      %v3762 = vsel %vm1677, %v3730, %v3292
      %v3763 = vsel %vm1677, %v3731, %v3294
      %v3764 = vsel %vm1677, %v3732, %v3296
      %v3765 = vsel %vm1677, %v3733, %v3298
      %v3766 = vsel %vm1677, %v3734, %v3300
      %v3767 = vsel %vm1677, %v3735, %v3302
      %v3768 = vsel %vm1677, %v3736, %v3304
      %v3769 = vsel %vm1677, %v3737, %v3306
      %v3770 = vsel %vm1677, %v3738, %v3308
      %v3771 = vsel %vm1677, %v3739, %v3310
      %v3772 = vsel %vm1677, %v3740, %v3312
      %v3773 = vsel %vm1677, %v3741, %v3314
      %v3774 = vsel %vm1677, %v3742, %v3316
      %v3775 = vsel %vm1677, %v3743, %v3318
      %v3776 = vsel %vm1677, %v3744, %v3320
      %v3777 = vsel %vm1677, %v3745, %v3322
      %v3778 = vsel %vm1677, %v3746, %v3324
      %v3779 = vsel %vm1677, %v3747, %v3326
      %v3780 = vsel %vm1677, %v3748, %v3328
      %v3781 = vsel %vm1677, %v3749, %v3330
      %v3782 = vsel %vm1677, %v3750, %v3332
      %v3783 = vsel %vm1677, %v3751, %v3334
      %v3784 = vsel %vm1677, %v3752, %v3336
      %v3785 = vsel %vm1710, %v3753, %v3402
      %v3786 = vsel %vm1710, %v3754, %v3404
      %v3787 = vsel %vm1710, %v3755, %v3406
      %v3788 = vsel %vm1710, %v3756, %v3408
      %v3789 = vsel %vm1710, %v3757, %v3410
      %v3790 = vsel %vm1710, %v3758, %v3412
      %v3791 = vsel %vm1710, %v3759, %v3414
      %v3792 = vsel %vm1710, %v3760, %v3416
      %v3793 = vsel %vm1710, %v3761, %v3418
      %v3794 = vsel %vm1710, %v3762, %v3420
      %v3795 = vsel %vm1710, %v3763, %v3422
      %v3796 = vsel %vm1710, %v3764, %v3424
      %v3797 = vsel %vm1710, %v3765, %v3426
      %v3798 = vsel %vm1710, %v3766, %v3428
      %v3799 = vsel %vm1710, %v3767, %v3430
      %v3800 = vsel %vm1710, %v3768, %v3432
      %v3801 = vsel %vm1710, %v3769, %v3434
      %v3802 = vsel %vm1710, %v3770, %v3436
      %v3803 = vsel %vm1710, %v3771, %v3438
      %v3804 = vsel %vm1710, %v3772, %v3440
      %v3805 = vsel %vm1710, %v3773, %v3442
      %v3806 = vsel %vm1710, %v3774, %v3444
      %v3807 = vsel %vm1710, %v3775, %v3446
      %v3808 = vsel %vm1710, %v3776, %v3448
      %v3809 = vsel %vm1710, %v3777, %v3450
      %v3810 = vsel %vm1710, %v3778, %v3452
      %v3811 = vsel %vm1710, %v3779, %v3454
      %v3812 = vsel %vm1710, %v3780, %v3456
      %v3813 = vsel %vm1710, %v3781, %v3458
      %v3814 = vsel %vm1710, %v3782, %v3460
      %v3815 = vsel %vm1710, %v3783, %v3462
      %v3816 = vsel %vm1710, %v3784, %v3464
      %v3817 = vsel %vm1743, %v3785, %v3530
      %v3818 = vsel %vm1743, %v3786, %v3532
      %v3819 = vsel %vm1743, %v3787, %v3534
      %v3820 = vsel %vm1743, %v3788, %v3536
      %v3821 = vsel %vm1743, %v3789, %v3538
      %v3822 = vsel %vm1743, %v3790, %v3540
      %v3823 = vsel %vm1743, %v3791, %v3542
      %v3824 = vsel %vm1743, %v3792, %v3544
      %v3825 = vsel %vm1743, %v3793, %v3546
      %v3826 = vsel %vm1743, %v3794, %v3548
      %v3827 = vsel %vm1743, %v3795, %v3550
      %v3828 = vsel %vm1743, %v3796, %v3552
      %v3829 = vsel %vm1743, %v3797, %v3554
      %v3830 = vsel %vm1743, %v3798, %v3556
      %v3831 = vsel %vm1743, %v3799, %v3558
      %v3832 = vsel %vm1743, %v3800, %v3560
      %v3833 = vsel %vm1743, %v3801, %v3562
      %v3834 = vsel %vm1743, %v3802, %v3564
      %v3835 = vsel %vm1743, %v3803, %v3566
      %v3836 = vsel %vm1743, %v3804, %v3568
      %v3837 = vsel %vm1743, %v3805, %v3570
      %v3838 = vsel %vm1743, %v3806, %v3572
      %v3839 = vsel %vm1743, %v3807, %v3574
      %v3840 = vsel %vm1743, %v3808, %v3576
      %v3841 = vsel %vm1743, %v3809, %v3578
      %v3842 = vsel %vm1743, %v3810, %v3580
      %v3843 = vsel %vm1743, %v3811, %v3582
      %v3844 = vsel %vm1743, %v3812, %v3584
      %v3845 = vsel %vm1743, %v3813, %v3586
      %v3846 = vsel %vm1743, %v3814, %v3588
      %v3847 = vsel %vm1743, %v3815, %v3590
      %v3848 = vsel %vm1743, %v3816, %v3592
      %v3849 = vpack.c.bf16 %v3818, %v3817
      %v3850 = vpack.c.bf16 %v2698, %v2697
      %v3851 = vpack.c.bf16 %v3820, %v3819
      %v3852 = vpack.c.bf16 %v2700, %v2699
      %v3853 = vpack.c.bf16 %v3822, %v3821
      %v3854 = vpack.c.bf16 %v2702, %v2701
      %v3855 = vpack.c.bf16 %v3824, %v3823
      %v3856 = vpack.c.bf16 %v2704, %v2703
      %v3857 = vpack.c.bf16 %v3826, %v3825
      %v3858 = vpack.c.bf16 %v2706, %v2705
      %v3859 = vpack.c.bf16 %v3828, %v3827
      %v3860 = vpack.c.bf16 %v2708, %v2707
      %v3861 = vpack.c.bf16 %v3830, %v3829
      %v3862 = vpack.c.bf16 %v2710, %v2709
      %v3863 = vpack.c.bf16 %v3832, %v3831
      %v3864 = vpack.c.bf16 %v2712, %v2711
      %v3865 = vpack.c.bf16 %v3834, %v3833
      %v3866 = vpack.c.bf16 %v2714, %v2713
      %v3867 = vpack.c.bf16 %v3836, %v3835
      %v3868 = vpack.c.bf16 %v2716, %v2715
      %v3869 = vpack.c.bf16 %v3838, %v3837
      %v3870 = vpack.c.bf16 %v2718, %v2717
      %v3871 = vpack.c.bf16 %v3840, %v3839
      %v3872 = vpack.c.bf16 %v2720, %v2719
      %v3873 = vpack.c.bf16 %v3842, %v3841
      %v3874 = vpack.c.bf16 %v2722, %v2721
      %v3875 = vpack.c.bf16 %v3844, %v3843
      %v3876 = vpack.c.bf16 %v2724, %v2723
      %v3877 = vpack.c.bf16 %v3846, %v3845
      %v3878 = vpack.c.bf16 %v2726, %v2725
      %v3879 = vpack.c.bf16 %v3848, %v3847
      %v3880 = vpack.c.bf16 %v2728, %v2727
      %v3881 = vld [vmem:[%s3] sm:$0xf]
      %v3882 = vld [vmem:[%s3 + $0x4] sm:$0xf]
      %v3883 = vld [vmem:[%s3 + $0x8] sm:$0xf]
      %v3884 = vld [vmem:[%s3 + $0xc] sm:$0xf]
      %v3885 = vld [vmem:[%s3 + $0x10] sm:$0xf]
      %v3886 = vld [vmem:[%s3 + $0x14] sm:$0xf]
      %v3887 = vld [vmem:[%s3 + $0x18] sm:$0xf]
      %v3888 = vld [vmem:[%s3 + $0x1c] sm:$0xf]
      %v3889 = vld [vmem:[%s3 + $0x20] sm:$0xf]
      %v3890 = vld [vmem:[%s3 + $0x24] sm:$0xf]
      %v3891 = vld [vmem:[%s3 + $0x28] sm:$0xf]
      %v3892 = vld [vmem:[%s3 + $0x2c] sm:$0xf]
      %v3893 = vld [vmem:[%s3 + $0x30] sm:$0xf]
      %v3894 = vld [vmem:[%s3 + $0x34] sm:$0xf]
      %v3895 = vld [vmem:[%s3 + $0x38] sm:$0xf]
      %v3896 = vld [vmem:[%s3 + $0x3c] sm:$0xf]
      %v3897 = vld [vmem:[%s3 + $0x40] sm:$0xf]
      %v3898 = vld [vmem:[%s3 + $0x44] sm:$0xf]
      %v3899 = vld [vmem:[%s4] sm:$0x1]
      %v3901 = vlaneseq
      %v3902 = vshrl.u32 %v3901, 7
      %v3903 = vsub.s32 0, %v3902
      %v3904 = vrot.slane %v3899, %v3903
      %v3924 = vunpack.c.l.b16 %v3881
      %v3925 = vunpack.c.l.b16 %v3882
      %v3926 = vunpack.c.l.b16 %v3883
      %v3927 = vunpack.c.l.b16 %v3884
      %v3928 = vunpack.c.l.b16 %v3885
      %v3929 = vunpack.c.l.b16 %v3886
      %v3930 = vunpack.c.l.b16 %v3887
      %v3931 = vunpack.c.l.b16 %v3888
      %v3932 = vunpack.c.l.b16 %v3889
      %v3933 = vunpack.c.l.b16 %v3890
      %v3934 = vunpack.c.l.b16 %v3891
      %v3935 = vunpack.c.l.b16 %v3892
      %v3936 = vunpack.c.l.b16 %v3893
      %v3937 = vunpack.c.l.b16 %v3894
      %v3938 = vunpack.c.l.b16 %v3895
      %v3939 = vunpack.c.l.b16 %v3896
      %v3940 = vunpack.c.l.b16 %v3897
      %v3941 = vunpack.c.l.b16 %v3898
      %v3942 = vpack.c.b16 %v3925, %v3924
      %v3943 = vpack.c.b16 %v3927, %v3926
      %v3944 = vpack.c.b16 %v3929, %v3928
      %v3945 = vpack.c.b16 %v3931, %v3930
      %v3946 = vpack.c.b16 %v3933, %v3932
      %v3947 = vpack.c.b16 %v3935, %v3934
      %v3948 = vpack.c.b16 %v3937, %v3936
      %v3949 = vpack.c.b16 %v3939, %v3938
      %v3950 = vpack.c.b16 %v3941, %v3940
      %v3961 = vsel %vm1545, %v3850, 0
      %v3964 = vsel %vm1545, %v3852, 0
      %v3967 = vsel %vm1545, %v3854, 0
      %v3970 = vsel %vm1545, %v3856, 0
      %v3973 = vsel %vm1545, %v3858, 0
      %v3976 = vsel %vm1545, %v3860, 0
      %v3979 = vsel %vm1545, %v3862, 0
      %v3982 = vsel %vm1545, %v3864, 0
      %v3985 = vsel %vm1545, %v3866, 0
      %v3988 = vsel %vm1545, %v3868, 0
      %v3991 = vsel %vm1545, %v3870, 0
      %v3994 = vsel %vm1545, %v3872, 0
      %v3997 = vsel %vm1545, %v3874, 0
      %v4000 = vsel %vm1545, %v3876, 0
      %v4003 = vsel %vm1545, %v3878, 0
      %v4006 = vsel %vm1545, %v3880, 0
      %4008 = vmatprep.subr.bf16.mxu0 0
      %4009 = vmatpush1.bf16.msra.mxu0 %v3949
      %4010 = vmatprep.subr.bf16.mxu0 0
      %4011 = vmatpush1.bf16.msra.mxu0 %v3948
      %4012 = vmatprep.subr.bf16.mxu0 0
      %4013 = vmatpush1.bf16.msra.mxu0 %v3947
      %4014 = vmatprep.subr.bf16.mxu0 0
      %4015 = vmatpush1.bf16.msra.mxu0 %v3946
      %4016 = vmatprep.subr.bf16.mxu0 0
      %4017 = vmatpush1.bf16.msra.mxu0 %v3945
      %4018 = vmatprep.subr.bf16.mxu0 0
      %4019 = vmatpush1.bf16.msra.mxu0 %v3944
      %4020 = vmatprep.subr.bf16.mxu0 0
      %4021 = vmatpush1.bf16.msra.mxu0 %v3943
      %4022 = vmatprep.subr.bf16.mxu0 0
      %4023 = vmatpush1.bf16.msra.mxu0 %v3942
      %4024 = vmatprep.subr.bf16.mxu0 0
      %4025 = vmatpush2.bf16.msra.mxu0 0
      %4026 = vmatprep.subr.bf16.mxu0 0
      %4027 = vmatpush2.bf16.msra.mxu0 0
      %4028 = vmatprep.subr.bf16.mxu0 0
      %4029 = vmatpush2.bf16.msra.mxu0 0
      %4030 = vmatprep.subr.bf16.mxu0 0
      %4031 = vmatpush2.bf16.msra.mxu0 0
      %4032 = vmatprep.subr.bf16.mxu0 0
      %4033 = vmatpush2.bf16.msra.mxu0 0
      %4034 = vmatprep.subr.bf16.mxu0 0
      %4035 = vmatpush2.bf16.msra.mxu0 0
      %4036 = vmatprep.subr.bf16.mxu0 0
      %4037 = vmatpush2.bf16.msra.mxu0 0
      %4038 = vmatprep.subr.bf16.mxu0 0
      %4039 = vmatpush2.bf16.msra.mxu0 %v3950
      %4040 = vmatprep.mubr.bf16.mxu0 %v3961
      %4041 = vmatmul.mubr.bf16.gmra.mxu0 %v3849
      %v4042 = vpop.f32.mrf.mxu0
      %v4043 = vadd.f32 %v3904, %v4042
      %v4044 = vpop.f32.mrf.mxu0
      %v4045 = vpop.f32.mrf.mxu0
      %v4046 = vadd.f32 %v3904, %v4045
      %v4047 = vpop.f32.mrf.mxu0
      %4048 = vmatprep.mubr.bf16.mxu0 %v3964
      %4049 = vmatmul.mubr.bf16.gmra.mxu0 %v3851
      %v4050 = vpop.f32.mrf.mxu0
      %v4051 = vadd.f32 %v3904, %v4050
      %v4052 = vpop.f32.mrf.mxu0
      %v4053 = vpop.f32.mrf.mxu0
      %v4054 = vadd.f32 %v3904, %v4053
      %v4055 = vpop.f32.mrf.mxu0
      %4056 = vmatprep.mubr.bf16.mxu0 %v3967
      %4057 = vmatmul.mubr.bf16.gmra.mxu0 %v3853
      %v4058 = vpop.f32.mrf.mxu0
      %v4059 = vadd.f32 %v3904, %v4058
      %v4060 = vpop.f32.mrf.mxu0
      %v4061 = vpop.f32.mrf.mxu0
      %v4062 = vadd.f32 %v3904, %v4061
      %v4063 = vpop.f32.mrf.mxu0
      %4064 = vmatprep.mubr.bf16.mxu0 %v3970
      %4065 = vmatmul.mubr.bf16.gmra.mxu0 %v3855
      %v4066 = vpop.f32.mrf.mxu0
      %v4067 = vadd.f32 %v3904, %v4066
      %v4068 = vpop.f32.mrf.mxu0
      %v4069 = vpop.f32.mrf.mxu0
      %v4070 = vadd.f32 %v3904, %v4069
      %v4071 = vpop.f32.mrf.mxu0
      %4072 = vmatprep.mubr.bf16.mxu0 %v3973
      %4073 = vmatmul.mubr.bf16.gmra.mxu0 %v3857
      %v4074 = vpop.f32.mrf.mxu0
      %v4075 = vadd.f32 %v3904, %v4074
      %v4076 = vpop.f32.mrf.mxu0
      %v4077 = vpop.f32.mrf.mxu0
      %v4078 = vadd.f32 %v3904, %v4077
      %v4079 = vpop.f32.mrf.mxu0
      %4080 = vmatprep.mubr.bf16.mxu0 %v3976
      %4081 = vmatmul.mubr.bf16.gmra.mxu0 %v3859
      %v4082 = vpop.f32.mrf.mxu0
      %v4083 = vadd.f32 %v3904, %v4082
      %v4084 = vpop.f32.mrf.mxu0
      %v4085 = vpop.f32.mrf.mxu0
      %v4086 = vadd.f32 %v3904, %v4085
      %v4087 = vpop.f32.mrf.mxu0
      %4088 = vmatprep.mubr.bf16.mxu0 %v3979
      %4089 = vmatmul.mubr.bf16.gmra.mxu0 %v3861
      %v4090 = vpop.f32.mrf.mxu0
      %v4091 = vadd.f32 %v3904, %v4090
      %v4092 = vpop.f32.mrf.mxu0
      %v4093 = vpop.f32.mrf.mxu0
      %v4094 = vadd.f32 %v3904, %v4093
      %v4095 = vpop.f32.mrf.mxu0
      %4096 = vmatprep.mubr.bf16.mxu0 %v3982
      %4097 = vmatmul.mubr.bf16.gmra.mxu0 %v3863
      %v4098 = vpop.f32.mrf.mxu0
      %v4099 = vadd.f32 %v3904, %v4098
      %v4100 = vpop.f32.mrf.mxu0
      %v4101 = vpop.f32.mrf.mxu0
      %v4102 = vadd.f32 %v3904, %v4101
      %v4103 = vpop.f32.mrf.mxu0
      %4104 = vmatprep.mubr.bf16.mxu0 %v3985
      %4105 = vmatmul.mubr.bf16.gmra.mxu0 %v3865
      %v4106 = vpop.f32.mrf.mxu0
      %v4107 = vadd.f32 %v3904, %v4106
      %v4108 = vpop.f32.mrf.mxu0
      %v4109 = vpop.f32.mrf.mxu0
      %v4110 = vadd.f32 %v3904, %v4109
      %v4111 = vpop.f32.mrf.mxu0
      %4112 = vmatprep.mubr.bf16.mxu0 %v3988
      %4113 = vmatmul.mubr.bf16.gmra.mxu0 %v3867
      %v4114 = vpop.f32.mrf.mxu0
      %v4115 = vadd.f32 %v3904, %v4114
      %v4116 = vpop.f32.mrf.mxu0
      %v4117 = vpop.f32.mrf.mxu0
      %v4118 = vadd.f32 %v3904, %v4117
      %v4119 = vpop.f32.mrf.mxu0
      %4120 = vmatprep.mubr.bf16.mxu0 %v3991
      %4121 = vmatmul.mubr.bf16.gmra.mxu0 %v3869
      %v4122 = vpop.f32.mrf.mxu0
      %v4123 = vadd.f32 %v3904, %v4122
      %v4124 = vpop.f32.mrf.mxu0
      %v4125 = vpop.f32.mrf.mxu0
      %v4126 = vadd.f32 %v3904, %v4125
      %v4127 = vpop.f32.mrf.mxu0
      %4128 = vmatprep.mubr.bf16.mxu0 %v3994
      %4129 = vmatmul.mubr.bf16.gmra.mxu0 %v3871
      %v4130 = vpop.f32.mrf.mxu0
      %v4131 = vadd.f32 %v3904, %v4130
      %v4132 = vpop.f32.mrf.mxu0
      %v4133 = vpop.f32.mrf.mxu0
      %v4134 = vadd.f32 %v3904, %v4133
      %v4135 = vpop.f32.mrf.mxu0
      %4136 = vmatprep.mubr.bf16.mxu0 %v3997
      %4137 = vmatmul.mubr.bf16.gmra.mxu0 %v3873
      %v4138 = vpop.f32.mrf.mxu0
      %v4139 = vadd.f32 %v3904, %v4138
      %v4140 = vpop.f32.mrf.mxu0
      %v4141 = vpop.f32.mrf.mxu0
      %v4142 = vadd.f32 %v3904, %v4141
      %v4143 = vpop.f32.mrf.mxu0
      %4144 = vmatprep.mubr.bf16.mxu0 %v4000
      %4145 = vmatmul.mubr.bf16.gmra.mxu0 %v3875
      %v4146 = vpop.f32.mrf.mxu0
      %v4147 = vadd.f32 %v3904, %v4146
      %v4148 = vpop.f32.mrf.mxu0
      %v4149 = vpop.f32.mrf.mxu0
      %v4150 = vadd.f32 %v3904, %v4149
      %v4151 = vpop.f32.mrf.mxu0
      %4152 = vmatprep.mubr.bf16.mxu0 %v4003
      %4153 = vmatmul.mubr.bf16.gmra.mxu0 %v3877
      %v4154 = vpop.f32.mrf.mxu0
      %v4155 = vadd.f32 %v3904, %v4154
      %v4156 = vpop.f32.mrf.mxu0
      %v4157 = vpop.f32.mrf.mxu0
      %v4158 = vadd.f32 %v3904, %v4157
      %v4159 = vpop.f32.mrf.mxu0
      %4160 = vmatprep.mubr.bf16.mxu0 %v4006
      %4161 = vmatmul.mubr.bf16.gmra.mxu0 %v3879
      %v4162 = vpop.f32.mrf.mxu0
      %v4163 = vadd.f32 %v3904, %v4162
      %v4164 = vpop.f32.mrf.mxu0
      %v4165 = vpop.f32.mrf.mxu0
      %v4166 = vadd.f32 %v3904, %v4165
      %v4167 = vpop.f32.mrf.mxu0
      %4168 = vdwg.mxu0
      %v4169 = vxor.u32 %v4043, 2147483648
      %v4170 = vxor.u32 %v4046, 2147483648
      %v4171 = vxor.u32 %v4051, 2147483648
      %v4172 = vxor.u32 %v4054, 2147483648
      %v4173 = vxor.u32 %v4059, 2147483648
      %v4174 = vxor.u32 %v4062, 2147483648
      %v4175 = vxor.u32 %v4067, 2147483648
      %v4176 = vxor.u32 %v4070, 2147483648
      %v4177 = vxor.u32 %v4075, 2147483648
      %v4178 = vxor.u32 %v4078, 2147483648
      %v4179 = vxor.u32 %v4083, 2147483648
      %v4180 = vxor.u32 %v4086, 2147483648
      %v4181 = vxor.u32 %v4091, 2147483648
      %v4182 = vxor.u32 %v4094, 2147483648
      %v4183 = vxor.u32 %v4099, 2147483648
      %v4184 = vxor.u32 %v4102, 2147483648
      %v4185 = vxor.u32 %v4107, 2147483648
      %v4186 = vxor.u32 %v4110, 2147483648
      %v4187 = vxor.u32 %v4115, 2147483648
      %v4188 = vxor.u32 %v4118, 2147483648
      %v4189 = vxor.u32 %v4123, 2147483648
      %v4190 = vxor.u32 %v4126, 2147483648
      %v4191 = vxor.u32 %v4131, 2147483648
      %v4192 = vxor.u32 %v4134, 2147483648
      %v4193 = vxor.u32 %v4139, 2147483648
      %v4194 = vxor.u32 %v4142, 2147483648
      %v4195 = vxor.u32 %v4147, 2147483648
      %v4196 = vxor.u32 %v4150, 2147483648
      %v4197 = vxor.u32 %v4155, 2147483648
      %v4198 = vxor.u32 %v4158, 2147483648
      %v4199 = vxor.u32 %v4163, 2147483648
      %v4200 = vxor.u32 %v4166, 2147483648
      %v4201 = vmul.f32 %v4169, 1.442695
      %v4202 = vpow.pop %v4201
      %v4203 = vmul.f32 %v4170, 1.442695
      %v4204 = vpow.pop %v4203
      %v4205 = vmul.f32 %v4171, 1.442695
      %v4206 = vpow.pop %v4205
      %v4207 = vmul.f32 %v4172, 1.442695
      %v4208 = vpow.pop %v4207
      %v4209 = vmul.f32 %v4173, 1.442695
      %v4210 = vpow.pop %v4209
      %v4211 = vmul.f32 %v4174, 1.442695
      %v4212 = vpow.pop %v4211
      %v4213 = vmul.f32 %v4175, 1.442695
      %v4214 = vpow.pop %v4213
      %v4215 = vmul.f32 %v4176, 1.442695
      %v4216 = vpow.pop %v4215
      %v4217 = vmul.f32 %v4177, 1.442695
      %v4218 = vpow.pop %v4217
      %v4219 = vmul.f32 %v4178, 1.442695
      %v4220 = vpow.pop %v4219
      %v4221 = vmul.f32 %v4179, 1.442695
      %v4222 = vpow.pop %v4221
      %v4223 = vmul.f32 %v4180, 1.442695
      %v4224 = vpow.pop %v4223
      %v4225 = vmul.f32 %v4181, 1.442695
      %v4226 = vpow.pop %v4225
      %v4227 = vmul.f32 %v4182, 1.442695
      %v4228 = vpow.pop %v4227
      %v4229 = vmul.f32 %v4183, 1.442695
      %v4230 = vpow.pop %v4229
      %v4231 = vmul.f32 %v4184, 1.442695
      %v4232 = vpow.pop %v4231
      %v4233 = vmul.f32 %v4185, 1.442695
      %v4234 = vpow.pop %v4233
      %v4235 = vmul.f32 %v4186, 1.442695
      %v4236 = vpow.pop %v4235
      %v4237 = vmul.f32 %v4187, 1.442695
      %v4238 = vpow.pop %v4237
      %v4239 = vmul.f32 %v4188, 1.442695
      %v4240 = vpow.pop %v4239
      %v4241 = vmul.f32 %v4189, 1.442695
      %v4242 = vpow.pop %v4241
      %v4243 = vmul.f32 %v4190, 1.442695
      %v4244 = vpow.pop %v4243
      %v4245 = vmul.f32 %v4191, 1.442695
      %v4246 = vpow.pop %v4245
      %v4247 = vmul.f32 %v4192, 1.442695
      %v4248 = vpow.pop %v4247
      %v4249 = vmul.f32 %v4193, 1.442695
      %v4250 = vpow.pop %v4249
      %v4251 = vmul.f32 %v4194, 1.442695
      %v4252 = vpow.pop %v4251
      %v4253 = vmul.f32 %v4195, 1.442695
      %v4254 = vpow.pop %v4253
      %v4255 = vmul.f32 %v4196, 1.442695
      %v4256 = vpow.pop %v4255
      %v4257 = vmul.f32 %v4197, 1.442695
      %v4258 = vpow.pop %v4257
      %v4259 = vmul.f32 %v4198, 1.442695
      %v4260 = vpow.pop %v4259
      %v4261 = vmul.f32 %v4199, 1.442695
      %v4262 = vpow.pop %v4261
      %v4263 = vmul.f32 %v4200, 1.442695
      %v4264 = vpow.pop %v4263
      %v4265 = vadd.f32 %v4202, 1.0
      %v4266 = vadd.f32 %v4204, 1.0
      %v4267 = vadd.f32 %v4206, 1.0
      %v4268 = vadd.f32 %v4208, 1.0
      %v4269 = vadd.f32 %v4210, 1.0
      %v4270 = vadd.f32 %v4212, 1.0
      %v4271 = vadd.f32 %v4214, 1.0
      %v4272 = vadd.f32 %v4216, 1.0
      %v4273 = vadd.f32 %v4218, 1.0
      %v4274 = vadd.f32 %v4220, 1.0
      %v4275 = vadd.f32 %v4222, 1.0
      %v4276 = vadd.f32 %v4224, 1.0
      %v4277 = vadd.f32 %v4226, 1.0
      %v4278 = vadd.f32 %v4228, 1.0
      %v4279 = vadd.f32 %v4230, 1.0
      %v4280 = vadd.f32 %v4232, 1.0
      %v4281 = vadd.f32 %v4234, 1.0
      %v4282 = vadd.f32 %v4236, 1.0
      %v4283 = vadd.f32 %v4238, 1.0
      %v4284 = vadd.f32 %v4240, 1.0
      %v4285 = vadd.f32 %v4242, 1.0
      %v4286 = vadd.f32 %v4244, 1.0
      %v4287 = vadd.f32 %v4246, 1.0
      %v4288 = vadd.f32 %v4248, 1.0
      %v4289 = vadd.f32 %v4250, 1.0
      %v4290 = vadd.f32 %v4252, 1.0
      %v4291 = vadd.f32 %v4254, 1.0
      %v4292 = vadd.f32 %v4256, 1.0
      %v4293 = vadd.f32 %v4258, 1.0
      %v4294 = vadd.f32 %v4260, 1.0
      %v4295 = vadd.f32 %v4262, 1.0
      %v4296 = vadd.f32 %v4264, 1.0
      %v4297 = vrcp.pop %v4265
      %v4298 = vmul.f32 1.0, %v4297
      %v4299 = vrcp.pop %v4266
      %v4300 = vmul.f32 1.0, %v4299
      %v4301 = vrcp.pop %v4267
      %v4302 = vmul.f32 1.0, %v4301
      %v4303 = vrcp.pop %v4268
      %v4304 = vmul.f32 1.0, %v4303
      %v4305 = vrcp.pop %v4269
      %v4306 = vmul.f32 1.0, %v4305
      %v4307 = vrcp.pop %v4270
      %v4308 = vmul.f32 1.0, %v4307
      %v4309 = vrcp.pop %v4271
      %v4310 = vmul.f32 1.0, %v4309
      %v4311 = vrcp.pop %v4272
      %v4312 = vmul.f32 1.0, %v4311
      %v4313 = vrcp.pop %v4273
      %v4314 = vmul.f32 1.0, %v4313
      %v4315 = vrcp.pop %v4274
      %v4316 = vmul.f32 1.0, %v4315
      %v4317 = vrcp.pop %v4275
      %v4318 = vmul.f32 1.0, %v4317
      %v4319 = vrcp.pop %v4276
      %v4320 = vmul.f32 1.0, %v4319
      %v4321 = vrcp.pop %v4277
      %v4322 = vmul.f32 1.0, %v4321
      %v4323 = vrcp.pop %v4278
      %v4324 = vmul.f32 1.0, %v4323
      %v4325 = vrcp.pop %v4279
      %v4326 = vmul.f32 1.0, %v4325
      %v4327 = vrcp.pop %v4280
      %v4328 = vmul.f32 1.0, %v4327
      %v4329 = vrcp.pop %v4281
      %v4330 = vmul.f32 1.0, %v4329
      %v4331 = vrcp.pop %v4282
      %v4332 = vmul.f32 1.0, %v4331
      %v4333 = vrcp.pop %v4283
      %v4334 = vmul.f32 1.0, %v4333
      %v4335 = vrcp.pop %v4284
      %v4336 = vmul.f32 1.0, %v4335
      %v4337 = vrcp.pop %v4285
      %v4338 = vmul.f32 1.0, %v4337
      %v4339 = vrcp.pop %v4286
      %v4340 = vmul.f32 1.0, %v4339
      %v4341 = vrcp.pop %v4287
      %v4342 = vmul.f32 1.0, %v4341
      %v4343 = vrcp.pop %v4288
      %v4344 = vmul.f32 1.0, %v4343
      %v4345 = vrcp.pop %v4289
      %v4346 = vmul.f32 1.0, %v4345
      %v4347 = vrcp.pop %v4290
      %v4348 = vmul.f32 1.0, %v4347
      %v4349 = vrcp.pop %v4291
      %v4350 = vmul.f32 1.0, %v4349
      %v4351 = vrcp.pop %v4292
      %v4352 = vmul.f32 1.0, %v4351
      %v4353 = vrcp.pop %v4293
      %v4354 = vmul.f32 1.0, %v4353
      %v4355 = vrcp.pop %v4294
      %v4356 = vmul.f32 1.0, %v4355
      %v4357 = vrcp.pop %v4295
      %v4358 = vmul.f32 1.0, %v4357
      %v4359 = vrcp.pop %v4296
      %v4360 = vmul.f32 1.0, %v4359
      %v4361 = vmul.f32 %v4043, %v4298
      %v4362 = vmul.f32 %v4046, %v4300
      %v4363 = vmul.f32 %v4051, %v4302
      %v4364 = vmul.f32 %v4054, %v4304
      %v4365 = vmul.f32 %v4059, %v4306
      %v4366 = vmul.f32 %v4062, %v4308
      %v4367 = vmul.f32 %v4067, %v4310
      %v4368 = vmul.f32 %v4070, %v4312
      %v4369 = vmul.f32 %v4075, %v4314
      %v4370 = vmul.f32 %v4078, %v4316
      %v4371 = vmul.f32 %v4083, %v4318
      %v4372 = vmul.f32 %v4086, %v4320
      %v4373 = vmul.f32 %v4091, %v4322
      %v4374 = vmul.f32 %v4094, %v4324
      %v4375 = vmul.f32 %v4099, %v4326
      %v4376 = vmul.f32 %v4102, %v4328
      %v4377 = vmul.f32 %v4107, %v4330
      %v4378 = vmul.f32 %v4110, %v4332
      %v4379 = vmul.f32 %v4115, %v4334
      %v4380 = vmul.f32 %v4118, %v4336
      %v4381 = vmul.f32 %v4123, %v4338
      %v4382 = vmul.f32 %v4126, %v4340
      %v4383 = vmul.f32 %v4131, %v4342
      %v4384 = vmul.f32 %v4134, %v4344
      %v4385 = vmul.f32 %v4139, %v4346
      %v4386 = vmul.f32 %v4142, %v4348
      %v4387 = vmul.f32 %v4147, %v4350
      %v4388 = vmul.f32 %v4150, %v4352
      %v4389 = vmul.f32 %v4155, %v4354
      %v4390 = vmul.f32 %v4158, %v4356
      %v4391 = vmul.f32 %v4163, %v4358
      %v4392 = vmul.f32 %v4166, %v4360
      %4393 = vst.msk [vmem:[%s2407 + $0x1] sm:$0xff] %vm1545, %v4361
      %4394 = vst.msk [vmem:[%s2407 + $0x9] sm:$0xff] %vm1545, %v4362
      %4395 = vst.msk [vmem:[%s2407 + $0x19] sm:$0xff] %vm1545, %v4363
      %4396 = vst.msk [vmem:[%s2407 + $0x21] sm:$0xff] %vm1545, %v4364
      %4397 = vst.msk [vmem:[%s2407 + $0x31] sm:$0xff] %vm1545, %v4365
      %4398 = vst.msk [vmem:[%s2407 + $0x39] sm:$0xff] %vm1545, %v4366
      %4399 = vst.msk [vmem:[%s2407 + $0x49] sm:$0xff] %vm1545, %v4367
      %4400 = vst.msk [vmem:[%s2407 + $0x51] sm:$0xff] %vm1545, %v4368
      %4401 = vst.msk [vmem:[%s2407 + $0x61] sm:$0xff] %vm1545, %v4369
      %4402 = vst.msk [vmem:[%s2407 + $0x69] sm:$0xff] %vm1545, %v4370
      %4403 = vst.msk [vmem:[%s2407 + $0x79] sm:$0xff] %vm1545, %v4371
      %4404 = vst.msk [vmem:[%s2407 + $0x81] sm:$0xff] %vm1545, %v4372
      %4405 = vst.msk [vmem:[%s2407 + $0x91] sm:$0xff] %vm1545, %v4373
      %4406 = vst.msk [vmem:[%s2407 + $0x99] sm:$0xff] %vm1545, %v4374
      %4407 = vst.msk [vmem:[%s2407 + $0xa9] sm:$0xff] %vm1545, %v4375
      %4408 = vst.msk [vmem:[%s2407 + $0xb1] sm:$0xff] %vm1545, %v4376
      %4409 = vst.msk [vmem:[%s2407 + $0xc1] sm:$0xff] %vm1545, %v4377
      %4410 = vst.msk [vmem:[%s2407 + $0xc9] sm:$0xff] %vm1545, %v4378
      %4411 = vst.msk [vmem:[%s2407 + $0xd9] sm:$0xff] %vm1545, %v4379
      %4412 = vst.msk [vmem:[%s2407 + $0xe1] sm:$0xff] %vm1545, %v4380
      %4413 = vst.msk [vmem:[%s2407 + $0xf1] sm:$0xff] %vm1545, %v4381
      %4414 = vst.msk [vmem:[%s2407 + $0xf9] sm:$0xff] %vm1545, %v4382
      %4415 = vst.msk [vmem:[%s2407 + $0x109] sm:$0xff] %vm1545, %v4383
      %4416 = vst.msk [vmem:[%s2407 + $0x111] sm:$0xff] %vm1545, %v4384
      %4417 = vst.msk [vmem:[%s2407 + $0x121] sm:$0xff] %vm1545, %v4385
      %4418 = vst.msk [vmem:[%s2407 + $0x129] sm:$0xff] %vm1545, %v4386
      %4419 = vst.msk [vmem:[%s2407 + $0x139] sm:$0xff] %vm1545, %v4387
      %4420 = vst.msk [vmem:[%s2407 + $0x141] sm:$0xff] %vm1545, %v4388
      %4421 = vst.msk [vmem:[%s2407 + $0x151] sm:$0xff] %vm1545, %v4389
      %4422 = vst.msk [vmem:[%s2407 + $0x159] sm:$0xff] %vm1545, %v4390
      %4423 = vst.msk [vmem:[%s2407 + $0x169] sm:$0xff] %vm1545, %v4391
      %4424 = vst.msk [vmem:[%s2407 + $0x171] sm:$0xff] %vm1545, %v4392
      %v4425 = vld [vmem:[#allocation2] sm:$0xff]
      %v4426 = vld [vmem:[#allocation2 + $0x8] sm:$0xff]
      %v4427 = vld [vmem:[#allocation2 + $0x18] sm:$0xff]
      %v4428 = vld [vmem:[#allocation2 + $0x20] sm:$0xff]
      %v4429 = vld [vmem:[#allocation2 + $0x30] sm:$0xff]
      %v4430 = vld [vmem:[#allocation2 + $0x38] sm:$0xff]
      %v4431 = vld [vmem:[#allocation2 + $0x48] sm:$0xff]
      %v4432 = vld [vmem:[#allocation2 + $0x50] sm:$0xff]
      %v4433 = vld [vmem:[#allocation2 + $0x60] sm:$0xff]
      %v4434 = vld [vmem:[#allocation2 + $0x68] sm:$0xff]
      %v4435 = vld [vmem:[#allocation2 + $0x78] sm:$0xff]
      %v4436 = vld [vmem:[#allocation2 + $0x80] sm:$0xff]
      %v4437 = vld [vmem:[#allocation2 + $0x90] sm:$0xff]
      %v4438 = vld [vmem:[#allocation2 + $0x98] sm:$0xff]
      %v4439 = vld [vmem:[#allocation2 + $0xa8] sm:$0xff]
      %v4440 = vld [vmem:[#allocation2 + $0xb0] sm:$0xff]
      %v4441 = vld [vmem:[#allocation2 + $0xc0] sm:$0xff]
      %v4442 = vld [vmem:[#allocation2 + $0xc8] sm:$0xff]
      %v4443 = vld [vmem:[#allocation2 + $0xd8] sm:$0xff]
      %v4444 = vld [vmem:[#allocation2 + $0xe0] sm:$0xff]
      %v4445 = vld [vmem:[#allocation2 + $0xf0] sm:$0xff]
      %v4446 = vld [vmem:[#allocation2 + $0xf8] sm:$0xff]
      %v4447 = vld [vmem:[#allocation2 + $0x108] sm:$0xff]
      %v4448 = vld [vmem:[#allocation2 + $0x110] sm:$0xff]
      %v4449 = vld [vmem:[#allocation2 + $0x120] sm:$0xff]
      %v4450 = vld [vmem:[#allocation2 + $0x128] sm:$0xff]
      %v4451 = vld [vmem:[#allocation2 + $0x138] sm:$0xff]
      %v4452 = vld [vmem:[#allocation2 + $0x140] sm:$0xff]
      %v4453 = vld [vmem:[#allocation2 + $0x150] sm:$0xff]
      %v4454 = vld [vmem:[#allocation2 + $0x158] sm:$0xff]
      %v4455 = vld [vmem:[#allocation2 + $0x168] sm:$0xff]
      %v4456 = vld [vmem:[#allocation2 + $0x170] sm:$0xff]
      %v4457 = vld [vmem:[#allocation2 + $0x1] sm:$0xff]
      %v4458 = vld [vmem:[#allocation2 + $0x9] sm:$0xff]
      %v4459 = vld [vmem:[#allocation2 + $0x19] sm:$0xff]
      %v4460 = vld [vmem:[#allocation2 + $0x21] sm:$0xff]
      %v4461 = vld [vmem:[#allocation2 + $0x31] sm:$0xff]
      %v4462 = vld [vmem:[#allocation2 + $0x39] sm:$0xff]
      %v4463 = vld [vmem:[#allocation2 + $0x49] sm:$0xff]
      %v4464 = vld [vmem:[#allocation2 + $0x51] sm:$0xff]
      %v4465 = vld [vmem:[#allocation2 + $0x61] sm:$0xff]
      %v4466 = vld [vmem:[#allocation2 + $0x69] sm:$0xff]
      %v4467 = vld [vmem:[#allocation2 + $0x79] sm:$0xff]
      %v4468 = vld [vmem:[#allocation2 + $0x81] sm:$0xff]
      %v4469 = vld [vmem:[#allocation2 + $0x91] sm:$0xff]
      %v4470 = vld [vmem:[#allocation2 + $0x99] sm:$0xff]
      %v4471 = vld [vmem:[#allocation2 + $0xa9] sm:$0xff]
      %v4472 = vld [vmem:[#allocation2 + $0xb1] sm:$0xff]
      %v4473 = vld [vmem:[#allocation2 + $0xc1] sm:$0xff]
      %v4474 = vld [vmem:[#allocation2 + $0xc9] sm:$0xff]
      %v4475 = vld [vmem:[#allocation2 + $0xd9] sm:$0xff]
      %v4476 = vld [vmem:[#allocation2 + $0xe1] sm:$0xff]
      %v4477 = vld [vmem:[#allocation2 + $0xf1] sm:$0xff]
      %v4478 = vld [vmem:[#allocation2 + $0xf9] sm:$0xff]
      %v4479 = vld [vmem:[#allocation2 + $0x109] sm:$0xff]
      %v4480 = vld [vmem:[#allocation2 + $0x111] sm:$0xff]
      %v4481 = vld [vmem:[#allocation2 + $0x121] sm:$0xff]
      %v4482 = vld [vmem:[#allocation2 + $0x129] sm:$0xff]
      %v4483 = vld [vmem:[#allocation2 + $0x139] sm:$0xff]
      %v4484 = vld [vmem:[#allocation2 + $0x141] sm:$0xff]
      %v4485 = vld [vmem:[#allocation2 + $0x151] sm:$0xff]
      %v4486 = vld [vmem:[#allocation2 + $0x159] sm:$0xff]
      %v4487 = vld [vmem:[#allocation2 + $0x169] sm:$0xff]
      %v4488 = vld [vmem:[#allocation2 + $0x171] sm:$0xff]
      %v4489 = vld [vmem:[#allocation2 + $0x2] sm:$0xff]
      %v4490 = vld [vmem:[#allocation2 + $0xa] sm:$0xff]
      %v4491 = vld [vmem:[#allocation2 + $0x1a] sm:$0xff]
      %v4492 = vld [vmem:[#allocation2 + $0x22] sm:$0xff]
      %v4493 = vld [vmem:[#allocation2 + $0x32] sm:$0xff]
      %v4494 = vld [vmem:[#allocation2 + $0x3a] sm:$0xff]
      %v4495 = vld [vmem:[#allocation2 + $0x4a] sm:$0xff]
      %v4496 = vld [vmem:[#allocation2 + $0x52] sm:$0xff]
      %v4497 = vld [vmem:[#allocation2 + $0x62] sm:$0xff]
      %v4498 = vld [vmem:[#allocation2 + $0x6a] sm:$0xff]
      %v4499 = vld [vmem:[#allocation2 + $0x7a] sm:$0xff]
      %v4500 = vld [vmem:[#allocation2 + $0x82] sm:$0xff]
      %v4501 = vld [vmem:[#allocation2 + $0x92] sm:$0xff]
      %v4502 = vld [vmem:[#allocation2 + $0x9a] sm:$0xff]
      %v4503 = vld [vmem:[#allocation2 + $0xaa] sm:$0xff]
      %v4504 = vld [vmem:[#allocation2 + $0xb2] sm:$0xff]
      %v4505 = vld [vmem:[#allocation2 + $0xc2] sm:$0xff]
      %v4506 = vld [vmem:[#allocation2 + $0xca] sm:$0xff]
      %v4507 = vld [vmem:[#allocation2 + $0xda] sm:$0xff]
      %v4508 = vld [vmem:[#allocation2 + $0xe2] sm:$0xff]
      %v4509 = vld [vmem:[#allocation2 + $0xf2] sm:$0xff]
      %v4510 = vld [vmem:[#allocation2 + $0xfa] sm:$0xff]
      %v4511 = vld [vmem:[#allocation2 + $0x10a] sm:$0xff]
      %v4512 = vld [vmem:[#allocation2 + $0x112] sm:$0xff]
      %v4513 = vld [vmem:[#allocation2 + $0x122] sm:$0xff]
      %v4514 = vld [vmem:[#allocation2 + $0x12a] sm:$0xff]
      %v4515 = vld [vmem:[#allocation2 + $0x13a] sm:$0xff]
      %v4516 = vld [vmem:[#allocation2 + $0x142] sm:$0xff]
      %v4517 = vld [vmem:[#allocation2 + $0x152] sm:$0xff]
      %v4518 = vld [vmem:[#allocation2 + $0x15a] sm:$0xff]
      %v4519 = vld [vmem:[#allocation2 + $0x16a] sm:$0xff]
      %v4520 = vld [vmem:[#allocation2 + $0x172] sm:$0xff]
      %v4521 = vld [vmem:[%s2407] sm:$0xff]
      %v4522 = vld [vmem:[%s2407 + $0x8] sm:$0xff]
      %v4523 = vld [vmem:[%s2407 + $0x18] sm:$0xff]
      %v4524 = vld [vmem:[%s2407 + $0x20] sm:$0xff]
      %v4525 = vld [vmem:[%s2407 + $0x30] sm:$0xff]
      %v4526 = vld [vmem:[%s2407 + $0x38] sm:$0xff]
      %v4527 = vld [vmem:[%s2407 + $0x48] sm:$0xff]
      %v4528 = vld [vmem:[%s2407 + $0x50] sm:$0xff]
      %v4529 = vld [vmem:[%s2407 + $0x60] sm:$0xff]
      %v4530 = vld [vmem:[%s2407 + $0x68] sm:$0xff]
      %v4531 = vld [vmem:[%s2407 + $0x78] sm:$0xff]
      %v4532 = vld [vmem:[%s2407 + $0x80] sm:$0xff]
      %v4533 = vld [vmem:[%s2407 + $0x90] sm:$0xff]
      %v4534 = vld [vmem:[%s2407 + $0x98] sm:$0xff]
      %v4535 = vld [vmem:[%s2407 + $0xa8] sm:$0xff]
      %v4536 = vld [vmem:[%s2407 + $0xb0] sm:$0xff]
      %v4537 = vld [vmem:[%s2407 + $0xc0] sm:$0xff]
      %v4538 = vld [vmem:[%s2407 + $0xc8] sm:$0xff]
      %v4539 = vld [vmem:[%s2407 + $0xd8] sm:$0xff]
      %v4540 = vld [vmem:[%s2407 + $0xe0] sm:$0xff]
      %v4541 = vld [vmem:[%s2407 + $0xf0] sm:$0xff]
      %v4542 = vld [vmem:[%s2407 + $0xf8] sm:$0xff]
      %v4543 = vld [vmem:[%s2407 + $0x108] sm:$0xff]
      %v4544 = vld [vmem:[%s2407 + $0x110] sm:$0xff]
      %v4545 = vld [vmem:[%s2407 + $0x120] sm:$0xff]
      %v4546 = vld [vmem:[%s2407 + $0x128] sm:$0xff]
      %v4547 = vld [vmem:[%s2407 + $0x138] sm:$0xff]
      %v4548 = vld [vmem:[%s2407 + $0x140] sm:$0xff]
      %v4549 = vld [vmem:[%s2407 + $0x150] sm:$0xff]
      %v4550 = vld [vmem:[%s2407 + $0x158] sm:$0xff]
      %v4551 = vld [vmem:[%s2407 + $0x168] sm:$0xff]
      %v4552 = vld [vmem:[%s2407 + $0x170] sm:$0xff]
      %v4553 = vld [vmem:[%s2407 + $0x1] sm:$0xff]
      %v4554 = vld [vmem:[%s2407 + $0x9] sm:$0xff]
      %v4555 = vld [vmem:[%s2407 + $0x19] sm:$0xff]
      %v4556 = vld [vmem:[%s2407 + $0x21] sm:$0xff]
      %v4557 = vld [vmem:[%s2407 + $0x31] sm:$0xff]
      %v4558 = vld [vmem:[%s2407 + $0x39] sm:$0xff]
      %v4559 = vld [vmem:[%s2407 + $0x49] sm:$0xff]
      %v4560 = vld [vmem:[%s2407 + $0x51] sm:$0xff]
      %v4561 = vld [vmem:[%s2407 + $0x61] sm:$0xff]
      %v4562 = vld [vmem:[%s2407 + $0x69] sm:$0xff]
      %v4563 = vld [vmem:[%s2407 + $0x79] sm:$0xff]
      %v4564 = vld [vmem:[%s2407 + $0x81] sm:$0xff]
      %v4565 = vld [vmem:[%s2407 + $0x91] sm:$0xff]
      %v4566 = vld [vmem:[%s2407 + $0x99] sm:$0xff]
      %v4567 = vld [vmem:[%s2407 + $0xa9] sm:$0xff]
      %v4568 = vld [vmem:[%s2407 + $0xb1] sm:$0xff]
      %v4569 = vld [vmem:[%s2407 + $0xc1] sm:$0xff]
      %v4570 = vld [vmem:[%s2407 + $0xc9] sm:$0xff]
      %v4571 = vld [vmem:[%s2407 + $0xd9] sm:$0xff]
      %v4572 = vld [vmem:[%s2407 + $0xe1] sm:$0xff]
      %v4573 = vld [vmem:[%s2407 + $0xf1] sm:$0xff]
      %v4574 = vld [vmem:[%s2407 + $0xf9] sm:$0xff]
      %v4575 = vld [vmem:[%s2407 + $0x109] sm:$0xff]
      %v4576 = vld [vmem:[%s2407 + $0x111] sm:$0xff]
      %v4577 = vld [vmem:[%s2407 + $0x121] sm:$0xff]
      %v4578 = vld [vmem:[%s2407 + $0x129] sm:$0xff]
      %v4579 = vld [vmem:[%s2407 + $0x139] sm:$0xff]
      %v4580 = vld [vmem:[%s2407 + $0x141] sm:$0xff]
      %v4581 = vld [vmem:[%s2407 + $0x151] sm:$0xff]
      %v4582 = vld [vmem:[%s2407 + $0x159] sm:$0xff]
      %v4583 = vld [vmem:[%s2407 + $0x169] sm:$0xff]
      %v4584 = vld [vmem:[%s2407 + $0x171] sm:$0xff]
      %v4585 = vld [vmem:[%s2407 + $0x2] sm:$0xff]
      %v4586 = vld [vmem:[%s2407 + $0xa] sm:$0xff]
      %v4587 = vld [vmem:[%s2407 + $0x1a] sm:$0xff]
      %v4588 = vld [vmem:[%s2407 + $0x22] sm:$0xff]
      %v4589 = vld [vmem:[%s2407 + $0x32] sm:$0xff]
      %v4590 = vld [vmem:[%s2407 + $0x3a] sm:$0xff]
      %v4591 = vld [vmem:[%s2407 + $0x4a] sm:$0xff]
      %v4592 = vld [vmem:[%s2407 + $0x52] sm:$0xff]
      %v4593 = vld [vmem:[%s2407 + $0x62] sm:$0xff]
      %v4594 = vld [vmem:[%s2407 + $0x6a] sm:$0xff]
      %v4595 = vld [vmem:[%s2407 + $0x7a] sm:$0xff]
      %v4596 = vld [vmem:[%s2407 + $0x82] sm:$0xff]
      %v4597 = vld [vmem:[%s2407 + $0x92] sm:$0xff]
      %v4598 = vld [vmem:[%s2407 + $0x9a] sm:$0xff]
      %v4599 = vld [vmem:[%s2407 + $0xaa] sm:$0xff]
      %v4600 = vld [vmem:[%s2407 + $0xb2] sm:$0xff]
      %v4601 = vld [vmem:[%s2407 + $0xc2] sm:$0xff]
      %v4602 = vld [vmem:[%s2407 + $0xca] sm:$0xff]
      %v4603 = vld [vmem:[%s2407 + $0xda] sm:$0xff]
      %v4604 = vld [vmem:[%s2407 + $0xe2] sm:$0xff]
      %v4605 = vld [vmem:[%s2407 + $0xf2] sm:$0xff]
      %v4606 = vld [vmem:[%s2407 + $0xfa] sm:$0xff]
      %v4607 = vld [vmem:[%s2407 + $0x10a] sm:$0xff]
      %v4608 = vld [vmem:[%s2407 + $0x112] sm:$0xff]
      %v4609 = vld [vmem:[%s2407 + $0x122] sm:$0xff]
      %v4610 = vld [vmem:[%s2407 + $0x12a] sm:$0xff]
      %v4611 = vld [vmem:[%s2407 + $0x13a] sm:$0xff]
      %v4612 = vld [vmem:[%s2407 + $0x142] sm:$0xff]
      %v4613 = vld [vmem:[%s2407 + $0x152] sm:$0xff]
      %v4614 = vld [vmem:[%s2407 + $0x15a] sm:$0xff]
      %v4615 = vld [vmem:[%s2407 + $0x16a] sm:$0xff]
      %v4616 = vld [vmem:[%s2407 + $0x172] sm:$0xff]
      %v4617 = vld [vmem:[%s2632] sm:$0xff]
      %v4618 = vld [vmem:[%s2632 + $0x8] sm:$0xff]
      %v4619 = vld [vmem:[%s2632 + $0x18] sm:$0xff]
      %v4620 = vld [vmem:[%s2632 + $0x20] sm:$0xff]
      %v4621 = vld [vmem:[%s2632 + $0x30] sm:$0xff]
      %v4622 = vld [vmem:[%s2632 + $0x38] sm:$0xff]
      %v4623 = vld [vmem:[%s2632 + $0x48] sm:$0xff]
      %v4624 = vld [vmem:[%s2632 + $0x50] sm:$0xff]
      %v4625 = vld [vmem:[%s2632 + $0x60] sm:$0xff]
      %v4626 = vld [vmem:[%s2632 + $0x68] sm:$0xff]
      %v4627 = vld [vmem:[%s2632 + $0x78] sm:$0xff]
      %v4628 = vld [vmem:[%s2632 + $0x80] sm:$0xff]
      %v4629 = vld [vmem:[%s2632 + $0x90] sm:$0xff]
      %v4630 = vld [vmem:[%s2632 + $0x98] sm:$0xff]
      %v4631 = vld [vmem:[%s2632 + $0xa8] sm:$0xff]
      %v4632 = vld [vmem:[%s2632 + $0xb0] sm:$0xff]
      %v4633 = vld [vmem:[%s2632 + $0xc0] sm:$0xff]
      %v4634 = vld [vmem:[%s2632 + $0xc8] sm:$0xff]
      %v4635 = vld [vmem:[%s2632 + $0xd8] sm:$0xff]
      %v4636 = vld [vmem:[%s2632 + $0xe0] sm:$0xff]
      %v4637 = vld [vmem:[%s2632 + $0xf0] sm:$0xff]
      %v4638 = vld [vmem:[%s2632 + $0xf8] sm:$0xff]
      %v4639 = vld [vmem:[%s2632 + $0x108] sm:$0xff]
      %v4640 = vld [vmem:[%s2632 + $0x110] sm:$0xff]
      %v4641 = vld [vmem:[%s2632 + $0x120] sm:$0xff]
      %v4642 = vld [vmem:[%s2632 + $0x128] sm:$0xff]
      %v4643 = vld [vmem:[%s2632 + $0x138] sm:$0xff]
      %v4644 = vld [vmem:[%s2632 + $0x140] sm:$0xff]
      %v4645 = vld [vmem:[%s2632 + $0x150] sm:$0xff]
      %v4646 = vld [vmem:[%s2632 + $0x158] sm:$0xff]
      %v4647 = vld [vmem:[%s2632 + $0x168] sm:$0xff]
      %v4648 = vld [vmem:[%s2632 + $0x170] sm:$0xff]
      %v4649 = vld [vmem:[%s2632 + $0x1] sm:$0xff]
      %v4650 = vld [vmem:[%s2632 + $0x9] sm:$0xff]
      %v4651 = vld [vmem:[%s2632 + $0x19] sm:$0xff]
      %v4652 = vld [vmem:[%s2632 + $0x21] sm:$0xff]
      %v4653 = vld [vmem:[%s2632 + $0x31] sm:$0xff]
      %v4654 = vld [vmem:[%s2632 + $0x39] sm:$0xff]
      %v4655 = vld [vmem:[%s2632 + $0x49] sm:$0xff]
      %v4656 = vld [vmem:[%s2632 + $0x51] sm:$0xff]
      %v4657 = vld [vmem:[%s2632 + $0x61] sm:$0xff]
      %v4658 = vld [vmem:[%s2632 + $0x69] sm:$0xff]
      %v4659 = vld [vmem:[%s2632 + $0x79] sm:$0xff]
      %v4660 = vld [vmem:[%s2632 + $0x81] sm:$0xff]
      %v4661 = vld [vmem:[%s2632 + $0x91] sm:$0xff]
      %v4662 = vld [vmem:[%s2632 + $0x99] sm:$0xff]
      %v4663 = vld [vmem:[%s2632 + $0xa9] sm:$0xff]
      %v4664 = vld [vmem:[%s2632 + $0xb1] sm:$0xff]
      %v4665 = vld [vmem:[%s2632 + $0xc1] sm:$0xff]
      %v4666 = vld [vmem:[%s2632 + $0xc9] sm:$0xff]
      %v4667 = vld [vmem:[%s2632 + $0xd9] sm:$0xff]
      %v4668 = vld [vmem:[%s2632 + $0xe1] sm:$0xff]
      %v4669 = vld [vmem:[%s2632 + $0xf1] sm:$0xff]
      %v4670 = vld [vmem:[%s2632 + $0xf9] sm:$0xff]
      %v4671 = vld [vmem:[%s2632 + $0x109] sm:$0xff]
      %v4672 = vld [vmem:[%s2632 + $0x111] sm:$0xff]
      %v4673 = vld [vmem:[%s2632 + $0x121] sm:$0xff]
      %v4674 = vld [vmem:[%s2632 + $0x129] sm:$0xff]
      %v4675 = vld [vmem:[%s2632 + $0x139] sm:$0xff]
      %v4676 = vld [vmem:[%s2632 + $0x141] sm:$0xff]
      %v4677 = vld [vmem:[%s2632 + $0x151] sm:$0xff]
      %v4678 = vld [vmem:[%s2632 + $0x159] sm:$0xff]
      %v4679 = vld [vmem:[%s2632 + $0x169] sm:$0xff]
      %v4680 = vld [vmem:[%s2632 + $0x171] sm:$0xff]
      %v4681 = vld [vmem:[%s2632 + $0x2] sm:$0xff]
      %v4682 = vld [vmem:[%s2632 + $0xa] sm:$0xff]
      %v4683 = vld [vmem:[%s2632 + $0x1a] sm:$0xff]
      %v4684 = vld [vmem:[%s2632 + $0x22] sm:$0xff]
      %v4685 = vld [vmem:[%s2632 + $0x32] sm:$0xff]
      %v4686 = vld [vmem:[%s2632 + $0x3a] sm:$0xff]
      %v4687 = vld [vmem:[%s2632 + $0x4a] sm:$0xff]
      %v4688 = vld [vmem:[%s2632 + $0x52] sm:$0xff]
      %v4689 = vld [vmem:[%s2632 + $0x62] sm:$0xff]
      %v4690 = vld [vmem:[%s2632 + $0x6a] sm:$0xff]
      %v4691 = vld [vmem:[%s2632 + $0x7a] sm:$0xff]
      %v4692 = vld [vmem:[%s2632 + $0x82] sm:$0xff]
      %v4693 = vld [vmem:[%s2632 + $0x92] sm:$0xff]
      %v4694 = vld [vmem:[%s2632 + $0x9a] sm:$0xff]
      %v4695 = vld [vmem:[%s2632 + $0xaa] sm:$0xff]
      %v4696 = vld [vmem:[%s2632 + $0xb2] sm:$0xff]
      %v4697 = vld [vmem:[%s2632 + $0xc2] sm:$0xff]
      %v4698 = vld [vmem:[%s2632 + $0xca] sm:$0xff]
      %v4699 = vld [vmem:[%s2632 + $0xda] sm:$0xff]
      %v4700 = vld [vmem:[%s2632 + $0xe2] sm:$0xff]
      %v4701 = vld [vmem:[%s2632 + $0xf2] sm:$0xff]
      %v4702 = vld [vmem:[%s2632 + $0xfa] sm:$0xff]
      %v4703 = vld [vmem:[%s2632 + $0x10a] sm:$0xff]
      %v4704 = vld [vmem:[%s2632 + $0x112] sm:$0xff]
      %v4705 = vld [vmem:[%s2632 + $0x122] sm:$0xff]
      %v4706 = vld [vmem:[%s2632 + $0x12a] sm:$0xff]
      %v4707 = vld [vmem:[%s2632 + $0x13a] sm:$0xff]
      %v4708 = vld [vmem:[%s2632 + $0x142] sm:$0xff]
      %v4709 = vld [vmem:[%s2632 + $0x152] sm:$0xff]
      %v4710 = vld [vmem:[%s2632 + $0x15a] sm:$0xff]
      %v4711 = vld [vmem:[%s2632 + $0x16a] sm:$0xff]
      %v4712 = vld [vmem:[%s2632 + $0x172] sm:$0xff]
      %4745 = vrot.lane.b32.xlu0 %v4457, 16
      %v4746 = vpop.permute.xlu0 %4745
      %4747 = vrot.lane.b32.xlu0 %v4458, 16
      %v4748 = vpop.permute.xlu0 %4747
      %4749 = vrot.lane.b32.xlu0 %v4459, 16
      %v4750 = vpop.permute.xlu0 %4749
      %4751 = vrot.lane.b32.xlu0 %v4460, 16
      %v4752 = vpop.permute.xlu0 %4751
      %4753 = vrot.lane.b32.xlu0 %v4461, 16
      %v4754 = vpop.permute.xlu0 %4753
      %4755 = vrot.lane.b32.xlu0 %v4462, 16
      %v4756 = vpop.permute.xlu0 %4755
      %4757 = vrot.lane.b32.xlu0 %v4463, 16
      %v4758 = vpop.permute.xlu0 %4757
      %4759 = vrot.lane.b32.xlu0 %v4464, 16
      %v4760 = vpop.permute.xlu0 %4759
      %4761 = vrot.lane.b32.xlu0 %v4465, 16
      %v4762 = vpop.permute.xlu0 %4761
      %4763 = vrot.lane.b32.xlu0 %v4466, 16
      %v4764 = vpop.permute.xlu0 %4763
      %4765 = vrot.lane.b32.xlu0 %v4467, 16
      %v4766 = vpop.permute.xlu0 %4765
      %4767 = vrot.lane.b32.xlu0 %v4468, 16
      %v4768 = vpop.permute.xlu0 %4767
      %4769 = vrot.lane.b32.xlu0 %v4469, 16
      %v4770 = vpop.permute.xlu0 %4769
      %4771 = vrot.lane.b32.xlu0 %v4470, 16
      %v4772 = vpop.permute.xlu0 %4771
      %4773 = vrot.lane.b32.xlu0 %v4471, 16
      %v4774 = vpop.permute.xlu0 %4773
      %4775 = vrot.lane.b32.xlu0 %v4472, 16
      %v4776 = vpop.permute.xlu0 %4775
      %4777 = vrot.lane.b32.xlu0 %v4473, 16
      %v4778 = vpop.permute.xlu0 %4777
      %4779 = vrot.lane.b32.xlu0 %v4474, 16
      %v4780 = vpop.permute.xlu0 %4779
      %4781 = vrot.lane.b32.xlu0 %v4475, 16
      %v4782 = vpop.permute.xlu0 %4781
      %4783 = vrot.lane.b32.xlu0 %v4476, 16
      %v4784 = vpop.permute.xlu0 %4783
      %4785 = vrot.lane.b32.xlu0 %v4477, 16
      %v4786 = vpop.permute.xlu0 %4785
      %4787 = vrot.lane.b32.xlu0 %v4478, 16
      %v4788 = vpop.permute.xlu0 %4787
      %4789 = vrot.lane.b32.xlu0 %v4479, 16
      %v4790 = vpop.permute.xlu0 %4789
      %4791 = vrot.lane.b32.xlu0 %v4480, 16
      %v4792 = vpop.permute.xlu0 %4791
      %4793 = vrot.lane.b32.xlu0 %v4481, 16
      %v4794 = vpop.permute.xlu0 %4793
      %4795 = vrot.lane.b32.xlu0 %v4482, 16
      %v4796 = vpop.permute.xlu0 %4795
      %4797 = vrot.lane.b32.xlu0 %v4483, 16
      %v4798 = vpop.permute.xlu0 %4797
      %4799 = vrot.lane.b32.xlu0 %v4484, 16
      %v4800 = vpop.permute.xlu0 %4799
      %4801 = vrot.lane.b32.xlu0 %v4485, 16
      %v4802 = vpop.permute.xlu0 %4801
      %4803 = vrot.lane.b32.xlu0 %v4486, 16
      %v4804 = vpop.permute.xlu0 %4803
      %4805 = vrot.lane.b32.xlu0 %v4487, 16
      %v4806 = vpop.permute.xlu0 %4805
      %4807 = vrot.lane.b32.xlu0 %v4488, 16
      %v4808 = vpop.permute.xlu0 %4807
      %4873 = vrot.lane.b32.xlu0 %v4489, 32
      %v4874 = vpop.permute.xlu0 %4873
      %4875 = vrot.lane.b32.xlu0 %v4490, 32
      %v4876 = vpop.permute.xlu0 %4875
      %4877 = vrot.lane.b32.xlu0 %v4491, 32
      %v4878 = vpop.permute.xlu0 %4877
      %4879 = vrot.lane.b32.xlu0 %v4492, 32
      %v4880 = vpop.permute.xlu0 %4879
      %4881 = vrot.lane.b32.xlu0 %v4493, 32
      %v4882 = vpop.permute.xlu0 %4881
      %4883 = vrot.lane.b32.xlu0 %v4494, 32
      %v4884 = vpop.permute.xlu0 %4883
      %4885 = vrot.lane.b32.xlu0 %v4495, 32
      %v4886 = vpop.permute.xlu0 %4885
      %4887 = vrot.lane.b32.xlu0 %v4496, 32
      %v4888 = vpop.permute.xlu0 %4887
      %4889 = vrot.lane.b32.xlu0 %v4497, 32
      %v4890 = vpop.permute.xlu0 %4889
      %4891 = vrot.lane.b32.xlu0 %v4498, 32
      %v4892 = vpop.permute.xlu0 %4891
      %4893 = vrot.lane.b32.xlu0 %v4499, 32
      %v4894 = vpop.permute.xlu0 %4893
      %4895 = vrot.lane.b32.xlu0 %v4500, 32
      %v4896 = vpop.permute.xlu0 %4895
      %4897 = vrot.lane.b32.xlu0 %v4501, 32
      %v4898 = vpop.permute.xlu0 %4897
      %4899 = vrot.lane.b32.xlu0 %v4502, 32
      %v4900 = vpop.permute.xlu0 %4899
      %4901 = vrot.lane.b32.xlu0 %v4503, 32
      %v4902 = vpop.permute.xlu0 %4901
      %4903 = vrot.lane.b32.xlu0 %v4504, 32
      %v4904 = vpop.permute.xlu0 %4903
      %4905 = vrot.lane.b32.xlu0 %v4505, 32
      %v4906 = vpop.permute.xlu0 %4905
      %4907 = vrot.lane.b32.xlu0 %v4506, 32
      %v4908 = vpop.permute.xlu0 %4907
      %4909 = vrot.lane.b32.xlu0 %v4507, 32
      %v4910 = vpop.permute.xlu0 %4909
      %4911 = vrot.lane.b32.xlu0 %v4508, 32
      %v4912 = vpop.permute.xlu0 %4911
      %4913 = vrot.lane.b32.xlu0 %v4509, 32
      %v4914 = vpop.permute.xlu0 %4913
      %4915 = vrot.lane.b32.xlu0 %v4510, 32
      %v4916 = vpop.permute.xlu0 %4915
      %4917 = vrot.lane.b32.xlu0 %v4511, 32
      %v4918 = vpop.permute.xlu0 %4917
      %4919 = vrot.lane.b32.xlu0 %v4512, 32
      %v4920 = vpop.permute.xlu0 %4919
      %4921 = vrot.lane.b32.xlu0 %v4513, 32
      %v4922 = vpop.permute.xlu0 %4921
      %4923 = vrot.lane.b32.xlu0 %v4514, 32
      %v4924 = vpop.permute.xlu0 %4923
      %4925 = vrot.lane.b32.xlu0 %v4515, 32
      %v4926 = vpop.permute.xlu0 %4925
      %4927 = vrot.lane.b32.xlu0 %v4516, 32
      %v4928 = vpop.permute.xlu0 %4927
      %4929 = vrot.lane.b32.xlu0 %v4517, 32
      %v4930 = vpop.permute.xlu0 %4929
      %4931 = vrot.lane.b32.xlu0 %v4518, 32
      %v4932 = vpop.permute.xlu0 %4931
      %4933 = vrot.lane.b32.xlu0 %v4519, 32
      %v4934 = vpop.permute.xlu0 %4933
      %4935 = vrot.lane.b32.xlu0 %v4520, 32
      %v4936 = vpop.permute.xlu0 %4935
      %5001 = vrot.lane.b32.xlu0 %v4521, 48
      %v5002 = vpop.permute.xlu0 %5001
      %5003 = vrot.lane.b32.xlu0 %v4522, 48
      %v5004 = vpop.permute.xlu0 %5003
      %5005 = vrot.lane.b32.xlu0 %v4523, 48
      %v5006 = vpop.permute.xlu0 %5005
      %5007 = vrot.lane.b32.xlu0 %v4524, 48
      %v5008 = vpop.permute.xlu0 %5007
      %5009 = vrot.lane.b32.xlu0 %v4525, 48
      %v5010 = vpop.permute.xlu0 %5009
      %5011 = vrot.lane.b32.xlu0 %v4526, 48
      %v5012 = vpop.permute.xlu0 %5011
      %5013 = vrot.lane.b32.xlu0 %v4527, 48
      %v5014 = vpop.permute.xlu0 %5013
      %5015 = vrot.lane.b32.xlu0 %v4528, 48
      %v5016 = vpop.permute.xlu0 %5015
      %5017 = vrot.lane.b32.xlu0 %v4529, 48
      %v5018 = vpop.permute.xlu0 %5017
      %5019 = vrot.lane.b32.xlu0 %v4530, 48
      %v5020 = vpop.permute.xlu0 %5019
      %5021 = vrot.lane.b32.xlu0 %v4531, 48
      %v5022 = vpop.permute.xlu0 %5021
      %5023 = vrot.lane.b32.xlu0 %v4532, 48
      %v5024 = vpop.permute.xlu0 %5023
      %5025 = vrot.lane.b32.xlu0 %v4533, 48
      %v5026 = vpop.permute.xlu0 %5025
      %5027 = vrot.lane.b32.xlu0 %v4534, 48
      %v5028 = vpop.permute.xlu0 %5027
      %5029 = vrot.lane.b32.xlu0 %v4535, 48
      %v5030 = vpop.permute.xlu0 %5029
      %5031 = vrot.lane.b32.xlu0 %v4536, 48
      %v5032 = vpop.permute.xlu0 %5031
      %5033 = vrot.lane.b32.xlu0 %v4537, 48
      %v5034 = vpop.permute.xlu0 %5033
      %5035 = vrot.lane.b32.xlu0 %v4538, 48
      %v5036 = vpop.permute.xlu0 %5035
      %5037 = vrot.lane.b32.xlu0 %v4539, 48
      %v5038 = vpop.permute.xlu0 %5037
      %5039 = vrot.lane.b32.xlu0 %v4540, 48
      %v5040 = vpop.permute.xlu0 %5039
      %5041 = vrot.lane.b32.xlu0 %v4541, 48
      %v5042 = vpop.permute.xlu0 %5041
      %5043 = vrot.lane.b32.xlu0 %v4542, 48
      %v5044 = vpop.permute.xlu0 %5043
      %5045 = vrot.lane.b32.xlu0 %v4543, 48
      %v5046 = vpop.permute.xlu0 %5045
      %5047 = vrot.lane.b32.xlu0 %v4544, 48
      %v5048 = vpop.permute.xlu0 %5047
      %5049 = vrot.lane.b32.xlu0 %v4545, 48
      %v5050 = vpop.permute.xlu0 %5049
      %5051 = vrot.lane.b32.xlu0 %v4546, 48
      %v5052 = vpop.permute.xlu0 %5051
      %5053 = vrot.lane.b32.xlu0 %v4547, 48
      %v5054 = vpop.permute.xlu0 %5053
      %5055 = vrot.lane.b32.xlu0 %v4548, 48
      %v5056 = vpop.permute.xlu0 %5055
      %5057 = vrot.lane.b32.xlu0 %v4549, 48
      %v5058 = vpop.permute.xlu0 %5057
      %5059 = vrot.lane.b32.xlu0 %v4550, 48
      %v5060 = vpop.permute.xlu0 %5059
      %5061 = vrot.lane.b32.xlu0 %v4551, 48
      %v5062 = vpop.permute.xlu0 %5061
      %5063 = vrot.lane.b32.xlu0 %v4552, 48
      %v5064 = vpop.permute.xlu0 %5063
      %5129 = vrot.lane.b32.xlu0 %v4553, 64
      %v5130 = vpop.permute.xlu0 %5129
      %5131 = vrot.lane.b32.xlu0 %v4554, 64
      %v5132 = vpop.permute.xlu0 %5131
      %5133 = vrot.lane.b32.xlu0 %v4555, 64
      %v5134 = vpop.permute.xlu0 %5133
      %5135 = vrot.lane.b32.xlu0 %v4556, 64
      %v5136 = vpop.permute.xlu0 %5135
      %5137 = vrot.lane.b32.xlu0 %v4557, 64
      %v5138 = vpop.permute.xlu0 %5137
      %5139 = vrot.lane.b32.xlu0 %v4558, 64
      %v5140 = vpop.permute.xlu0 %5139
      %5141 = vrot.lane.b32.xlu0 %v4559, 64
      %v5142 = vpop.permute.xlu0 %5141
      %5143 = vrot.lane.b32.xlu0 %v4560, 64
      %v5144 = vpop.permute.xlu0 %5143
      %5145 = vrot.lane.b32.xlu0 %v4561, 64
      %v5146 = vpop.permute.xlu0 %5145
      %5147 = vrot.lane.b32.xlu0 %v4562, 64
      %v5148 = vpop.permute.xlu0 %5147
      %5149 = vrot.lane.b32.xlu0 %v4563, 64
      %v5150 = vpop.permute.xlu0 %5149
      %5151 = vrot.lane.b32.xlu0 %v4564, 64
      %v5152 = vpop.permute.xlu0 %5151
      %5153 = vrot.lane.b32.xlu0 %v4565, 64
      %v5154 = vpop.permute.xlu0 %5153
      %5155 = vrot.lane.b32.xlu0 %v4566, 64
      %v5156 = vpop.permute.xlu0 %5155
      %5157 = vrot.lane.b32.xlu0 %v4567, 64
      %v5158 = vpop.permute.xlu0 %5157
      %5159 = vrot.lane.b32.xlu0 %v4568, 64
      %v5160 = vpop.permute.xlu0 %5159
      %5161 = vrot.lane.b32.xlu0 %v4569, 64
      %v5162 = vpop.permute.xlu0 %5161
      %5163 = vrot.lane.b32.xlu0 %v4570, 64
      %v5164 = vpop.permute.xlu0 %5163
      %5165 = vrot.lane.b32.xlu0 %v4571, 64
      %v5166 = vpop.permute.xlu0 %5165
      %5167 = vrot.lane.b32.xlu0 %v4572, 64
      %v5168 = vpop.permute.xlu0 %5167
      %5169 = vrot.lane.b32.xlu0 %v4573, 64
      %v5170 = vpop.permute.xlu0 %5169
      %5171 = vrot.lane.b32.xlu0 %v4574, 64
      %v5172 = vpop.permute.xlu0 %5171
      %5173 = vrot.lane.b32.xlu0 %v4575, 64
      %v5174 = vpop.permute.xlu0 %5173
      %5175 = vrot.lane.b32.xlu0 %v4576, 64
      %v5176 = vpop.permute.xlu0 %5175
      %5177 = vrot.lane.b32.xlu0 %v4577, 64
      %v5178 = vpop.permute.xlu0 %5177
      %5179 = vrot.lane.b32.xlu0 %v4578, 64
      %v5180 = vpop.permute.xlu0 %5179
      %5181 = vrot.lane.b32.xlu0 %v4579, 64
      %v5182 = vpop.permute.xlu0 %5181
      %5183 = vrot.lane.b32.xlu0 %v4580, 64
      %v5184 = vpop.permute.xlu0 %5183
      %5185 = vrot.lane.b32.xlu0 %v4581, 64
      %v5186 = vpop.permute.xlu0 %5185
      %5187 = vrot.lane.b32.xlu0 %v4582, 64
      %v5188 = vpop.permute.xlu0 %5187
      %5189 = vrot.lane.b32.xlu0 %v4583, 64
      %v5190 = vpop.permute.xlu0 %5189
      %5191 = vrot.lane.b32.xlu0 %v4584, 64
      %v5192 = vpop.permute.xlu0 %5191
      %5257 = vrot.lane.b32.xlu0 %v4585, 80
      %v5258 = vpop.permute.xlu0 %5257
      %5259 = vrot.lane.b32.xlu0 %v4586, 80
      %v5260 = vpop.permute.xlu0 %5259
      %5261 = vrot.lane.b32.xlu0 %v4587, 80
      %v5262 = vpop.permute.xlu0 %5261
      %5263 = vrot.lane.b32.xlu0 %v4588, 80
      %v5264 = vpop.permute.xlu0 %5263
      %5265 = vrot.lane.b32.xlu0 %v4589, 80
      %v5266 = vpop.permute.xlu0 %5265
      %5267 = vrot.lane.b32.xlu0 %v4590, 80
      %v5268 = vpop.permute.xlu0 %5267
      %5269 = vrot.lane.b32.xlu0 %v4591, 80
      %v5270 = vpop.permute.xlu0 %5269
      %5271 = vrot.lane.b32.xlu0 %v4592, 80
      %v5272 = vpop.permute.xlu0 %5271
      %5273 = vrot.lane.b32.xlu0 %v4593, 80
      %v5274 = vpop.permute.xlu0 %5273
      %5275 = vrot.lane.b32.xlu0 %v4594, 80
      %v5276 = vpop.permute.xlu0 %5275
      %5277 = vrot.lane.b32.xlu0 %v4595, 80
      %v5278 = vpop.permute.xlu0 %5277
      %5279 = vrot.lane.b32.xlu0 %v4596, 80
      %v5280 = vpop.permute.xlu0 %5279
      %5281 = vrot.lane.b32.xlu0 %v4597, 80
      %v5282 = vpop.permute.xlu0 %5281
      %5283 = vrot.lane.b32.xlu0 %v4598, 80
      %v5284 = vpop.permute.xlu0 %5283
      %5285 = vrot.lane.b32.xlu0 %v4599, 80
      %v5286 = vpop.permute.xlu0 %5285
      %5287 = vrot.lane.b32.xlu0 %v4600, 80
      %v5288 = vpop.permute.xlu0 %5287
      %5289 = vrot.lane.b32.xlu0 %v4601, 80
      %v5290 = vpop.permute.xlu0 %5289
      %5291 = vrot.lane.b32.xlu0 %v4602, 80
      %v5292 = vpop.permute.xlu0 %5291
      %5293 = vrot.lane.b32.xlu0 %v4603, 80
      %v5294 = vpop.permute.xlu0 %5293
      %5295 = vrot.lane.b32.xlu0 %v4604, 80
      %v5296 = vpop.permute.xlu0 %5295
      %5297 = vrot.lane.b32.xlu0 %v4605, 80
      %v5298 = vpop.permute.xlu0 %5297
      %5299 = vrot.lane.b32.xlu0 %v4606, 80
      %v5300 = vpop.permute.xlu0 %5299
      %5301 = vrot.lane.b32.xlu0 %v4607, 80
      %v5302 = vpop.permute.xlu0 %5301
      %5303 = vrot.lane.b32.xlu0 %v4608, 80
      %v5304 = vpop.permute.xlu0 %5303
      %5305 = vrot.lane.b32.xlu0 %v4609, 80
      %v5306 = vpop.permute.xlu0 %5305
      %5307 = vrot.lane.b32.xlu0 %v4610, 80
      %v5308 = vpop.permute.xlu0 %5307
      %5309 = vrot.lane.b32.xlu0 %v4611, 80
      %v5310 = vpop.permute.xlu0 %5309
      %5311 = vrot.lane.b32.xlu0 %v4612, 80
      %v5312 = vpop.permute.xlu0 %5311
      %5313 = vrot.lane.b32.xlu0 %v4613, 80
      %v5314 = vpop.permute.xlu0 %5313
      %5315 = vrot.lane.b32.xlu0 %v4614, 80
      %v5316 = vpop.permute.xlu0 %5315
      %5317 = vrot.lane.b32.xlu0 %v4615, 80
      %v5318 = vpop.permute.xlu0 %5317
      %5319 = vrot.lane.b32.xlu0 %v4616, 80
      %v5320 = vpop.permute.xlu0 %5319
      %5385 = vrot.lane.b32.xlu0 %v4617, 96
      %v5386 = vpop.permute.xlu0 %5385
      %5387 = vrot.lane.b32.xlu0 %v4618, 96
      %v5388 = vpop.permute.xlu0 %5387
      %5389 = vrot.lane.b32.xlu0 %v4619, 96
      %v5390 = vpop.permute.xlu0 %5389
      %5391 = vrot.lane.b32.xlu0 %v4620, 96
      %v5392 = vpop.permute.xlu0 %5391
      %5393 = vrot.lane.b32.xlu0 %v4621, 96
      %v5394 = vpop.permute.xlu0 %5393
      %5395 = vrot.lane.b32.xlu0 %v4622, 96
      %v5396 = vpop.permute.xlu0 %5395
      %5397 = vrot.lane.b32.xlu0 %v4623, 96
      %v5398 = vpop.permute.xlu0 %5397
      %5399 = vrot.lane.b32.xlu0 %v4624, 96
      %v5400 = vpop.permute.xlu0 %5399
      %5401 = vrot.lane.b32.xlu0 %v4625, 96
      %v5402 = vpop.permute.xlu0 %5401
      %5403 = vrot.lane.b32.xlu0 %v4626, 96
      %v5404 = vpop.permute.xlu0 %5403
      %5405 = vrot.lane.b32.xlu0 %v4627, 96
      %v5406 = vpop.permute.xlu0 %5405
      %5407 = vrot.lane.b32.xlu0 %v4628, 96
      %v5408 = vpop.permute.xlu0 %5407
      %5409 = vrot.lane.b32.xlu0 %v4629, 96
      %v5410 = vpop.permute.xlu0 %5409
      %5411 = vrot.lane.b32.xlu0 %v4630, 96
      %v5412 = vpop.permute.xlu0 %5411
      %5413 = vrot.lane.b32.xlu0 %v4631, 96
      %v5414 = vpop.permute.xlu0 %5413
      %5415 = vrot.lane.b32.xlu0 %v4632, 96
      %v5416 = vpop.permute.xlu0 %5415
      %5417 = vrot.lane.b32.xlu0 %v4633, 96
      %v5418 = vpop.permute.xlu0 %5417
      %5419 = vrot.lane.b32.xlu0 %v4634, 96
      %v5420 = vpop.permute.xlu0 %5419
      %5421 = vrot.lane.b32.xlu0 %v4635, 96
      %v5422 = vpop.permute.xlu0 %5421
      %5423 = vrot.lane.b32.xlu0 %v4636, 96
      %v5424 = vpop.permute.xlu0 %5423
      %5425 = vrot.lane.b32.xlu0 %v4637, 96
      %v5426 = vpop.permute.xlu0 %5425
      %5427 = vrot.lane.b32.xlu0 %v4638, 96
      %v5428 = vpop.permute.xlu0 %5427
      %5429 = vrot.lane.b32.xlu0 %v4639, 96
      %v5430 = vpop.permute.xlu0 %5429
      %5431 = vrot.lane.b32.xlu0 %v4640, 96
      %v5432 = vpop.permute.xlu0 %5431
      %5433 = vrot.lane.b32.xlu0 %v4641, 96
      %v5434 = vpop.permute.xlu0 %5433
      %5435 = vrot.lane.b32.xlu0 %v4642, 96
      %v5436 = vpop.permute.xlu0 %5435
      %5437 = vrot.lane.b32.xlu0 %v4643, 96
      %v5438 = vpop.permute.xlu0 %5437
      %5439 = vrot.lane.b32.xlu0 %v4644, 96
      %v5440 = vpop.permute.xlu0 %5439
      %5441 = vrot.lane.b32.xlu0 %v4645, 96
      %v5442 = vpop.permute.xlu0 %5441
      %5443 = vrot.lane.b32.xlu0 %v4646, 96
      %v5444 = vpop.permute.xlu0 %5443
      %5445 = vrot.lane.b32.xlu0 %v4647, 96
      %v5446 = vpop.permute.xlu0 %5445
      %5447 = vrot.lane.b32.xlu0 %v4648, 96
      %v5448 = vpop.permute.xlu0 %5447
      %5513 = vrot.lane.b32.xlu0 %v4649, 112
      %v5514 = vpop.permute.xlu0 %5513
      %5515 = vrot.lane.b32.xlu0 %v4650, 112
      %v5516 = vpop.permute.xlu0 %5515
      %5517 = vrot.lane.b32.xlu0 %v4651, 112
      %v5518 = vpop.permute.xlu0 %5517
      %5519 = vrot.lane.b32.xlu0 %v4652, 112
      %v5520 = vpop.permute.xlu0 %5519
      %5521 = vrot.lane.b32.xlu0 %v4653, 112
      %v5522 = vpop.permute.xlu0 %5521
      %5523 = vrot.lane.b32.xlu0 %v4654, 112
      %v5524 = vpop.permute.xlu0 %5523
      %5525 = vrot.lane.b32.xlu0 %v4655, 112
      %v5526 = vpop.permute.xlu0 %5525
      %5527 = vrot.lane.b32.xlu0 %v4656, 112
      %v5528 = vpop.permute.xlu0 %5527
      %5529 = vrot.lane.b32.xlu0 %v4657, 112
      %v5530 = vpop.permute.xlu0 %5529
      %5531 = vrot.lane.b32.xlu0 %v4658, 112
      %v5532 = vpop.permute.xlu0 %5531
      %5533 = vrot.lane.b32.xlu0 %v4659, 112
      %v5534 = vpop.permute.xlu0 %5533
      %5535 = vrot.lane.b32.xlu0 %v4660, 112
      %v5536 = vpop.permute.xlu0 %5535
      %5537 = vrot.lane.b32.xlu0 %v4661, 112
      %v5538 = vpop.permute.xlu0 %5537
      %5539 = vrot.lane.b32.xlu0 %v4662, 112
      %v5540 = vpop.permute.xlu0 %5539
      %5541 = vrot.lane.b32.xlu0 %v4663, 112
      %v5542 = vpop.permute.xlu0 %5541
      %5543 = vrot.lane.b32.xlu0 %v4664, 112
      %v5544 = vpop.permute.xlu0 %5543
      %5545 = vrot.lane.b32.xlu0 %v4665, 112
      %v5546 = vpop.permute.xlu0 %5545
      %5547 = vrot.lane.b32.xlu0 %v4666, 112
      %v5548 = vpop.permute.xlu0 %5547
      %5549 = vrot.lane.b32.xlu0 %v4667, 112
      %v5550 = vpop.permute.xlu0 %5549
      %5551 = vrot.lane.b32.xlu0 %v4668, 112
      %v5552 = vpop.permute.xlu0 %5551
      %5553 = vrot.lane.b32.xlu0 %v4669, 112
      %v5554 = vpop.permute.xlu0 %5553
      %5555 = vrot.lane.b32.xlu0 %v4670, 112
      %v5556 = vpop.permute.xlu0 %5555
      %5557 = vrot.lane.b32.xlu0 %v4671, 112
      %v5558 = vpop.permute.xlu0 %5557
      %5559 = vrot.lane.b32.xlu0 %v4672, 112
      %v5560 = vpop.permute.xlu0 %5559
      %5561 = vrot.lane.b32.xlu0 %v4673, 112
      %v5562 = vpop.permute.xlu0 %5561
      %5563 = vrot.lane.b32.xlu0 %v4674, 112
      %v5564 = vpop.permute.xlu0 %5563
      %5565 = vrot.lane.b32.xlu0 %v4675, 112
      %v5566 = vpop.permute.xlu0 %5565
      %5567 = vrot.lane.b32.xlu0 %v4676, 112
      %v5568 = vpop.permute.xlu0 %5567
      %5569 = vrot.lane.b32.xlu0 %v4677, 112
      %v5570 = vpop.permute.xlu0 %5569
      %5571 = vrot.lane.b32.xlu0 %v4678, 112
      %v5572 = vpop.permute.xlu0 %5571
      %5573 = vrot.lane.b32.xlu0 %v4679, 112
      %v5574 = vpop.permute.xlu0 %5573
      %5575 = vrot.lane.b32.xlu0 %v4680, 112
      %v5576 = vpop.permute.xlu0 %5575
      %v5609 = vsel %vm1545, %v4425, %v4746
      %v5610 = vsel %vm1545, %v4426, %v4748
      %v5611 = vsel %vm1545, %v4427, %v4750
      %v5612 = vsel %vm1545, %v4428, %v4752
      %v5613 = vsel %vm1545, %v4429, %v4754
      %v5614 = vsel %vm1545, %v4430, %v4756
      %v5615 = vsel %vm1545, %v4431, %v4758
      %v5616 = vsel %vm1545, %v4432, %v4760
      %v5617 = vsel %vm1545, %v4433, %v4762
      %v5618 = vsel %vm1545, %v4434, %v4764
      %v5619 = vsel %vm1545, %v4435, %v4766
      %v5620 = vsel %vm1545, %v4436, %v4768
      %v5621 = vsel %vm1545, %v4437, %v4770
      %v5622 = vsel %vm1545, %v4438, %v4772
      %v5623 = vsel %vm1545, %v4439, %v4774
      %v5624 = vsel %vm1545, %v4440, %v4776
      %v5625 = vsel %vm1545, %v4441, %v4778
      %v5626 = vsel %vm1545, %v4442, %v4780
      %v5627 = vsel %vm1545, %v4443, %v4782
      %v5628 = vsel %vm1545, %v4444, %v4784
      %v5629 = vsel %vm1545, %v4445, %v4786
      %v5630 = vsel %vm1545, %v4446, %v4788
      %v5631 = vsel %vm1545, %v4447, %v4790
      %v5632 = vsel %vm1545, %v4448, %v4792
      %v5633 = vsel %vm1545, %v4449, %v4794
      %v5634 = vsel %vm1545, %v4450, %v4796
      %v5635 = vsel %vm1545, %v4451, %v4798
      %v5636 = vsel %vm1545, %v4452, %v4800
      %v5637 = vsel %vm1545, %v4453, %v4802
      %v5638 = vsel %vm1545, %v4454, %v4804
      %v5639 = vsel %vm1545, %v4455, %v4806
      %v5640 = vsel %vm1545, %v4456, %v4808
      %v5641 = vsel %vm1578, %v5609, %v4874
      %v5642 = vsel %vm1578, %v5610, %v4876
      %v5643 = vsel %vm1578, %v5611, %v4878
      %v5644 = vsel %vm1578, %v5612, %v4880
      %v5645 = vsel %vm1578, %v5613, %v4882
      %v5646 = vsel %vm1578, %v5614, %v4884
      %v5647 = vsel %vm1578, %v5615, %v4886
      %v5648 = vsel %vm1578, %v5616, %v4888
      %v5649 = vsel %vm1578, %v5617, %v4890
      %v5650 = vsel %vm1578, %v5618, %v4892
      %v5651 = vsel %vm1578, %v5619, %v4894
      %v5652 = vsel %vm1578, %v5620, %v4896
      %v5653 = vsel %vm1578, %v5621, %v4898
      %v5654 = vsel %vm1578, %v5622, %v4900
      %v5655 = vsel %vm1578, %v5623, %v4902
      %v5656 = vsel %vm1578, %v5624, %v4904
      %v5657 = vsel %vm1578, %v5625, %v4906
      %v5658 = vsel %vm1578, %v5626, %v4908
      %v5659 = vsel %vm1578, %v5627, %v4910
      %v5660 = vsel %vm1578, %v5628, %v4912
      %v5661 = vsel %vm1578, %v5629, %v4914
      %v5662 = vsel %vm1578, %v5630, %v4916
      %v5663 = vsel %vm1578, %v5631, %v4918
      %v5664 = vsel %vm1578, %v5632, %v4920
      %v5665 = vsel %vm1578, %v5633, %v4922
      %v5666 = vsel %vm1578, %v5634, %v4924
      %v5667 = vsel %vm1578, %v5635, %v4926
      %v5668 = vsel %vm1578, %v5636, %v4928
      %v5669 = vsel %vm1578, %v5637, %v4930
      %v5670 = vsel %vm1578, %v5638, %v4932
      %v5671 = vsel %vm1578, %v5639, %v4934
      %v5672 = vsel %vm1578, %v5640, %v4936
      %v5673 = vsel %vm1611, %v5641, %v5002
      %v5674 = vsel %vm1611, %v5642, %v5004
      %v5675 = vsel %vm1611, %v5643, %v5006
      %v5676 = vsel %vm1611, %v5644, %v5008
      %v5677 = vsel %vm1611, %v5645, %v5010
      %v5678 = vsel %vm1611, %v5646, %v5012
      %v5679 = vsel %vm1611, %v5647, %v5014
      %v5680 = vsel %vm1611, %v5648, %v5016
      %v5681 = vsel %vm1611, %v5649, %v5018
      %v5682 = vsel %vm1611, %v5650, %v5020
      %v5683 = vsel %vm1611, %v5651, %v5022
      %v5684 = vsel %vm1611, %v5652, %v5024
      %v5685 = vsel %vm1611, %v5653, %v5026
      %v5686 = vsel %vm1611, %v5654, %v5028
      %v5687 = vsel %vm1611, %v5655, %v5030
      %v5688 = vsel %vm1611, %v5656, %v5032
      %v5689 = vsel %vm1611, %v5657, %v5034
      %v5690 = vsel %vm1611, %v5658, %v5036
      %v5691 = vsel %vm1611, %v5659, %v5038
      %v5692 = vsel %vm1611, %v5660, %v5040
      %v5693 = vsel %vm1611, %v5661, %v5042
      %v5694 = vsel %vm1611, %v5662, %v5044
      %v5695 = vsel %vm1611, %v5663, %v5046
      %v5696 = vsel %vm1611, %v5664, %v5048
      %v5697 = vsel %vm1611, %v5665, %v5050
      %v5698 = vsel %vm1611, %v5666, %v5052
      %v5699 = vsel %vm1611, %v5667, %v5054
      %v5700 = vsel %vm1611, %v5668, %v5056
      %v5701 = vsel %vm1611, %v5669, %v5058
      %v5702 = vsel %vm1611, %v5670, %v5060
      %v5703 = vsel %vm1611, %v5671, %v5062
      %v5704 = vsel %vm1611, %v5672, %v5064
      %v5705 = vsel %vm1644, %v5673, %v5130
      %v5706 = vsel %vm1644, %v5674, %v5132
      %v5707 = vsel %vm1644, %v5675, %v5134
      %v5708 = vsel %vm1644, %v5676, %v5136
      %v5709 = vsel %vm1644, %v5677, %v5138
      %v5710 = vsel %vm1644, %v5678, %v5140
      %v5711 = vsel %vm1644, %v5679, %v5142
      %v5712 = vsel %vm1644, %v5680, %v5144
      %v5713 = vsel %vm1644, %v5681, %v5146
      %v5714 = vsel %vm1644, %v5682, %v5148
      %v5715 = vsel %vm1644, %v5683, %v5150
      %v5716 = vsel %vm1644, %v5684, %v5152
      %v5717 = vsel %vm1644, %v5685, %v5154
      %v5718 = vsel %vm1644, %v5686, %v5156
      %v5719 = vsel %vm1644, %v5687, %v5158
      %v5720 = vsel %vm1644, %v5688, %v5160
      %v5721 = vsel %vm1644, %v5689, %v5162
      %v5722 = vsel %vm1644, %v5690, %v5164
      %v5723 = vsel %vm1644, %v5691, %v5166
      %v5724 = vsel %vm1644, %v5692, %v5168
      %v5725 = vsel %vm1644, %v5693, %v5170
      %v5726 = vsel %vm1644, %v5694, %v5172
      %v5727 = vsel %vm1644, %v5695, %v5174
      %v5728 = vsel %vm1644, %v5696, %v5176
      %v5729 = vsel %vm1644, %v5697, %v5178
      %v5730 = vsel %vm1644, %v5698, %v5180
      %v5731 = vsel %vm1644, %v5699, %v5182
      %v5732 = vsel %vm1644, %v5700, %v5184
      %v5733 = vsel %vm1644, %v5701, %v5186
      %v5734 = vsel %vm1644, %v5702, %v5188
      %v5735 = vsel %vm1644, %v5703, %v5190
      %v5736 = vsel %vm1644, %v5704, %v5192
      %v5737 = vsel %vm1677, %v5705, %v5258
      %v5738 = vsel %vm1677, %v5706, %v5260
      %v5739 = vsel %vm1677, %v5707, %v5262
      %v5740 = vsel %vm1677, %v5708, %v5264
      %v5741 = vsel %vm1677, %v5709, %v5266
      %v5742 = vsel %vm1677, %v5710, %v5268
      %v5743 = vsel %vm1677, %v5711, %v5270
      %v5744 = vsel %vm1677, %v5712, %v5272
      %v5745 = vsel %vm1677, %v5713, %v5274
      %v5746 = vsel %vm1677, %v5714, %v5276
      %v5747 = vsel %vm1677, %v5715, %v5278
      %v5748 = vsel %vm1677, %v5716, %v5280
      %v5749 = vsel %vm1677, %v5717, %v5282
      %v5750 = vsel %vm1677, %v5718, %v5284
      %v5751 = vsel %vm1677, %v5719, %v5286
      %v5752 = vsel %vm1677, %v5720, %v5288
      %v5753 = vsel %vm1677, %v5721, %v5290
      %v5754 = vsel %vm1677, %v5722, %v5292
      %v5755 = vsel %vm1677, %v5723, %v5294
      %v5756 = vsel %vm1677, %v5724, %v5296
      %v5757 = vsel %vm1677, %v5725, %v5298
      %v5758 = vsel %vm1677, %v5726, %v5300
      %v5759 = vsel %vm1677, %v5727, %v5302
      %v5760 = vsel %vm1677, %v5728, %v5304
      %v5761 = vsel %vm1677, %v5729, %v5306
      %v5762 = vsel %vm1677, %v5730, %v5308
      %v5763 = vsel %vm1677, %v5731, %v5310
      %v5764 = vsel %vm1677, %v5732, %v5312
      %v5765 = vsel %vm1677, %v5733, %v5314
      %v5766 = vsel %vm1677, %v5734, %v5316
      %v5767 = vsel %vm1677, %v5735, %v5318
      %v5768 = vsel %vm1677, %v5736, %v5320
      %v5769 = vsel %vm1710, %v5737, %v5386
      %v5770 = vsel %vm1710, %v5738, %v5388
      %v5771 = vsel %vm1710, %v5739, %v5390
      %v5772 = vsel %vm1710, %v5740, %v5392
      %v5773 = vsel %vm1710, %v5741, %v5394
      %v5774 = vsel %vm1710, %v5742, %v5396
      %v5775 = vsel %vm1710, %v5743, %v5398
      %v5776 = vsel %vm1710, %v5744, %v5400
      %v5777 = vsel %vm1710, %v5745, %v5402
      %v5778 = vsel %vm1710, %v5746, %v5404
      %v5779 = vsel %vm1710, %v5747, %v5406
      %v5780 = vsel %vm1710, %v5748, %v5408
      %v5781 = vsel %vm1710, %v5749, %v5410
      %v5782 = vsel %vm1710, %v5750, %v5412
      %v5783 = vsel %vm1710, %v5751, %v5414
      %v5784 = vsel %vm1710, %v5752, %v5416
      %v5785 = vsel %vm1710, %v5753, %v5418
      %v5786 = vsel %vm1710, %v5754, %v5420
      %v5787 = vsel %vm1710, %v5755, %v5422
      %v5788 = vsel %vm1710, %v5756, %v5424
      %v5789 = vsel %vm1710, %v5757, %v5426
      %v5790 = vsel %vm1710, %v5758, %v5428
      %v5791 = vsel %vm1710, %v5759, %v5430
      %v5792 = vsel %vm1710, %v5760, %v5432
      %v5793 = vsel %vm1710, %v5761, %v5434
      %v5794 = vsel %vm1710, %v5762, %v5436
      %v5795 = vsel %vm1710, %v5763, %v5438
      %v5796 = vsel %vm1710, %v5764, %v5440
      %v5797 = vsel %vm1710, %v5765, %v5442
      %v5798 = vsel %vm1710, %v5766, %v5444
      %v5799 = vsel %vm1710, %v5767, %v5446
      %v5800 = vsel %vm1710, %v5768, %v5448
      %v5801 = vsel %vm1743, %v5769, %v5514
      %v5802 = vsel %vm1743, %v5770, %v5516
      %v5803 = vsel %vm1743, %v5771, %v5518
      %v5804 = vsel %vm1743, %v5772, %v5520
      %v5805 = vsel %vm1743, %v5773, %v5522
      %v5806 = vsel %vm1743, %v5774, %v5524
      %v5807 = vsel %vm1743, %v5775, %v5526
      %v5808 = vsel %vm1743, %v5776, %v5528
      %v5809 = vsel %vm1743, %v5777, %v5530
      %v5810 = vsel %vm1743, %v5778, %v5532
      %v5811 = vsel %vm1743, %v5779, %v5534
      %v5812 = vsel %vm1743, %v5780, %v5536
      %v5813 = vsel %vm1743, %v5781, %v5538
      %v5814 = vsel %vm1743, %v5782, %v5540
      %v5815 = vsel %vm1743, %v5783, %v5542
      %v5816 = vsel %vm1743, %v5784, %v5544
      %v5817 = vsel %vm1743, %v5785, %v5546
      %v5818 = vsel %vm1743, %v5786, %v5548
      %v5819 = vsel %vm1743, %v5787, %v5550
      %v5820 = vsel %vm1743, %v5788, %v5552
      %v5821 = vsel %vm1743, %v5789, %v5554
      %v5822 = vsel %vm1743, %v5790, %v5556
      %v5823 = vsel %vm1743, %v5791, %v5558
      %v5824 = vsel %vm1743, %v5792, %v5560
      %v5825 = vsel %vm1743, %v5793, %v5562
      %v5826 = vsel %vm1743, %v5794, %v5564
      %v5827 = vsel %vm1743, %v5795, %v5566
      %v5828 = vsel %vm1743, %v5796, %v5568
      %v5829 = vsel %vm1743, %v5797, %v5570
      %v5830 = vsel %vm1743, %v5798, %v5572
      %v5831 = vsel %vm1743, %v5799, %v5574
      %v5832 = vsel %vm1743, %v5800, %v5576
      %v5833 = vpack.c.bf16 %v5802, %v5801
      %v5834 = vpack.c.bf16 %v4682, %v4681
      %v5835 = vpack.c.bf16 %v5804, %v5803
      %v5836 = vpack.c.bf16 %v4684, %v4683
      %v5837 = vpack.c.bf16 %v5806, %v5805
      %v5838 = vpack.c.bf16 %v4686, %v4685
      %v5839 = vpack.c.bf16 %v5808, %v5807
      %v5840 = vpack.c.bf16 %v4688, %v4687
      %v5841 = vpack.c.bf16 %v5810, %v5809
      %v5842 = vpack.c.bf16 %v4690, %v4689
      %v5843 = vpack.c.bf16 %v5812, %v5811
      %v5844 = vpack.c.bf16 %v4692, %v4691
      %v5845 = vpack.c.bf16 %v5814, %v5813
      %v5846 = vpack.c.bf16 %v4694, %v4693
      %v5847 = vpack.c.bf16 %v5816, %v5815
      %v5848 = vpack.c.bf16 %v4696, %v4695
      %v5849 = vpack.c.bf16 %v5818, %v5817
      %v5850 = vpack.c.bf16 %v4698, %v4697
      %v5851 = vpack.c.bf16 %v5820, %v5819
      %v5852 = vpack.c.bf16 %v4700, %v4699
      %v5853 = vpack.c.bf16 %v5822, %v5821
      %v5854 = vpack.c.bf16 %v4702, %v4701
      %v5855 = vpack.c.bf16 %v5824, %v5823
      %v5856 = vpack.c.bf16 %v4704, %v4703
      %v5857 = vpack.c.bf16 %v5826, %v5825
      %v5858 = vpack.c.bf16 %v4706, %v4705
      %v5859 = vpack.c.bf16 %v5828, %v5827
      %v5860 = vpack.c.bf16 %v4708, %v4707
      %v5861 = vpack.c.bf16 %v5830, %v5829
      %v5862 = vpack.c.bf16 %v4710, %v4709
      %v5863 = vpack.c.bf16 %v5832, %v5831
      %v5864 = vpack.c.bf16 %v4712, %v4711
      %v5865 = vld [vmem:[%s5] sm:$0xf]
      %v5866 = vld [vmem:[%s5 + $0x4] sm:$0xf]
      %v5867 = vld [vmem:[%s5 + $0x8] sm:$0xf]
      %v5868 = vld [vmem:[%s5 + $0xc] sm:$0xf]
      %v5869 = vld [vmem:[%s5 + $0x10] sm:$0xf]
      %v5870 = vld [vmem:[%s5 + $0x14] sm:$0xf]
      %v5871 = vld [vmem:[%s5 + $0x18] sm:$0xf]
      %v5872 = vld [vmem:[%s5 + $0x1c] sm:$0xf]
      %v5873 = vld [vmem:[%s5 + $0x20] sm:$0xf]
      %v5874 = vld [vmem:[%s5 + $0x24] sm:$0xf]
      %v5875 = vld [vmem:[%s5 + $0x28] sm:$0xf]
      %v5876 = vld [vmem:[%s5 + $0x2c] sm:$0xf]
      %v5877 = vld [vmem:[%s5 + $0x30] sm:$0xf]
      %v5878 = vld [vmem:[%s5 + $0x34] sm:$0xf]
      %v5879 = vld [vmem:[%s5 + $0x38] sm:$0xf]
      %v5880 = vld [vmem:[%s5 + $0x3c] sm:$0xf]
      %v5881 = vld [vmem:[%s5 + $0x40] sm:$0xf]
      %v5882 = vld [vmem:[%s5 + $0x44] sm:$0xf]
      %v5883 = vld [vmem:[%s6] sm:$0x1]
      %v5885 = vlaneseq
      %v5886 = vshrl.u32 %v5885, 7
      %v5887 = vsub.s32 0, %v5886
      %v5888 = vrot.slane %v5883, %v5887
      %v5908 = vunpack.c.l.b16 %v5865
      %v5909 = vunpack.c.l.b16 %v5866
      %v5910 = vunpack.c.l.b16 %v5867
      %v5911 = vunpack.c.l.b16 %v5868
      %v5912 = vunpack.c.l.b16 %v5869
      %v5913 = vunpack.c.l.b16 %v5870
      %v5914 = vunpack.c.l.b16 %v5871
      %v5915 = vunpack.c.l.b16 %v5872
      %v5916 = vunpack.c.l.b16 %v5873
      %v5917 = vunpack.c.l.b16 %v5874
      %v5918 = vunpack.c.l.b16 %v5875
      %v5919 = vunpack.c.l.b16 %v5876
      %v5920 = vunpack.c.l.b16 %v5877
      %v5921 = vunpack.c.l.b16 %v5878
      %v5922 = vunpack.c.l.b16 %v5879
      %v5923 = vunpack.c.l.b16 %v5880
      %v5924 = vunpack.c.l.b16 %v5881
      %v5925 = vunpack.c.l.b16 %v5882
      %v5926 = vpack.c.b16 %v5909, %v5908
      %v5927 = vpack.c.b16 %v5911, %v5910
      %v5928 = vpack.c.b16 %v5913, %v5912
      %v5929 = vpack.c.b16 %v5915, %v5914
      %v5930 = vpack.c.b16 %v5917, %v5916
      %v5931 = vpack.c.b16 %v5919, %v5918
      %v5932 = vpack.c.b16 %v5921, %v5920
      %v5933 = vpack.c.b16 %v5923, %v5922
      %v5934 = vpack.c.b16 %v5925, %v5924
      %v5945 = vsel %vm1545, %v5834, 0
      %v5948 = vsel %vm1545, %v5836, 0
      %v5951 = vsel %vm1545, %v5838, 0
      %v5954 = vsel %vm1545, %v5840, 0
      %v5957 = vsel %vm1545, %v5842, 0
      %v5960 = vsel %vm1545, %v5844, 0
      %v5963 = vsel %vm1545, %v5846, 0
      %v5966 = vsel %vm1545, %v5848, 0
      %v5969 = vsel %vm1545, %v5850, 0
      %v5972 = vsel %vm1545, %v5852, 0
      %v5975 = vsel %vm1545, %v5854, 0
      %v5978 = vsel %vm1545, %v5856, 0
      %v5981 = vsel %vm1545, %v5858, 0
      %v5984 = vsel %vm1545, %v5860, 0
      %v5987 = vsel %vm1545, %v5862, 0
      %v5990 = vsel %vm1545, %v5864, 0
      %5992 = vmatprep.subr.bf16.mxu0 0
      %5993 = vmatpush1.bf16.msra.mxu0 %v5933
      %5994 = vmatprep.subr.bf16.mxu0 0
      %5995 = vmatpush1.bf16.msra.mxu0 %v5932
      %5996 = vmatprep.subr.bf16.mxu0 0
      %5997 = vmatpush1.bf16.msra.mxu0 %v5931
      %5998 = vmatprep.subr.bf16.mxu0 0
      %5999 = vmatpush1.bf16.msra.mxu0 %v5930
      %6000 = vmatprep.subr.bf16.mxu0 0
      %6001 = vmatpush1.bf16.msra.mxu0 %v5929
      %6002 = vmatprep.subr.bf16.mxu0 0
      %6003 = vmatpush1.bf16.msra.mxu0 %v5928
      %6004 = vmatprep.subr.bf16.mxu0 0
      %6005 = vmatpush1.bf16.msra.mxu0 %v5927
      %6006 = vmatprep.subr.bf16.mxu0 0
      %6007 = vmatpush1.bf16.msra.mxu0 %v5926
      %6008 = vmatprep.subr.bf16.mxu0 0
      %6009 = vmatpush2.bf16.msra.mxu0 0
      %6010 = vmatprep.subr.bf16.mxu0 0
      %6011 = vmatpush2.bf16.msra.mxu0 0
      %6012 = vmatprep.subr.bf16.mxu0 0
      %6013 = vmatpush2.bf16.msra.mxu0 0
      %6014 = vmatprep.subr.bf16.mxu0 0
      %6015 = vmatpush2.bf16.msra.mxu0 0
      %6016 = vmatprep.subr.bf16.mxu0 0
      %6017 = vmatpush2.bf16.msra.mxu0 0
      %6018 = vmatprep.subr.bf16.mxu0 0
      %6019 = vmatpush2.bf16.msra.mxu0 0
      %6020 = vmatprep.subr.bf16.mxu0 0
      %6021 = vmatpush2.bf16.msra.mxu0 0
      %6022 = vmatprep.subr.bf16.mxu0 0
      %6023 = vmatpush2.bf16.msra.mxu0 %v5934
      %6024 = vmatprep.mubr.bf16.mxu0 %v5945
      %6025 = vmatmul.mubr.bf16.gmra.mxu0 %v5833
      %v6026 = vpop.f32.mrf.mxu0
      %v6027 = vadd.f32 %v5888, %v6026
      %v6028 = vpop.f32.mrf.mxu0
      %v6029 = vpop.f32.mrf.mxu0
      %v6030 = vadd.f32 %v5888, %v6029
      %v6031 = vpop.f32.mrf.mxu0
      %6032 = vmatprep.mubr.bf16.mxu0 %v5948
      %6033 = vmatmul.mubr.bf16.gmra.mxu0 %v5835
      %v6034 = vpop.f32.mrf.mxu0
      %v6035 = vadd.f32 %v5888, %v6034
      %v6036 = vpop.f32.mrf.mxu0
      %v6037 = vpop.f32.mrf.mxu0
      %v6038 = vadd.f32 %v5888, %v6037
      %v6039 = vpop.f32.mrf.mxu0
      %6040 = vmatprep.mubr.bf16.mxu0 %v5951
      %6041 = vmatmul.mubr.bf16.gmra.mxu0 %v5837
      %v6042 = vpop.f32.mrf.mxu0
      %v6043 = vadd.f32 %v5888, %v6042
      %v6044 = vpop.f32.mrf.mxu0
      %v6045 = vpop.f32.mrf.mxu0
      %v6046 = vadd.f32 %v5888, %v6045
      %v6047 = vpop.f32.mrf.mxu0
      %6048 = vmatprep.mubr.bf16.mxu0 %v5954
      %6049 = vmatmul.mubr.bf16.gmra.mxu0 %v5839
      %v6050 = vpop.f32.mrf.mxu0
      %v6051 = vadd.f32 %v5888, %v6050
      %v6052 = vpop.f32.mrf.mxu0
      %v6053 = vpop.f32.mrf.mxu0
      %v6054 = vadd.f32 %v5888, %v6053
      %v6055 = vpop.f32.mrf.mxu0
      %6056 = vmatprep.mubr.bf16.mxu0 %v5957
      %6057 = vmatmul.mubr.bf16.gmra.mxu0 %v5841
      %v6058 = vpop.f32.mrf.mxu0
      %v6059 = vadd.f32 %v5888, %v6058
      %v6060 = vpop.f32.mrf.mxu0
      %v6061 = vpop.f32.mrf.mxu0
      %v6062 = vadd.f32 %v5888, %v6061
      %v6063 = vpop.f32.mrf.mxu0
      %6064 = vmatprep.mubr.bf16.mxu0 %v5960
      %6065 = vmatmul.mubr.bf16.gmra.mxu0 %v5843
      %v6066 = vpop.f32.mrf.mxu0
      %v6067 = vadd.f32 %v5888, %v6066
      %v6068 = vpop.f32.mrf.mxu0
      %v6069 = vpop.f32.mrf.mxu0
      %v6070 = vadd.f32 %v5888, %v6069
      %v6071 = vpop.f32.mrf.mxu0
      %6072 = vmatprep.mubr.bf16.mxu0 %v5963
      %6073 = vmatmul.mubr.bf16.gmra.mxu0 %v5845
      %v6074 = vpop.f32.mrf.mxu0
      %v6075 = vadd.f32 %v5888, %v6074
      %v6076 = vpop.f32.mrf.mxu0
      %v6077 = vpop.f32.mrf.mxu0
      %v6078 = vadd.f32 %v5888, %v6077
      %v6079 = vpop.f32.mrf.mxu0
      %6080 = vmatprep.mubr.bf16.mxu0 %v5966
      %6081 = vmatmul.mubr.bf16.gmra.mxu0 %v5847
      %v6082 = vpop.f32.mrf.mxu0
      %v6083 = vadd.f32 %v5888, %v6082
      %v6084 = vpop.f32.mrf.mxu0
      %v6085 = vpop.f32.mrf.mxu0
      %v6086 = vadd.f32 %v5888, %v6085
      %v6087 = vpop.f32.mrf.mxu0
      %6088 = vmatprep.mubr.bf16.mxu0 %v5969
      %6089 = vmatmul.mubr.bf16.gmra.mxu0 %v5849
      %v6090 = vpop.f32.mrf.mxu0
      %v6091 = vadd.f32 %v5888, %v6090
      %v6092 = vpop.f32.mrf.mxu0
      %v6093 = vpop.f32.mrf.mxu0
      %v6094 = vadd.f32 %v5888, %v6093
      %v6095 = vpop.f32.mrf.mxu0
      %6096 = vmatprep.mubr.bf16.mxu0 %v5972
      %6097 = vmatmul.mubr.bf16.gmra.mxu0 %v5851
      %v6098 = vpop.f32.mrf.mxu0
      %v6099 = vadd.f32 %v5888, %v6098
      %v6100 = vpop.f32.mrf.mxu0
      %v6101 = vpop.f32.mrf.mxu0
      %v6102 = vadd.f32 %v5888, %v6101
      %v6103 = vpop.f32.mrf.mxu0
      %6104 = vmatprep.mubr.bf16.mxu0 %v5975
      %6105 = vmatmul.mubr.bf16.gmra.mxu0 %v5853
      %v6106 = vpop.f32.mrf.mxu0
      %v6107 = vadd.f32 %v5888, %v6106
      %v6108 = vpop.f32.mrf.mxu0
      %v6109 = vpop.f32.mrf.mxu0
      %v6110 = vadd.f32 %v5888, %v6109
      %v6111 = vpop.f32.mrf.mxu0
      %6112 = vmatprep.mubr.bf16.mxu0 %v5978
      %6113 = vmatmul.mubr.bf16.gmra.mxu0 %v5855
      %v6114 = vpop.f32.mrf.mxu0
      %v6115 = vadd.f32 %v5888, %v6114
      %v6116 = vpop.f32.mrf.mxu0
      %v6117 = vpop.f32.mrf.mxu0
      %v6118 = vadd.f32 %v5888, %v6117
      %v6119 = vpop.f32.mrf.mxu0
      %6120 = vmatprep.mubr.bf16.mxu0 %v5981
      %6121 = vmatmul.mubr.bf16.gmra.mxu0 %v5857
      %v6122 = vpop.f32.mrf.mxu0
      %v6123 = vadd.f32 %v5888, %v6122
      %v6124 = vpop.f32.mrf.mxu0
      %v6125 = vpop.f32.mrf.mxu0
      %v6126 = vadd.f32 %v5888, %v6125
      %v6127 = vpop.f32.mrf.mxu0
      %6128 = vmatprep.mubr.bf16.mxu0 %v5984
      %6129 = vmatmul.mubr.bf16.gmra.mxu0 %v5859
      %v6130 = vpop.f32.mrf.mxu0
      %v6131 = vadd.f32 %v5888, %v6130
      %v6132 = vpop.f32.mrf.mxu0
      %v6133 = vpop.f32.mrf.mxu0
      %v6134 = vadd.f32 %v5888, %v6133
      %v6135 = vpop.f32.mrf.mxu0
      %6136 = vmatprep.mubr.bf16.mxu0 %v5987
      %6137 = vmatmul.mubr.bf16.gmra.mxu0 %v5861
      %v6138 = vpop.f32.mrf.mxu0
      %v6139 = vadd.f32 %v5888, %v6138
      %v6140 = vpop.f32.mrf.mxu0
      %v6141 = vpop.f32.mrf.mxu0
      %v6142 = vadd.f32 %v5888, %v6141
      %v6143 = vpop.f32.mrf.mxu0
      %6144 = vmatprep.mubr.bf16.mxu0 %v5990
      %6145 = vmatmul.mubr.bf16.gmra.mxu0 %v5863
      %v6146 = vpop.f32.mrf.mxu0
      %v6147 = vadd.f32 %v5888, %v6146
      %v6148 = vpop.f32.mrf.mxu0
      %v6149 = vpop.f32.mrf.mxu0
      %v6150 = vadd.f32 %v5888, %v6149
      %v6151 = vpop.f32.mrf.mxu0
      %6152 = vdwg.mxu0
      %v6153 = vxor.u32 %v6027, 2147483648
      %v6154 = vxor.u32 %v6030, 2147483648
      %v6155 = vxor.u32 %v6035, 2147483648
      %v6156 = vxor.u32 %v6038, 2147483648
      %v6157 = vxor.u32 %v6043, 2147483648
      %v6158 = vxor.u32 %v6046, 2147483648
      %v6159 = vxor.u32 %v6051, 2147483648
      %v6160 = vxor.u32 %v6054, 2147483648
      %v6161 = vxor.u32 %v6059, 2147483648
      %v6162 = vxor.u32 %v6062, 2147483648
      %v6163 = vxor.u32 %v6067, 2147483648
      %v6164 = vxor.u32 %v6070, 2147483648
      %v6165 = vxor.u32 %v6075, 2147483648
      %v6166 = vxor.u32 %v6078, 2147483648
      %v6167 = vxor.u32 %v6083, 2147483648
      %v6168 = vxor.u32 %v6086, 2147483648
      %v6169 = vxor.u32 %v6091, 2147483648
      %v6170 = vxor.u32 %v6094, 2147483648
      %v6171 = vxor.u32 %v6099, 2147483648
      %v6172 = vxor.u32 %v6102, 2147483648
      %v6173 = vxor.u32 %v6107, 2147483648
      %v6174 = vxor.u32 %v6110, 2147483648
      %v6175 = vxor.u32 %v6115, 2147483648
      %v6176 = vxor.u32 %v6118, 2147483648
      %v6177 = vxor.u32 %v6123, 2147483648
      %v6178 = vxor.u32 %v6126, 2147483648
      %v6179 = vxor.u32 %v6131, 2147483648
      %v6180 = vxor.u32 %v6134, 2147483648
      %v6181 = vxor.u32 %v6139, 2147483648
      %v6182 = vxor.u32 %v6142, 2147483648
      %v6183 = vxor.u32 %v6147, 2147483648
      %v6184 = vxor.u32 %v6150, 2147483648
      %v6185 = vmul.f32 %v6153, 1.442695
      %v6186 = vpow.pop %v6185
      %v6187 = vmul.f32 %v6154, 1.442695
      %v6188 = vpow.pop %v6187
      %v6189 = vmul.f32 %v6155, 1.442695
      %v6190 = vpow.pop %v6189
      %v6191 = vmul.f32 %v6156, 1.442695
      %v6192 = vpow.pop %v6191
      %v6193 = vmul.f32 %v6157, 1.442695
      %v6194 = vpow.pop %v6193
      %v6195 = vmul.f32 %v6158, 1.442695
      %v6196 = vpow.pop %v6195
      %v6197 = vmul.f32 %v6159, 1.442695
      %v6198 = vpow.pop %v6197
      %v6199 = vmul.f32 %v6160, 1.442695
      %v6200 = vpow.pop %v6199
      %v6201 = vmul.f32 %v6161, 1.442695
      %v6202 = vpow.pop %v6201
      %v6203 = vmul.f32 %v6162, 1.442695
      %v6204 = vpow.pop %v6203
      %v6205 = vmul.f32 %v6163, 1.442695
      %v6206 = vpow.pop %v6205
      %v6207 = vmul.f32 %v6164, 1.442695
      %v6208 = vpow.pop %v6207
      %v6209 = vmul.f32 %v6165, 1.442695
      %v6210 = vpow.pop %v6209
      %v6211 = vmul.f32 %v6166, 1.442695
      %v6212 = vpow.pop %v6211
      %v6213 = vmul.f32 %v6167, 1.442695
      %v6214 = vpow.pop %v6213
      %v6215 = vmul.f32 %v6168, 1.442695
      %v6216 = vpow.pop %v6215
      %v6217 = vmul.f32 %v6169, 1.442695
      %v6218 = vpow.pop %v6217
      %v6219 = vmul.f32 %v6170, 1.442695
      %v6220 = vpow.pop %v6219
      %v6221 = vmul.f32 %v6171, 1.442695
      %v6222 = vpow.pop %v6221
      %v6223 = vmul.f32 %v6172, 1.442695
      %v6224 = vpow.pop %v6223
      %v6225 = vmul.f32 %v6173, 1.442695
      %v6226 = vpow.pop %v6225
      %v6227 = vmul.f32 %v6174, 1.442695
      %v6228 = vpow.pop %v6227
      %v6229 = vmul.f32 %v6175, 1.442695
      %v6230 = vpow.pop %v6229
      %v6231 = vmul.f32 %v6176, 1.442695
      %v6232 = vpow.pop %v6231
      %v6233 = vmul.f32 %v6177, 1.442695
      %v6234 = vpow.pop %v6233
      %v6235 = vmul.f32 %v6178, 1.442695
      %v6236 = vpow.pop %v6235
      %v6237 = vmul.f32 %v6179, 1.442695
      %v6238 = vpow.pop %v6237
      %v6239 = vmul.f32 %v6180, 1.442695
      %v6240 = vpow.pop %v6239
      %v6241 = vmul.f32 %v6181, 1.442695
      %v6242 = vpow.pop %v6241
      %v6243 = vmul.f32 %v6182, 1.442695
      %v6244 = vpow.pop %v6243
      %v6245 = vmul.f32 %v6183, 1.442695
      %v6246 = vpow.pop %v6245
      %v6247 = vmul.f32 %v6184, 1.442695
      %v6248 = vpow.pop %v6247
      %v6249 = vadd.f32 %v6186, 1.0
      %v6250 = vadd.f32 %v6188, 1.0
      %v6251 = vadd.f32 %v6190, 1.0
      %v6252 = vadd.f32 %v6192, 1.0
      %v6253 = vadd.f32 %v6194, 1.0
      %v6254 = vadd.f32 %v6196, 1.0
      %v6255 = vadd.f32 %v6198, 1.0
      %v6256 = vadd.f32 %v6200, 1.0
      %v6257 = vadd.f32 %v6202, 1.0
      %v6258 = vadd.f32 %v6204, 1.0
      %v6259 = vadd.f32 %v6206, 1.0
      %v6260 = vadd.f32 %v6208, 1.0
      %v6261 = vadd.f32 %v6210, 1.0
      %v6262 = vadd.f32 %v6212, 1.0
      %v6263 = vadd.f32 %v6214, 1.0
      %v6264 = vadd.f32 %v6216, 1.0
      %v6265 = vadd.f32 %v6218, 1.0
      %v6266 = vadd.f32 %v6220, 1.0
      %v6267 = vadd.f32 %v6222, 1.0
      %v6268 = vadd.f32 %v6224, 1.0
      %v6269 = vadd.f32 %v6226, 1.0
      %v6270 = vadd.f32 %v6228, 1.0
      %v6271 = vadd.f32 %v6230, 1.0
      %v6272 = vadd.f32 %v6232, 1.0
      %v6273 = vadd.f32 %v6234, 1.0
      %v6274 = vadd.f32 %v6236, 1.0
      %v6275 = vadd.f32 %v6238, 1.0
      %v6276 = vadd.f32 %v6240, 1.0
      %v6277 = vadd.f32 %v6242, 1.0
      %v6278 = vadd.f32 %v6244, 1.0
      %v6279 = vadd.f32 %v6246, 1.0
      %v6280 = vadd.f32 %v6248, 1.0
      %v6281 = vrcp.pop %v6249
      %v6282 = vmul.f32 1.0, %v6281
      %v6283 = vrcp.pop %v6250
      %v6284 = vmul.f32 1.0, %v6283
      %v6285 = vrcp.pop %v6251
      %v6286 = vmul.f32 1.0, %v6285
      %v6287 = vrcp.pop %v6252
      %v6288 = vmul.f32 1.0, %v6287
      %v6289 = vrcp.pop %v6253
      %v6290 = vmul.f32 1.0, %v6289
      %v6291 = vrcp.pop %v6254
      %v6292 = vmul.f32 1.0, %v6291
      %v6293 = vrcp.pop %v6255
      %v6294 = vmul.f32 1.0, %v6293
      %v6295 = vrcp.pop %v6256
      %v6296 = vmul.f32 1.0, %v6295
      %v6297 = vrcp.pop %v6257
      %v6298 = vmul.f32 1.0, %v6297
      %v6299 = vrcp.pop %v6258
      %v6300 = vmul.f32 1.0, %v6299
      %v6301 = vrcp.pop %v6259
      %v6302 = vmul.f32 1.0, %v6301
      %v6303 = vrcp.pop %v6260
      %v6304 = vmul.f32 1.0, %v6303
      %v6305 = vrcp.pop %v6261
      %v6306 = vmul.f32 1.0, %v6305
      %v6307 = vrcp.pop %v6262
      %v6308 = vmul.f32 1.0, %v6307
      %v6309 = vrcp.pop %v6263
      %v6310 = vmul.f32 1.0, %v6309
      %v6311 = vrcp.pop %v6264
      %v6312 = vmul.f32 1.0, %v6311
      %v6313 = vrcp.pop %v6265
      %v6314 = vmul.f32 1.0, %v6313
      %v6315 = vrcp.pop %v6266
      %v6316 = vmul.f32 1.0, %v6315
      %v6317 = vrcp.pop %v6267
      %v6318 = vmul.f32 1.0, %v6317
      %v6319 = vrcp.pop %v6268
      %v6320 = vmul.f32 1.0, %v6319
      %v6321 = vrcp.pop %v6269
      %v6322 = vmul.f32 1.0, %v6321
      %v6323 = vrcp.pop %v6270
      %v6324 = vmul.f32 1.0, %v6323
      %v6325 = vrcp.pop %v6271
      %v6326 = vmul.f32 1.0, %v6325
      %v6327 = vrcp.pop %v6272
      %v6328 = vmul.f32 1.0, %v6327
      %v6329 = vrcp.pop %v6273
      %v6330 = vmul.f32 1.0, %v6329
      %v6331 = vrcp.pop %v6274
      %v6332 = vmul.f32 1.0, %v6331
      %v6333 = vrcp.pop %v6275
      %v6334 = vmul.f32 1.0, %v6333
      %v6335 = vrcp.pop %v6276
      %v6336 = vmul.f32 1.0, %v6335
      %v6337 = vrcp.pop %v6277
      %v6338 = vmul.f32 1.0, %v6337
      %v6339 = vrcp.pop %v6278
      %v6340 = vmul.f32 1.0, %v6339
      %v6341 = vrcp.pop %v6279
      %v6342 = vmul.f32 1.0, %v6341
      %v6343 = vrcp.pop %v6280
      %v6344 = vmul.f32 1.0, %v6343
      %v6345 = vsub.f32 %v6282, 0.5
      %v6346 = vsub.f32 %v6284, 0.5
      %v6347 = vsub.f32 %v6286, 0.5
      %v6348 = vsub.f32 %v6288, 0.5
      %v6349 = vsub.f32 %v6290, 0.5
      %v6350 = vsub.f32 %v6292, 0.5
      %v6351 = vsub.f32 %v6294, 0.5
      %v6352 = vsub.f32 %v6296, 0.5
      %v6353 = vsub.f32 %v6298, 0.5
      %v6354 = vsub.f32 %v6300, 0.5
      %v6355 = vsub.f32 %v6302, 0.5
      %v6356 = vsub.f32 %v6304, 0.5
      %v6357 = vsub.f32 %v6306, 0.5
      %v6358 = vsub.f32 %v6308, 0.5
      %v6359 = vsub.f32 %v6310, 0.5
      %v6360 = vsub.f32 %v6312, 0.5
      %v6361 = vsub.f32 %v6314, 0.5
      %v6362 = vsub.f32 %v6316, 0.5
      %v6363 = vsub.f32 %v6318, 0.5
      %v6364 = vsub.f32 %v6320, 0.5
      %v6365 = vsub.f32 %v6322, 0.5
      %v6366 = vsub.f32 %v6324, 0.5
      %v6367 = vsub.f32 %v6326, 0.5
      %v6368 = vsub.f32 %v6328, 0.5
      %v6369 = vsub.f32 %v6330, 0.5
      %v6370 = vsub.f32 %v6332, 0.5
      %v6371 = vsub.f32 %v6334, 0.5
      %v6372 = vsub.f32 %v6336, 0.5
      %v6373 = vsub.f32 %v6338, 0.5
      %v6374 = vsub.f32 %v6340, 0.5
      %v6375 = vsub.f32 %v6342, 0.5
      %v6376 = vsub.f32 %v6344, 0.5
      %6377 = vst.msk [vmem:[%s357] sm:$0xff] %vm1545, %v6345
      %6378 = vst.msk [vmem:[%s357 + $0x8] sm:$0xff] %vm1545, %v6346
      %6379 = vst.msk [vmem:[%s357 + $0x10] sm:$0xff] %vm1545, %v6347
      %6380 = vst.msk [vmem:[%s357 + $0x18] sm:$0xff] %vm1545, %v6348
      %6381 = vst.msk [vmem:[%s357 + $0x20] sm:$0xff] %vm1545, %v6349
      %6382 = vst.msk [vmem:[%s357 + $0x28] sm:$0xff] %vm1545, %v6350
      %6383 = vst.msk [vmem:[%s357 + $0x30] sm:$0xff] %vm1545, %v6351
      %6384 = vst.msk [vmem:[%s357 + $0x38] sm:$0xff] %vm1545, %v6352
      %6385 = vst.msk [vmem:[%s357 + $0x40] sm:$0xff] %vm1545, %v6353
      %6386 = vst.msk [vmem:[%s357 + $0x48] sm:$0xff] %vm1545, %v6354
      %6387 = vst.msk [vmem:[%s357 + $0x50] sm:$0xff] %vm1545, %v6355
      %6388 = vst.msk [vmem:[%s357 + $0x58] sm:$0xff] %vm1545, %v6356
      %6389 = vst.msk [vmem:[%s357 + $0x60] sm:$0xff] %vm1545, %v6357
      %6390 = vst.msk [vmem:[%s357 + $0x68] sm:$0xff] %vm1545, %v6358
      %6391 = vst.msk [vmem:[%s357 + $0x70] sm:$0xff] %vm1545, %v6359
      %6392 = vst.msk [vmem:[%s357 + $0x78] sm:$0xff] %vm1545, %v6360
      %6393 = vst.msk [vmem:[%s357 + $0x80] sm:$0xff] %vm1545, %v6361
      %6394 = vst.msk [vmem:[%s357 + $0x88] sm:$0xff] %vm1545, %v6362
      %6395 = vst.msk [vmem:[%s357 + $0x90] sm:$0xff] %vm1545, %v6363
      %6396 = vst.msk [vmem:[%s357 + $0x98] sm:$0xff] %vm1545, %v6364
      %6397 = vst.msk [vmem:[%s357 + $0xa0] sm:$0xff] %vm1545, %v6365
      %6398 = vst.msk [vmem:[%s357 + $0xa8] sm:$0xff] %vm1545, %v6366
      %6399 = vst.msk [vmem:[%s357 + $0xb0] sm:$0xff] %vm1545, %v6367
      %6400 = vst.msk [vmem:[%s357 + $0xb8] sm:$0xff] %vm1545, %v6368
      %6401 = vst.msk [vmem:[%s357 + $0xc0] sm:$0xff] %vm1545, %v6369
      %6402 = vst.msk [vmem:[%s357 + $0xc8] sm:$0xff] %vm1545, %v6370
      %6403 = vst.msk [vmem:[%s357 + $0xd0] sm:$0xff] %vm1545, %v6371
      %6404 = vst.msk [vmem:[%s357 + $0xd8] sm:$0xff] %vm1545, %v6372
      %6405 = vst.msk [vmem:[%s357 + $0xe0] sm:$0xff] %vm1545, %v6373
      %6406 = vst.msk [vmem:[%s357 + $0xe8] sm:$0xff] %vm1545, %v6374
      %6407 = vst.msk [vmem:[%s357 + $0xf0] sm:$0xff] %vm1545, %v6375
      %6408 = vst.msk [vmem:[%s357 + $0xf8] sm:$0xff] %vm1545, %v6376
      %v6409 = vld [vmem:[%s455 + $0x1] sm:$0xff]
      %v6410 = vld [vmem:[%s455 + $0x9] sm:$0xff]
      %v6411 = vld [vmem:[%s455 + $0x19] sm:$0xff]
      %v6412 = vld [vmem:[%s455 + $0x21] sm:$0xff]
      %v6413 = vld [vmem:[%s455 + $0x31] sm:$0xff]
      %v6414 = vld [vmem:[%s455 + $0x39] sm:$0xff]
      %v6415 = vld [vmem:[%s455 + $0x49] sm:$0xff]
      %v6416 = vld [vmem:[%s455 + $0x51] sm:$0xff]
      %v6417 = vld [vmem:[%s455 + $0x61] sm:$0xff]
      %v6418 = vld [vmem:[%s455 + $0x69] sm:$0xff]
      %v6419 = vld [vmem:[%s455 + $0x79] sm:$0xff]
      %v6420 = vld [vmem:[%s455 + $0x81] sm:$0xff]
      %v6421 = vld [vmem:[%s455 + $0x91] sm:$0xff]
      %v6422 = vld [vmem:[%s455 + $0x99] sm:$0xff]
      %v6423 = vld [vmem:[%s455 + $0xa9] sm:$0xff]
      %v6424 = vld [vmem:[%s455 + $0xb1] sm:$0xff]
      %v6425 = vld [vmem:[%s455 + $0xc1] sm:$0xff]
      %v6426 = vld [vmem:[%s455 + $0xc9] sm:$0xff]
      %v6427 = vld [vmem:[%s455 + $0xd9] sm:$0xff]
      %v6428 = vld [vmem:[%s455 + $0xe1] sm:$0xff]
      %v6429 = vld [vmem:[%s455 + $0xf1] sm:$0xff]
      %v6430 = vld [vmem:[%s455 + $0xf9] sm:$0xff]
      %v6431 = vld [vmem:[%s455 + $0x109] sm:$0xff]
      %v6432 = vld [vmem:[%s455 + $0x111] sm:$0xff]
      %v6433 = vld [vmem:[%s455 + $0x121] sm:$0xff]
      %v6434 = vld [vmem:[%s455 + $0x129] sm:$0xff]
      %v6435 = vld [vmem:[%s455 + $0x139] sm:$0xff]
      %v6436 = vld [vmem:[%s455 + $0x141] sm:$0xff]
      %v6437 = vld [vmem:[%s455 + $0x151] sm:$0xff]
      %v6438 = vld [vmem:[%s455 + $0x159] sm:$0xff]
      %v6439 = vld [vmem:[%s455 + $0x169] sm:$0xff]
      %v6440 = vld [vmem:[%s455 + $0x171] sm:$0xff]
      %v6441 = vadd.f32 %v6027, %v6409
      %v6442 = vadd.f32 %v6030, %v6410
      %v6443 = vadd.f32 %v6035, %v6411
      %v6444 = vadd.f32 %v6038, %v6412
      %v6445 = vadd.f32 %v6043, %v6413
      %v6446 = vadd.f32 %v6046, %v6414
      %v6447 = vadd.f32 %v6051, %v6415
      %v6448 = vadd.f32 %v6054, %v6416
      %v6449 = vadd.f32 %v6059, %v6417
      %v6450 = vadd.f32 %v6062, %v6418
      %v6451 = vadd.f32 %v6067, %v6419
      %v6452 = vadd.f32 %v6070, %v6420
      %v6453 = vadd.f32 %v6075, %v6421
      %v6454 = vadd.f32 %v6078, %v6422
      %v6455 = vadd.f32 %v6083, %v6423
      %v6456 = vadd.f32 %v6086, %v6424
      %v6457 = vadd.f32 %v6091, %v6425
      %v6458 = vadd.f32 %v6094, %v6426
      %v6459 = vadd.f32 %v6099, %v6427
      %v6460 = vadd.f32 %v6102, %v6428
      %v6461 = vadd.f32 %v6107, %v6429
      %v6462 = vadd.f32 %v6110, %v6430
      %v6463 = vadd.f32 %v6115, %v6431
      %v6464 = vadd.f32 %v6118, %v6432
      %v6465 = vadd.f32 %v6123, %v6433
      %v6466 = vadd.f32 %v6126, %v6434
      %v6467 = vadd.f32 %v6131, %v6435
      %v6468 = vadd.f32 %v6134, %v6436
      %v6469 = vadd.f32 %v6139, %v6437
      %v6470 = vadd.f32 %v6142, %v6438
      %v6471 = vadd.f32 %v6147, %v6439
      %v6472 = vadd.f32 %v6150, %v6440
      %v6473 = vmul.f32 %v6441, %v6345
      %v6474 = vmul.f32 %v6442, %v6346
      %v6475 = vmul.f32 %v6443, %v6347
      %v6476 = vmul.f32 %v6444, %v6348
      %v6477 = vmul.f32 %v6445, %v6349
      %v6478 = vmul.f32 %v6446, %v6350
      %v6479 = vmul.f32 %v6447, %v6351
      %v6480 = vmul.f32 %v6448, %v6352
      %v6481 = vmul.f32 %v6449, %v6353
      %v6482 = vmul.f32 %v6450, %v6354
      %v6483 = vmul.f32 %v6451, %v6355
      %v6484 = vmul.f32 %v6452, %v6356
      %v6485 = vmul.f32 %v6453, %v6357
      %v6486 = vmul.f32 %v6454, %v6358
      %v6487 = vmul.f32 %v6455, %v6359
      %v6488 = vmul.f32 %v6456, %v6360
      %v6489 = vmul.f32 %v6457, %v6361
      %v6490 = vmul.f32 %v6458, %v6362
      %v6491 = vmul.f32 %v6459, %v6363
      %v6492 = vmul.f32 %v6460, %v6364
      %v6493 = vmul.f32 %v6461, %v6365
      %v6494 = vmul.f32 %v6462, %v6366
      %v6495 = vmul.f32 %v6463, %v6367
      %v6496 = vmul.f32 %v6464, %v6368
      %v6497 = vmul.f32 %v6465, %v6369
      %v6498 = vmul.f32 %v6466, %v6370
      %v6499 = vmul.f32 %v6467, %v6371
      %v6500 = vmul.f32 %v6468, %v6372
      %v6501 = vmul.f32 %v6469, %v6373
      %v6502 = vmul.f32 %v6470, %v6374
      %v6503 = vmul.f32 %v6471, %v6375
      %v6504 = vmul.f32 %v6472, %v6376
      %6505 = vst.msk [vmem:[%s347] sm:$0xff] %vm1545, %v6473
      %6506 = vst.msk [vmem:[%s347 + $0x8] sm:$0xff] %vm1545, %v6474
      %6507 = vst.msk [vmem:[%s347 + $0x10] sm:$0xff] %vm1545, %v6475
      %6508 = vst.msk [vmem:[%s347 + $0x18] sm:$0xff] %vm1545, %v6476
      %6509 = vst.msk [vmem:[%s347 + $0x20] sm:$0xff] %vm1545, %v6477
      %6510 = vst.msk [vmem:[%s347 + $0x28] sm:$0xff] %vm1545, %v6478
      %6511 = vst.msk [vmem:[%s347 + $0x30] sm:$0xff] %vm1545, %v6479
      %6512 = vst.msk [vmem:[%s347 + $0x38] sm:$0xff] %vm1545, %v6480
      %6513 = vst.msk [vmem:[%s347 + $0x40] sm:$0xff] %vm1545, %v6481
      %6514 = vst.msk [vmem:[%s347 + $0x48] sm:$0xff] %vm1545, %v6482
      %6515 = vst.msk [vmem:[%s347 + $0x50] sm:$0xff] %vm1545, %v6483
      %6516 = vst.msk [vmem:[%s347 + $0x58] sm:$0xff] %vm1545, %v6484
      %6517 = vst.msk [vmem:[%s347 + $0x60] sm:$0xff] %vm1545, %v6485
      %6518 = vst.msk [vmem:[%s347 + $0x68] sm:$0xff] %vm1545, %v6486
      %6519 = vst.msk [vmem:[%s347 + $0x70] sm:$0xff] %vm1545, %v6487
      %6520 = vst.msk [vmem:[%s347 + $0x78] sm:$0xff] %vm1545, %v6488
      %6521 = vst.msk [vmem:[%s347 + $0x80] sm:$0xff] %vm1545, %v6489
      %6522 = vst.msk [vmem:[%s347 + $0x88] sm:$0xff] %vm1545, %v6490
      %6523 = vst.msk [vmem:[%s347 + $0x90] sm:$0xff] %vm1545, %v6491
      %6524 = vst.msk [vmem:[%s347 + $0x98] sm:$0xff] %vm1545, %v6492
      %6525 = vst.msk [vmem:[%s347 + $0xa0] sm:$0xff] %vm1545, %v6493
      %6526 = vst.msk [vmem:[%s347 + $0xa8] sm:$0xff] %vm1545, %v6494
      %6527 = vst.msk [vmem:[%s347 + $0xb0] sm:$0xff] %vm1545, %v6495
      %6528 = vst.msk [vmem:[%s347 + $0xb8] sm:$0xff] %vm1545, %v6496
      %6529 = vst.msk [vmem:[%s347 + $0xc0] sm:$0xff] %vm1545, %v6497
      %6530 = vst.msk [vmem:[%s347 + $0xc8] sm:$0xff] %vm1545, %v6498
      %6531 = vst.msk [vmem:[%s347 + $0xd0] sm:$0xff] %vm1545, %v6499
      %6532 = vst.msk [vmem:[%s347 + $0xd8] sm:$0xff] %vm1545, %v6500
      %6533 = vst.msk [vmem:[%s347 + $0xe0] sm:$0xff] %vm1545, %v6501
      %6534 = vst.msk [vmem:[%s347 + $0xe8] sm:$0xff] %vm1545, %v6502
      %6535 = vst.msk [vmem:[%s347 + $0xf0] sm:$0xff] %vm1545, %v6503
      %6536 = vst.msk [vmem:[%s347 + $0xf8] sm:$0xff] %vm1545, %v6504
      %p6537 = scmp.lt.s32.totalorder %s21, 1
      %s6538 = scalar_select %p6537, %s21, 1
      %s6539 = smul.addr %s6538, 32
      %s6540 = smul.addr %s6539, 8
      %s6541 = scalar_lea.vmem %s7, %s6540
      %p6542 = scmp.lt.s32.totalorder %s21, 1
      %s6543 = scalar_select %p6542, %s21, 1
      %s6544 = smul.addr %s6543, 32
      %s6545 = smul.addr %s6544, 8
      %s6546 = scalar_lea.vmem %s8, %s6545
      %p6547 = scmp.lt.s32.totalorder %s21, 1
      %s6548 = scalar_select %p6547, %s21, 1
      %s6549 = smul.addr %s6548, 32
      %s6550 = smul.addr %s6549, 8
      %s6551 = scalar_lea.vmem %s9, %s6550
      // Predicated region
      $region49: #{spab_forward.1} parent=47 // pred_check
        %p6552 = pneg %p191
      $region50: #{spab_forward.1} parent=47 // pred_check_branch
        %6554 = sbr.rel (%p6552) target = $region52
      $region51: #{spab_forward.1} parent=47 // pred_region
        _
      $region52: #{spab_forward.1} parent=47 // pred_fallthru
        _
      // Predicated region
      $region53: #{spab_forward.1} parent=47 // pred_check
        %p6555 = pneg %p217
      $region54: #{spab_forward.1} parent=47 // pred_check_branch
        %6557 = sbr.rel (%p6555) target = $region56
      $region55: #{spab_forward.1} parent=47 // pred_region
        _
      $region56: #{spab_forward.1} parent=47 // pred_fallthru
        _
      // Predicated region
      $region57: #{spab_forward.1} parent=47 // pred_check
        %p6558 = pneg %p243
      $region58: #{spab_forward.1} parent=47 // pred_check_branch
        %6560 = sbr.rel (%p6558) target = $region60
      $region59: #{spab_forward.1} parent=47 // pred_region
        _
      $region60: #{spab_forward.1} parent=47 // pred_fallthru
        _
    $region48: #{spab_forward.1} parent=5 // pred_fallthru
      _
    %p6561 = scmp.le.s32.totalorder 2, %s16
    // Predicated region
    $region61: #{spab_forward.1} parent=5 // pred_check
      %p6562 = pneg %p6561
    $region62: #{spab_forward.1} parent=5 // pred_check_branch
      %6564 = sbr.rel (%p6562) target = $region64
    $region63: #{spab_forward.1} parent=5 // pred_region
      %s6565 = ssub.s32 %s16, 2
      // Predicated region
      $region65: #{spab_forward.1} parent=63 // pred_check
        %p6566 = pneg %p197
      $region66: #{spab_forward.1} parent=63 // pred_check_branch
        %6568 = sbr.rel (%p6566) target = $region68
      $region67: #{spab_forward.1} parent=63 // pred_region
        %p6569 = scmp.lt.s32.totalorder %s22, 1
        %s6570 = scalar_select %p6569, %s22, 1
        %s6571 = smul.addr %s6570, 32
        %s6572 = smul.addr %s6571, 8
        %s6573 = scalar_lea.vmem %s7, %s6572
      $region68: #{spab_forward.1} parent=63 // pred_fallthru
        _
      // Predicated region
      $region69: #{spab_forward.1} parent=63 // pred_check
        %p6574 = pneg %p223
      $region70: #{spab_forward.1} parent=63 // pred_check_branch
        %6576 = sbr.rel (%p6574) target = $region72
      $region71: #{spab_forward.1} parent=63 // pred_region
        %p6577 = scmp.lt.s32.totalorder %s22, 1
        %s6578 = scalar_select %p6577, %s22, 1
        %s6579 = smul.addr %s6578, 32
        %s6580 = smul.addr %s6579, 8
        %s6581 = scalar_lea.vmem %s8, %s6580
      $region72: #{spab_forward.1} parent=63 // pred_fallthru
        _
      // Predicated region
      $region73: #{spab_forward.1} parent=63 // pred_check
        %p6582 = pneg %p249
      $region74: #{spab_forward.1} parent=63 // pred_check_branch
        %6584 = sbr.rel (%p6582) target = $region76
      $region75: #{spab_forward.1} parent=63 // pred_region
        %p6585 = scmp.lt.s32.totalorder %s22, 1
        %s6586 = scalar_select %p6585, %s22, 1
        %s6587 = smul.addr %s6586, 32
        %s6588 = smul.addr %s6587, 8
        %s6589 = scalar_lea.vmem %s9, %s6588
      $region76: #{spab_forward.1} parent=63 // pred_fallthru
        _
    $region64: #{spab_forward.1} parent=5 // pred_fallthru
      _
  $region6: #{spab_forward.1} parent=0 // loop_footer
    %s20 = sadd.s32 1, %s16
  $region7: #{spab_forward.1} parent=0 // loop_footer_branch
    %15 = sbr.rel target = $region3
  $region8: #{spab_forward.1} parent=0 // loop_exit
    _

</llo_original>
